<compile_context>
chip_gen: v7x
topology: tpu7x:2x2x1
jax: 0.10.0
libtpu: 0.0.40
codegen_flags: <defaults>
</compile_context>

<pallas_src>
import jax
import jax.numpy as jnp
from jax.experimental import pallas as pl
from jax.experimental.pallas import tpu as pltpu

IN_FEATS = 2400
H1 = 1000
H2 = 10
OUT = 1

# Padded / tiled sizes.
K_PAD = 2560           # 2400 -> 20 * 128 (zero-padded input / zero rows of W1)
H1_PAD = 1024          # 1000 -> 8 * 128  (zero cols of W1, zero rows of W2)
TK = 640               # K tile = 5 * 128
NK = K_PAD // TK       # 4 reduction steps


def ffnn_kernel(x_ref, w1_ref, b1_ref, w2_ref, b2_ref, w3_ref, b3_ref,
                o_ref, h1_acc):
    k = pl.program_id(0)

    @pl.when(k == 0)
    def _init():
        h1_acc[...] = jnp.zeros_like(h1_acc)

    # Layer-1 partial product: (1, TK) bf16 @ (TK, 1024) bf16 -> f32 accumulate.
    h1_acc[...] += jnp.dot(x_ref[...], w1_ref[...],
                           preferred_element_type=jnp.float32)

    @pl.when(k == pl.num_programs(0) - 1)
    def _finalize():
        h1 = jnp.maximum(h1_acc[...] + b1_ref[...], 0.0)
        # Layer 2: (1, 1024) @ (1024, 10) + b2 -> relu
        h2 = jnp.dot(h1.astype(jnp.bfloat16), w2_ref[...],
                     preferred_element_type=jnp.float32) + b2_ref[...]
        h2 = jnp.maximum(h2, 0.0)
        # Layer 3: (1, 10) @ (10, 1) + b3 -> sigmoid
        z = jnp.dot(h2, w3_ref[...],
                    preferred_element_type=jnp.float32) + b3_ref[...]
        o_ref[...] = jax.nn.sigmoid(z)


def feed_forward_nn(x, kparams):
    """x: any array with 2400 elements (module reshapes to (1, 2400)).
    kparams: output of prepare_params(). Returns a (1,)-shaped f32 array."""
    w1, b1, w2, b2, w3, b3 = kparams
    x2d = jnp.reshape(x, (1, IN_FEATS)).astype(jnp.bfloat16)
    x_pad = jnp.pad(x2d, ((0, 0), (0, K_PAD - IN_FEATS)))

    grid_spec = pltpu.PrefetchScalarGridSpec(
        num_scalar_prefetch=0,
        grid=(NK,),
        in_specs=[
            pl.BlockSpec((1, TK), lambda k: (0, k)),          # x tile (bf16)
            pl.BlockSpec((TK, H1_PAD), lambda k: (k, 0)),     # W1 tile (bf16)
            pl.BlockSpec((1, H1_PAD), lambda k: (0, 0)),      # b1 (resident)
            pl.BlockSpec((H1_PAD, H2), lambda k: (0, 0)),     # W2 (bf16, resident)
            pl.BlockSpec((1, H2), lambda k: (0, 0)),          # b2 (resident)
            pl.BlockSpec((H2, OUT), lambda k: (0, 0)),        # W3 (f32, resident)
            pl.BlockSpec((1, OUT), lambda k: (0, 0)),         # b3 (resident)
        ],
        out_specs=pl.BlockSpec((1, OUT), lambda k: (0, 0)),
        scratch_shapes=[pltpu.VMEM((1, H1_PAD), jnp.float32)],
    )

    out = pl.pallas_call(
        ffnn_kernel,
        out_shape=jax.ShapeDtypeStruct((1, OUT), jnp.float32),
        grid_spec=grid_spec,
        compiler_params=pltpu.CompilerParams(
            dimension_semantics=("arbitrary",),   # K is a reduction axis
            vmem_limit_bytes=24 << 20,            # safe on v7x (64 MiB physical)
        ),
    )(x_pad, w1, b1, w2, b2, w3, b3)
    # torch.flatten(x) -> shape (1,)
    return jnp.reshape(out, (-1,))


def init_params(key):
    """f32 params mimicking nn.Linear's uniform(-1/sqrt(fan_in), 1/sqrt(fan_in)),
    stored as (in_features, out_features) so y = x @ W + b matches x @ W.T."""
    ks = jax.random.split(key, 6)

    def lin(kw, kb, fan_in, fan_out):
        bound = 1.0 / jnp.sqrt(jnp.float32(fan_in))
        w = jax.random.uniform(kw, (fan_in, fan_out), jnp.float32, -bound, bound)
        b = jax.random.uniform(kb, (1, fan_out), jnp.float32, -bound, bound)
        return w, b

    w1, b1 = lin(ks[0], ks[1], IN_FEATS, H1)
    w2, b2 = lin(ks[2], ks[3], H1, H2)
    w3, b3 = lin(ks[4], ks[5], H2, OUT)
    return (w1, b1, w2, b2, w3, b3)


def prepare_params(params):
    """Pad to lane-dense shapes and cast the large matrices to bf16.
    Zero padding keeps the forward math identical to the unpadded network."""
    w1, b1, w2, b2, w3, b3 = params
    w1p = jnp.zeros((K_PAD, H1_PAD), jnp.float32).at[:IN_FEATS, :H1].set(w1)
    b1p = jnp.zeros((1, H1_PAD), jnp.float32).at[:, :H1].set(b1)
    w2p = jnp.zeros((H1_PAD, H2), jnp.float32).at[:H1, :].set(w2)
    return (w1p.astype(jnp.bfloat16), b1p,
            w2p.astype(jnp.bfloat16), b2,
            w3, b3)


if __name__ == "__main__":
    key = jax.random.PRNGKey(0)
    pkey, xkey = jax.random.split(key)
    params = init_params(pkey)          # f32 "PyTorch" params
    kparams = prepare_params(params)    # padded / bf16 kernel params

    # Basset-style input: (1, 4, 600) -> 2400 elements, matching the module's
    # hard-coded reshape to (1, 2400).
    x = jax.random.normal(xkey, (1, 4, 600), dtype=jnp.float32)

    y = feed_forward_nn(x, kparams)
    y = jax.block_until_ready(y)
    assert y.shape == (1,)

    # Reference 1: same bf16-weight math as the kernel (tight tolerance).
    w1p, b1p, w2p, b2p, w3p, b3p = kparams
    xr = jnp.pad(jnp.reshape(x, (1, IN_FEATS)).astype(jnp.bfloat16),
                 ((0, 0), (0, K_PAD - IN_FEATS)))
    h1 = jnp.maximum(jnp.dot(xr, w1p, preferred_element_type=jnp.float32) + b1p, 0.0)
    h2 = jnp.maximum(jnp.dot(h1.astype(jnp.bfloat16), w2p,
                             preferred_element_type=jnp.float32) + b2p, 0.0)
    ref_bf16 = jax.nn.sigmoid(
        jnp.dot(h2, w3p, preferred_element_type=jnp.float32) + b3p).reshape(-1)
    assert jnp.allclose(y, ref_bf16, atol=1e-3, rtol=1e-3)

    # Reference 2: original full-f32 module math (loose tolerance for the
    # bf16 weight storage).
    w1, b1, w2, b2, w3, b3 = params
    xf = jnp.reshape(x, (1, IN_FEATS))
    ref_f32 = jax.nn.sigmoid(
        jnp.maximum(jnp.maximum(xf @ w1 + b1, 0.0) @ w2 + b2, 0.0) @ w3 + b3
    ).reshape(-1)
    assert jnp.allclose(y, ref_f32, atol=5e-2)

    print("KERNEL_OK")
</pallas_src>

<mosaic_0001>
module attributes {stable_mosaic.version = 11 : i64} {
  func.func @ffnn_kernel(%arg0: i32, %arg1: memref<1x640xbf16, #tpu.memory_space<vmem>>, %arg2: memref<640x1024xbf16, #tpu.memory_space<vmem>>, %arg3: memref<1x1024xf32, #tpu.memory_space<vmem>>, %arg4: memref<1024x10xbf16, #tpu.memory_space<vmem>>, %arg5: memref<1x10xf32, #tpu.memory_space<vmem>>, %arg6: memref<10x1xf32, #tpu.memory_space<vmem>>, %arg7: memref<1x1xf32, #tpu.memory_space<vmem>>, %arg8: memref<1x1xf32, #tpu.memory_space<vmem>>, %arg9: memref<1x1024xf32, #tpu.memory_space<vmem>>) attributes {dimension_semantics = [#tpu.dimension_semantics<arbitrary>], iteration_bounds = array<i64: 4>, scalar_prefetch = 0 : i64, scratch_operands = 1 : i64, tpu.core_type = #tpu.core_type<tc>, window_params = [{transform_indices = @transform_0, window_bounds = array<i64: 1, 640>}, {transform_indices = @transform_1, window_bounds = array<i64: 640, 1024>}, {pipeline_mode = #tpu.pipeline_mode<synchronous>, transform_indices = @transform_2, window_bounds = array<i64: 1, 1024>}, {pipeline_mode = #tpu.pipeline_mode<synchronous>, transform_indices = @transform_3, window_bounds = array<i64: 1024, 10>}, {pipeline_mode = #tpu.pipeline_mode<synchronous>, transform_indices = @transform_4, window_bounds = array<i64: 1, 10>}, {pipeline_mode = #tpu.pipeline_mode<synchronous>, transform_indices = @transform_5, window_bounds = array<i64: 10, 1>}, {pipeline_mode = #tpu.pipeline_mode<synchronous>, transform_indices = @transform_6, window_bounds = array<i64: 1, 1>}, {pipeline_mode = #tpu.pipeline_mode<synchronous>, transform_indices = @transform_7, window_bounds = array<i64: 1, 1>}]} {
    %c0_i32 = arith.constant 0 : i32
    %0 = arith.cmpi eq, %arg0, %c0_i32 : i32
    %1 = arith.extui %0 : i1 to i32
    %c0_i32_0 = arith.constant 0 : i32
    %2 = arith.cmpi ne, %1, %c0_i32_0 : i32
    scf.if %2 {
      %cst_9 = arith.constant 0.000000e+00 : f32
      %12 = vector.broadcast %cst_9 : f32 to vector<1x1024xf32>
      %c0_10 = arith.constant 0 : index
      %c0_11 = arith.constant 0 : index
      %13 = vector.load %arg9[%c0_10, %c0_11] : memref<1x1024xf32, #tpu.memory_space<vmem>>, vector<1x1024xf32>
      tpu.vector_store %arg9[%c0_10, %c0_11], %12 {strides = array<i32>} : memref<1x1024xf32, #tpu.memory_space<vmem>>, vector<1x1024xf32>,
    } else {
    }
    %c0 = arith.constant 0 : index
    %c0_1 = arith.constant 0 : index
    %3 = vector.load %arg9[%c0, %c0_1] : memref<1x1024xf32, #tpu.memory_space<vmem>>, vector<1x1024xf32>
    %c0_2 = arith.constant 0 : index
    %c0_3 = arith.constant 0 : index
    %4 = vector.load %arg1[%c0_2, %c0_3] : memref<1x640xbf16, #tpu.memory_space<vmem>>, vector<1x640xbf16>
    %c0_4 = arith.constant 0 : index
    %c0_5 = arith.constant 0 : index
    %5 = vector.load %arg2[%c0_4, %c0_5] : memref<640x1024xbf16, #tpu.memory_space<vmem>>, vector<640x1024xbf16>
    %cst = arith.constant dense<0.000000e+00> : vector<1x1024xf32>
    %6 = tpu.matmul %4, %5, %cst {dimension_numbers = #tpu.dot_dimension_numbers<[1], [0], [0], [1], [0, 0, 1, 1], [], []>} : vector<1x640xbf16>, vector<640x1024xbf16>, vector<1x1024xf32> -> vector<1x1024xf32>
    %7 = arith.addf %3, %6 : vector<1x1024xf32>
    %c0_6 = arith.constant 0 : index
    %c0_7 = arith.constant 0 : index
    %8 = vector.load %arg9[%c0_6, %c0_7] : memref<1x1024xf32, #tpu.memory_space<vmem>>, vector<1x1024xf32>
    tpu.vector_store %arg9[%c0_6, %c0_7], %7 {strides = array<i32>} : memref<1x1024xf32, #tpu.memory_space<vmem>>, vector<1x1024xf32>,
    %c3_i32 = arith.constant 3 : i32
    %9 = arith.cmpi eq, %arg0, %c3_i32 : i32
    %10 = arith.extui %9 : i1 to i32
    %c0_i32_8 = arith.constant 0 : i32
    %11 = arith.cmpi ne, %10, %c0_i32_8 : i32
    scf.if %11 {
      %c0_9 = arith.constant 0 : index
      %c0_10 = arith.constant 0 : index
      %12 = vector.load %arg9[%c0_9, %c0_10] : memref<1x1024xf32, #tpu.memory_space<vmem>>, vector<1x1024xf32>
      %c0_11 = arith.constant 0 : index
      %c0_12 = arith.constant 0 : index
      %13 = vector.load %arg3[%c0_11, %c0_12] : memref<1x1024xf32, #tpu.memory_space<vmem>>, vector<1x1024xf32>
      %14 = arith.addf %12, %13 : vector<1x1024xf32>
      %cst_13 = arith.constant 0.000000e+00 : f32
      %15 = vector.broadcast %cst_13 : f32 to vector<1x1024xf32>
      %16 = arith.maximumf %14, %15 : vector<1x1024xf32>
      %17 = arith.truncf %16 : vector<1x1024xf32> to vector<1x1024xbf16>
      %c0_14 = arith.constant 0 : index
      %c0_15 = arith.constant 0 : index
      %18 = vector.load %arg4[%c0_14, %c0_15] : memref<1024x10xbf16, #tpu.memory_space<vmem>>, vector<1024x10xbf16>
      %cst_16 = arith.constant dense<0.000000e+00> : vector<1x10xf32>
      %19 = tpu.matmul %17, %18, %cst_16 {dimension_numbers = #tpu.dot_dimension_numbers<[1], [0], [0], [1], [0, 0, 1, 1], [], []>} : vector<1x1024xbf16>, vector<1024x10xbf16>, vector<1x10xf32> -> vector<1x10xf32>
      %c0_17 = arith.constant 0 : index
      %c0_18 = arith.constant 0 : index
      %20 = vector.load %arg5[%c0_17, %c0_18] : memref<1x10xf32, #tpu.memory_space<vmem>>, vector<1x10xf32>
      %21 = arith.addf %19, %20 : vector<1x10xf32>
      %cst_19 = arith.constant 0.000000e+00 : f32
      %22 = vector.broadcast %cst_19 : f32 to vector<1x10xf32>
      %23 = arith.maximumf %21, %22 : vector<1x10xf32>
      %c0_20 = arith.constant 0 : index
      %c0_21 = arith.constant 0 : index
      %24 = vector.load %arg6[%c0_20, %c0_21] : memref<10x1xf32, #tpu.memory_space<vmem>>, vector<10x1xf32>
      %cst_22 = arith.constant dense<0.000000e+00> : vector<1x1xf32>
      %25 = tpu.matmul %23, %24, %cst_22 {dimension_numbers = #tpu.dot_dimension_numbers<[1], [0], [0], [1], [0, 0, 1, 1], [], []>} : vector<1x10xf32>, vector<10x1xf32>, vector<1x1xf32> -> vector<1x1xf32>
      %c0_23 = arith.constant 0 : index
      %c0_24 = arith.constant 0 : index
      %26 = vector.load %arg7[%c0_23, %c0_24] : memref<1x1xf32, #tpu.memory_space<vmem>>, vector<1x1xf32>
      %27 = arith.addf %25, %26 : vector<1x1xf32>
      %28 = arith.negf %27 : vector<1x1xf32>
      %29 = math.exp %28 : vector<1x1xf32>
      %cst_25 = arith.constant 1.000000e+00 : f32
      %30 = vector.broadcast %cst_25 : f32 to vector<1x1xf32>
      %31 = arith.addf %30, %29 : vector<1x1xf32>
      %32 = arith.divf %30, %31 : vector<1x1xf32>
      %c0_26 = arith.constant 0 : index
      %c0_27 = arith.constant 0 : index
      %33 = vector.load %arg8[%c0_26, %c0_27] : memref<1x1xf32, #tpu.memory_space<vmem>>, vector<1x1xf32>
      tpu.vector_store %arg8[%c0_26, %c0_27], %32 {strides = array<i32>} : memref<1x1xf32, #tpu.memory_space<vmem>>, vector<1x1xf32>,
    } else {
    }
    return
  }
  func.func @transform_0(%arg0: i32) -> (i32, i32) {
    %c0_i32 = arith.constant 0 : i32
    %c0_i32_0 = arith.constant 0 : i32
    return %c0_i32, %arg0 : i32, i32
  }
  func.func @transform_1(%arg0: i32) -> (i32, i32) {
    %c0_i32 = arith.constant 0 : i32
    %c0_i32_0 = arith.constant 0 : i32
    return %arg0, %c0_i32 : i32, i32
  }
  func.func @transform_2(%arg0: i32) -> (i32, i32) {
    %c0_i32 = arith.constant 0 : i32
    %c0_i32_0 = arith.constant 0 : i32
    %c0_i32_1 = arith.constant 0 : i32
    return %c0_i32, %c0_i32_0 : i32, i32
  }
  func.func @transform_3(%arg0: i32) -> (i32, i32) {
    %c0_i32 = arith.constant 0 : i32
    %c0_i32_0 = arith.constant 0 : i32
    %c0_i32_1 = arith.constant 0 : i32
    return %c0_i32, %c0_i32_0 : i32, i32
  }
  func.func @transform_4(%arg0: i32) -> (i32, i32) {
    %c0_i32 = arith.constant 0 : i32
    %c0_i32_0 = arith.constant 0 : i32
    %c0_i32_1 = arith.constant 0 : i32
    return %c0_i32, %c0_i32_0 : i32, i32
  }
  func.func @transform_5(%arg0: i32) -> (i32, i32) {
    %c0_i32 = arith.constant 0 : i32
    %c0_i32_0 = arith.constant 0 : i32
    %c0_i32_1 = arith.constant 0 : i32
    return %c0_i32, %c0_i32_0 : i32, i32
  }
  func.func @transform_6(%arg0: i32) -> (i32, i32) {
    %c0_i32 = arith.constant 0 : i32
    %c0_i32_0 = arith.constant 0 : i32
    %c0_i32_1 = arith.constant 0 : i32
    return %c0_i32, %c0_i32_0 : i32, i32
  }
  func.func @transform_7(%arg0: i32) -> (i32, i32) {
    %c0_i32 = arith.constant 0 : i32
    %c0_i32_0 = arith.constant 0 : i32
    %c0_i32_1 = arith.constant 0 : i32
    return %c0_i32, %c0_i32_0 : i32, i32
  }
}

</mosaic_0001>

<llo_original>
// kernel: tpu_custom_call.1
$region0: #{tpu_custom_call.1}
  #allocation0 [shape = 'u32[]', space=smem, size = 0x4, offset = 0x4, fixed_abs, tag = 'smem constant byte address 0x4 - core index']
  #allocation1 [shape = 'u32[144,128]{1,0:T(1,128)}', space=vmem, size = 0x12000, scoped, tag = 'internal scratch']
  #allocation2 [shape = 'f32[1,1024]{1,0:T(1,128)}', space=vmem, size = 0x1000, scoped, tag = 'scratch operand']
  #allocation3 [shape = 'f32[1,1]{1,0:T(1,128)S(1)}', space=vmem, size = 0x200, scoped, tag = 'scoped memory for tpu_custom_call.1']
  %s0 = inlined_call_operand.hbm [shape: bf16[1,2560], index: 0, kind: input, shape index: {}]
  %s1 = inlined_call_operand.hbm [shape: bf16[2560,1024], index: 1, kind: input, shape index: {}]
  %s2 = inlined_call_operand.hbm [shape: f32[1,1024], index: 2, kind: input, shape index: {}]
  %s3 = inlined_call_operand.vmem [shape: bf16[1024,10], index: 3, kind: input, shape index: {}]
  %s4 = inlined_call_operand.hbm [shape: f32[1,10], index: 4, kind: input, shape index: {}]
  %s5 = inlined_call_operand.vmem [shape: f32[10,1], index: 5, kind: input, shape index: {}]
  %s6 = inlined_call_operand.<no memory space> [shape: f32[1,1], index: 6, kind: input, shape index: {}]
  %s7 = inlined_call_operand.hbm [shape: f32[1,1], index: 7, kind: output, shape index: {}]
  %s8 = sld [smem:[#allocation0]]
  $region85: #{tpu_custom_call.1} parent=0
    _
  %s10 = ssub.s32 1, %s8
  %s11 = scalar_select 0, %s10, %s8
  %v12 = vstv %s6
  %13 = vst [vmem:[#allocation3] sm:$0x1] %v12
  $region1: #{tpu_custom_call.1} parent=0
    #allocation4 [shape = 'u8[5120]{0}', space=vmem, size = 0x1400, scoped, tag = 'input window, operand 0']
    #allocation5 [shape = 's32[2]{0}', space=sflag, size = 0x8, scoped, tag = 'scoped memory for tpu_custom_call.1']
    #allocation6 [shape = 's32[2]{0}', space=sflag, size = 0x8, scoped, tag = 'scoped memory for tpu_custom_call.1']
    #allocation7 [shape = 'u8[2621440]{0}', space=vmem, size = 0x280000, scoped, tag = 'input window, operand 1']
    #allocation8 [shape = 's32[2]{0}', space=sflag, size = 0x8, scoped, tag = 'scoped memory for tpu_custom_call.1']
    #allocation9 [shape = 'u8[4096]{0}', space=vmem, size = 0x1000, scoped, tag = 'input window, operand 2, single buffered']
    #allocation10 [shape = 'u8[512]{0}', space=vmem, size = 0x400, scoped, tag = 'input window, operand 4, single buffered']
    #allocation11 [shape = 's32[1]{0}', space=sflag, size = 0x4, scoped, tag = 'scoped memory for tpu_custom_call.1']
    #allocation12 [shape = 'u8[512]{0}', space=vmem, size = 0x400, scoped, tag = 'output window, operand 0, single buffered']
    %14 = vsyncpa [#allocation5], 0
    %s15 = scalar_lea.sflag [#allocation5], 1
    %16 = vsyncpa %s15, 0
    %17 = vsyncpa [#allocation8], 0
    %s18 = scalar_lea.sflag [#allocation8], 1
    %19 = vsyncpa %s18, 0
    %20 = vsyncpa [#allocation11], 0
    %21 = vsyncpa [#allocation6], 0
    loop: start=0, step=1, limit=6
    $region2: #{tpu_custom_call.1} parent=1 // loop_pre_header
      _
    $region3: #{tpu_custom_call.1} parent=1 // loop_header
      %s23 = sphi 0, %s27
      %p24 = scmp.ge.s32.totalorder %s23, 6
      %s33 = sphi 0, %s35
      %s36 = sphi 0, %s33
      %s37 = sphi 0, %s36
      %s53 = sphi 0, %s37
      %s59 = sphi 0, %s61
      %s62 = sphi 0, %s59
      %s63 = sphi 0, %s62
      %s79 = sphi 0, %s63
      %s83 = sphi 0, %s83
      %s85 = sphi 0, %s83
      %s86 = sphi 0, %s85
      %s100 = sphi 0, %s86
      %s104 = sphi 0, %s104
      %s106 = sphi 0, %s104
      %s107 = sphi 0, %s106
      %s121 = sphi 0, %s107
      %s125 = sphi 0, %s125
      %s127 = sphi 0, %s125
      %s128 = sphi 0, %s127
      %s142 = sphi 0, %s128
      %s146 = sphi 0, %s146
      %s148 = sphi 0, %s146
      %s149 = sphi 0, %s148
      %s163 = sphi 0, %s149
      %s167 = sphi 0, %s167
      %s169 = sphi 0, %s167
      %s170 = sphi 0, %s169
      %s184 = sphi 0, %s170
      %s188 = sphi 0, %s188
      %s190 = sphi 0, %s188
      %s191 = sphi 0, %s190
      %s205 = sphi 0, %s191
    $region4: #{tpu_custom_call.1} parent=1 // loop_header_branch
      %26 = sbr.rel (%p24) target = $region8
    $region5: #{tpu_custom_call.1} parent=1 // loop_body
      %s28 = ssub.s32 %s23, 1
      %s29 = ssub.s32 %s23, 2
      %s30 = sadd.s32 %s23, 1
      %s31 = ssub.s32 %s23, %s30
      %p32 = scmp.eq.s32.totalorder %s31, 0
      %s34 = sadd.s32 %s33, 1
      %s35 = scalar_select %p32, %s33, %s34
      %p38 = pneg %p32
      %p39 = scmp.eq.s32.totalorder %s23, 3
      %p40 = por %p38, %p39
      %p41 = scmp.ne.s32.totalorder %s33, %s36
      %p42 = scmp.eq.s32.totalorder %s23, 0
      %p43 = por %p41, %p42
      %p44 = scmp.ne.s32.totalorder %s33, %s36
      %p45 = scmp.eq.s32.totalorder %s28, 3
      %p46 = por %p44, %p45
      %p47 = scmp.ne.s32.totalorder %s36, %s37
      %p48 = scmp.eq.s32.totalorder %s28, 0
      %p49 = por %p47, %p48
      %p50 = scmp.ne.s32.totalorder %s36, %s37
      %p51 = scmp.eq.s32.totalorder %s29, 3
      %p52 = por %p50, %p51
      %p54 = scmp.ne.s32.totalorder %s37, %s53
      %p55 = scmp.eq.s32.totalorder %s29, 0
      %p56 = por %p54, %p55
      %s57 = ssub.s32 %s23, %s30
      %p58 = scmp.eq.s32.totalorder %s57, 0
      %s60 = sadd.s32 %s59, 1
      %s61 = scalar_select %p58, %s59, %s60
      %p64 = pneg %p58
      %p65 = scmp.eq.s32.totalorder %s23, 3
      %p66 = por %p64, %p65
      %p67 = scmp.ne.s32.totalorder %s59, %s62
      %p68 = scmp.eq.s32.totalorder %s23, 0
      %p69 = por %p67, %p68
      %p70 = scmp.ne.s32.totalorder %s59, %s62
      %p71 = scmp.eq.s32.totalorder %s28, 3
      %p72 = por %p70, %p71
      %p73 = scmp.ne.s32.totalorder %s62, %s63
      %p74 = scmp.eq.s32.totalorder %s28, 0
      %p75 = por %p73, %p74
      %p76 = scmp.ne.s32.totalorder %s62, %s63
      %p77 = scmp.eq.s32.totalorder %s29, 3
      %p78 = por %p76, %p77
      %p80 = scmp.ne.s32.totalorder %s63, %s79
      %p81 = scmp.eq.s32.totalorder %s29, 0
      %p82 = por %p80, %p81
      %s84 = sadd.s32 %s83, 1
      %p87 = scmp.eq.s32.totalorder %s23, 3
      %p88 = scmp.ne.s32.totalorder %s83, %s85
      %p89 = scmp.eq.s32.totalorder %s23, 0
      %p90 = por %p88, %p89
      %p91 = scmp.ne.s32.totalorder %s83, %s85
      %p92 = scmp.eq.s32.totalorder %s28, 3
      %p93 = por %p91, %p92
      %p94 = scmp.ne.s32.totalorder %s85, %s86
      %p95 = scmp.eq.s32.totalorder %s28, 0
      %p96 = por %p94, %p95
      %p97 = scmp.ne.s32.totalorder %s85, %s86
      %p98 = scmp.eq.s32.totalorder %s29, 3
      %p99 = por %p97, %p98
      %p101 = scmp.ne.s32.totalorder %s86, %s100
      %p102 = scmp.eq.s32.totalorder %s29, 0
      %p103 = por %p101, %p102
      %s105 = sadd.s32 %s104, 1
      %p108 = scmp.eq.s32.totalorder %s23, 3
      %p109 = scmp.ne.s32.totalorder %s104, %s106
      %p110 = scmp.eq.s32.totalorder %s23, 0
      %p111 = por %p109, %p110
      %p112 = scmp.ne.s32.totalorder %s104, %s106
      %p113 = scmp.eq.s32.totalorder %s28, 3
      %p114 = por %p112, %p113
      %p115 = scmp.ne.s32.totalorder %s106, %s107
      %p116 = scmp.eq.s32.totalorder %s28, 0
      %p117 = por %p115, %p116
      %p118 = scmp.ne.s32.totalorder %s106, %s107
      %p119 = scmp.eq.s32.totalorder %s29, 3
      %p120 = por %p118, %p119
      %p122 = scmp.ne.s32.totalorder %s107, %s121
      %p123 = scmp.eq.s32.totalorder %s29, 0
      %p124 = por %p122, %p123
      %s126 = sadd.s32 %s125, 1
      %p129 = scmp.eq.s32.totalorder %s23, 3
      %p130 = scmp.ne.s32.totalorder %s125, %s127
      %p131 = scmp.eq.s32.totalorder %s23, 0
      %p132 = por %p130, %p131
      %p133 = scmp.ne.s32.totalorder %s125, %s127
      %p134 = scmp.eq.s32.totalorder %s28, 3
      %p135 = por %p133, %p134
      %p136 = scmp.ne.s32.totalorder %s127, %s128
      %p137 = scmp.eq.s32.totalorder %s28, 0
      %p138 = por %p136, %p137
      %p139 = scmp.ne.s32.totalorder %s127, %s128
      %p140 = scmp.eq.s32.totalorder %s29, 3
      %p141 = por %p139, %p140
      %p143 = scmp.ne.s32.totalorder %s128, %s142
      %p144 = scmp.eq.s32.totalorder %s29, 0
      %p145 = por %p143, %p144
      %s147 = sadd.s32 %s146, 1
      %p150 = scmp.eq.s32.totalorder %s23, 3
      %p151 = scmp.ne.s32.totalorder %s146, %s148
      %p152 = scmp.eq.s32.totalorder %s23, 0
      %p153 = por %p151, %p152
      %p154 = scmp.ne.s32.totalorder %s146, %s148
      %p155 = scmp.eq.s32.totalorder %s28, 3
      %p156 = por %p154, %p155
      %p157 = scmp.ne.s32.totalorder %s148, %s149
      %p158 = scmp.eq.s32.totalorder %s28, 0
      %p159 = por %p157, %p158
      %p160 = scmp.ne.s32.totalorder %s148, %s149
      %p161 = scmp.eq.s32.totalorder %s29, 3
      %p162 = por %p160, %p161
      %p164 = scmp.ne.s32.totalorder %s149, %s163
      %p165 = scmp.eq.s32.totalorder %s29, 0
      %p166 = por %p164, %p165
      %s168 = sadd.s32 %s167, 1
      %p171 = scmp.eq.s32.totalorder %s23, 3
      %p172 = scmp.ne.s32.totalorder %s167, %s169
      %p173 = scmp.eq.s32.totalorder %s23, 0
      %p174 = por %p172, %p173
      %p175 = scmp.ne.s32.totalorder %s167, %s169
      %p176 = scmp.eq.s32.totalorder %s28, 3
      %p177 = por %p175, %p176
      %p178 = scmp.ne.s32.totalorder %s169, %s170
      %p179 = scmp.eq.s32.totalorder %s28, 0
      %p180 = por %p178, %p179
      %p181 = scmp.ne.s32.totalorder %s169, %s170
      %p182 = scmp.eq.s32.totalorder %s29, 3
      %p183 = por %p181, %p182
      %p185 = scmp.ne.s32.totalorder %s170, %s184
      %p186 = scmp.eq.s32.totalorder %s29, 0
      %p187 = por %p185, %p186
      %s189 = sadd.s32 %s188, 1
      %p192 = scmp.eq.s32.totalorder %s23, 3
      %p193 = scmp.ne.s32.totalorder %s188, %s190
      %p194 = scmp.eq.s32.totalorder %s23, 0
      %p195 = por %p193, %p194
      %p196 = scmp.ne.s32.totalorder %s188, %s190
      %p197 = scmp.eq.s32.totalorder %s28, 3
      %p198 = por %p196, %p197
      %p199 = scmp.ne.s32.totalorder %s190, %s191
      %p200 = scmp.eq.s32.totalorder %s28, 0
      %p201 = por %p199, %p200
      %p202 = scmp.ne.s32.totalorder %s190, %s191
      %p203 = scmp.eq.s32.totalorder %s29, 3
      %p204 = por %p202, %p203
      %p206 = scmp.ne.s32.totalorder %s191, %s205
      %p207 = scmp.eq.s32.totalorder %s29, 0
      %p208 = por %p206, %p207
      %p209 = scmp.le.s32.totalorder 1, %s23
      %p210 = scmp.lt.s32.totalorder %s23, 5
      %p211 = pnand %p209, %p210
      %p212 = pneg %p211
      // Predicated region
      $region9: #{tpu_custom_call.1} parent=5 // pred_check
        _
      $region10: #{tpu_custom_call.1} parent=5 // pred_check_branch
        %214 = sbr.rel (%p211) target = $region12
      $region11: #{tpu_custom_call.1} parent=5 // pred_region
        %s215 = ssub.s32 %s23, 1
        // Predicated region
        $region13: #{tpu_custom_call.1} parent=11 // pred_check
          %p216 = pneg %p96
        $region14: #{tpu_custom_call.1} parent=11 // pred_check_branch
          %218 = sbr.rel (%p216) target = $region16
        $region15: #{tpu_custom_call.1} parent=11 // pred_region
          %s220 = ssub.s32 128, 128
          %221 = vsyncadd [#allocation8], %s220
          %s223 = sshll.u32 [#allocation9], 4
          %s224 = int_to_ptr.vmem [resolvable:$true] %s223
          %226 = dma.hbm_to_vmem [thread:$0]  %s2, 128, %s224, [#allocation8]
        $region16: #{tpu_custom_call.1} parent=11 // pred_fallthru
          _
        // Predicated region
        $region17: #{tpu_custom_call.1} parent=11 // pred_check
          %p227 = pneg %p117
        $region18: #{tpu_custom_call.1} parent=11 // pred_check_branch
          %229 = sbr.rel (%p227) target = $region20
        $region19: #{tpu_custom_call.1} parent=11 // pred_region
          _
        $region20: #{tpu_custom_call.1} parent=11 // pred_fallthru
          _
        // Predicated region
        $region21: #{tpu_custom_call.1} parent=11 // pred_check
          %p230 = pneg %p138
        $region22: #{tpu_custom_call.1} parent=11 // pred_check_branch
          %232 = sbr.rel (%p230) target = $region24
        $region23: #{tpu_custom_call.1} parent=11 // pred_region
          %s234 = ssub.s32 16, 16
          %235 = vsyncadd [#allocation11], %s234
          %s237 = sshll.u32 [#allocation10], 4
          %s238 = int_to_ptr.vmem [resolvable:$true] %s237
          %240 = dma.hbm_to_vmem [thread:$0]  %s4, 16, %s238, [#allocation11]
        $region24: #{tpu_custom_call.1} parent=11 // pred_fallthru
          _
        // Predicated region
        $region25: #{tpu_custom_call.1} parent=11 // pred_check
          %p241 = pneg %p159
        $region26: #{tpu_custom_call.1} parent=11 // pred_check_branch
          %243 = sbr.rel (%p241) target = $region28
        $region27: #{tpu_custom_call.1} parent=11 // pred_region
          _
        $region28: #{tpu_custom_call.1} parent=11 // pred_fallthru
          _
        // Predicated region
        $region29: #{tpu_custom_call.1} parent=11 // pred_check
          %p244 = pneg %p180
        $region30: #{tpu_custom_call.1} parent=11 // pred_check_branch
          %246 = sbr.rel (%p244) target = $region32
        $region31: #{tpu_custom_call.1} parent=11 // pred_region
          _
        $region32: #{tpu_custom_call.1} parent=11 // pred_fallthru
          _
      $region12: #{tpu_custom_call.1} parent=5 // pred_fallthru
        _
      %p247 = scmp.lt.s32.totalorder %s23, 4
      // Predicated region
      $region33: #{tpu_custom_call.1} parent=5 // pred_check
        %p248 = pneg %p247
      $region34: #{tpu_custom_call.1} parent=5 // pred_check_branch
        %250 = sbr.rel (%p248) target = $region36
      $region35: #{tpu_custom_call.1} parent=5 // pred_region
        // Predicated region
        $region37: #{tpu_custom_call.1} parent=35 // pred_check
          %p251 = pneg %p43
        $region38: #{tpu_custom_call.1} parent=35 // pred_check_branch
          %253 = sbr.rel (%p251) target = $region40
        $region39: #{tpu_custom_call.1} parent=35 // pred_region
          %s254 = sand.u32 %s33, 1
          %s255 = scalar_lea.sflag [#allocation5], %s254
          %s256 = sand.u32 %s33, 1
          %s257 = smul.addr %s256, 5
          %s258 = scalar_lea.vmem [#allocation4], %s257
          %s259 = smul.u32 5, %s23
          %s261 = ssub.s32 80, 80
          %262 = vsyncadd %s255, %s261
          %s263 = smul.addr %s259, 16
          %s264 = scalar_lea.hbm %s0, %s263
          %s266 = sshll.u32 %s258, 4
          %s267 = int_to_ptr.vmem [resolvable:$true] %s266
          %269 = dma.hbm_to_vmem [thread:$0]  %s264, 80, %s267, %s255
        $region40: #{tpu_custom_call.1} parent=35 // pred_fallthru
          _
        // Predicated region
        $region41: #{tpu_custom_call.1} parent=35 // pred_check
          %p270 = pneg %p69
        $region42: #{tpu_custom_call.1} parent=35 // pred_check_branch
          %272 = sbr.rel (%p270) target = $region44
        $region43: #{tpu_custom_call.1} parent=35 // pred_region
          %s273 = sand.u32 %s23, 1
          %s274 = scalar_lea.sflag [#allocation8], %s273
          %s275 = sand.u32 %s59, 1
          %s276 = smul.addr %s275, 2560
          %s277 = scalar_lea.vmem [#allocation7], %s276
          %s278 = smul.u32 80, %s23
          %s280 = ssub.s32 40960, 40960
          %281 = vsyncadd %s274, %s280
          %s282 = smul.addr %s278, 8
          %s283 = smul.addr %s282, 64
          %s284 = scalar_lea.hbm %s1, %s283
          %s285 = sshll.u32 %s277, 4
          %s286 = int_to_ptr.vmem [resolvable:$true] %s285
          %291 = dma.hbm_to_vmem [thread:$0]  %s284, 40960, %s286, %s274, 512, 512, 32
        $region44: #{tpu_custom_call.1} parent=35 // pred_fallthru
          _
      $region36: #{tpu_custom_call.1} parent=5 // pred_fallthru
        _
      %p292 = scmp.le.s32.totalorder 1, %s23
      %p293 = scmp.lt.s32.totalorder %s23, 5
      %p294 = pnand %p292, %p293
      %p295 = pneg %p294
      // Predicated region
      $region45: #{tpu_custom_call.1} parent=5 // pred_check
        _
      $region46: #{tpu_custom_call.1} parent=5 // pred_check_branch
        %297 = sbr.rel (%p294) target = $region48
      $region47: #{tpu_custom_call.1} parent=5 // pred_region
        %s298 = ssub.s32 %s23, 1
        %s299 = sand.u32 %s36, 1
        %s300 = scalar_lea.sflag [#allocation5], %s299
        %s301 = sand.u32 %s36, 1
        %s302 = smul.addr %s301, 5
        %s303 = scalar_lea.vmem [#allocation4], %s302
        // Predicated region
        $region49: #{tpu_custom_call.1} parent=47 // pred_check
          %p304 = pneg %p49
        $region50: #{tpu_custom_call.1} parent=47 // pred_check_branch
          %306 = sbr.rel (%p304) target = $region52
        $region51: #{tpu_custom_call.1} parent=47 // pred_region
          %307 = dma.done %s300, 80
        $region52: #{tpu_custom_call.1} parent=47 // pred_fallthru
          _
        %s308 = sand.u32 %s28, 1
        %s309 = scalar_lea.sflag [#allocation8], %s308
        %s310 = sand.u32 %s62, 1
        %s311 = smul.addr %s310, 2560
        %s312 = scalar_lea.vmem [#allocation7], %s311
        // Predicated region
        $region53: #{tpu_custom_call.1} parent=47 // pred_check
          %p313 = pneg %p75
        $region54: #{tpu_custom_call.1} parent=47 // pred_check_branch
          %315 = sbr.rel (%p313) target = $region56
        $region55: #{tpu_custom_call.1} parent=47 // pred_region
          %316 = dma.done %s309, 40960
        $region56: #{tpu_custom_call.1} parent=47 // pred_fallthru
          _
        // Predicated region
        $region57: #{tpu_custom_call.1} parent=47 // pred_check
          %p317 = pneg %p96
        $region58: #{tpu_custom_call.1} parent=47 // pred_check_branch
          %319 = sbr.rel (%p317) target = $region60
        $region59: #{tpu_custom_call.1} parent=47 // pred_region
          %320 = dma.done [#allocation8], 128
        $region60: #{tpu_custom_call.1} parent=47 // pred_fallthru
          _
        // Predicated region
        $region61: #{tpu_custom_call.1} parent=47 // pred_check
          %p321 = pneg %p138
        $region62: #{tpu_custom_call.1} parent=47 // pred_check_branch
          %323 = sbr.rel (%p321) target = $region64
        $region63: #{tpu_custom_call.1} parent=47 // pred_region
          %324 = dma.done [#allocation11], 16
        $region64: #{tpu_custom_call.1} parent=47 // pred_fallthru
          _
        %s325 = sand.u32 %s36, 1
        %s326 = scalar_lea.sflag [#allocation5], %s325
        %s327 = sand.u32 %s36, 1
        %s328 = smul.addr %s327, 5
        %s329 = scalar_lea.vmem [#allocation4], %s328
        %p330 = pneg %p49
        %p331 = pneg %p46
        %s332 = sand.u32 %s28, 1
        %s333 = scalar_lea.sflag [#allocation8], %s332
        %s334 = sand.u32 %s62, 1
        %s335 = smul.addr %s334, 2560
        %s336 = scalar_lea.vmem [#allocation7], %s335
        %p337 = pneg %p75
        %p338 = pneg %p72
        %p339 = pneg %p96
        %p340 = pneg %p93
        %p341 = pneg %p117
        %p342 = pneg %p114
        %p343 = pneg %p138
        %p344 = pneg %p135
        %p345 = pneg %p159
        %p346 = pneg %p156
        %p347 = pneg %p180
        %p348 = pneg %p177
        %p349 = pneg %p201
        %p350 = pneg %p198
        %s351 = smul.u32 5, %s28
        %s352 = smul.u32 80, %s28
        %p354 = scmp.eq.s32.totalorder %s28, 0
        // Predicated region
        $region65: #{tpu_custom_call.1} parent=47 // pred_check
          %p355 = pneg %p354
        $region66: #{tpu_custom_call.1} parent=47 // pred_check_branch
          %357 = sbr.rel (%p355) target = $region68
        $region67: #{tpu_custom_call.1} parent=47 // pred_region
          %358 = vst [vmem:[#allocation2] sm:$0xff] 0.0
        $region68: #{tpu_custom_call.1} parent=47 // pred_fallthru
          _
        %v359 = vld [vmem:[#allocation2] sm:$0xff]
        %v360 = vld [vmem:[%s303] sm:$0x1f]
        %v361 = vld [vmem:[%s312] sm:$0xff]
        %v362 = vld [vmem:[%s312 + $0x8] sm:$0xff]
        %v363 = vld [vmem:[%s312 + $0x10] sm:$0xff]
        %v364 = vld [vmem:[%s312 + $0x18] sm:$0xff]
        %v365 = vld [vmem:[%s312 + $0x20] sm:$0xff]
        %v366 = vld [vmem:[%s312 + $0x28] sm:$0xff]
        %v367 = vld [vmem:[%s312 + $0x30] sm:$0xff]
        %v368 = vld [vmem:[%s312 + $0x38] sm:$0xff]
        %v369 = vld [vmem:[%s312 + $0x40] sm:$0xff]
        %v370 = vld [vmem:[%s312 + $0x48] sm:$0xff]
        %v371 = vld [vmem:[%s312 + $0x50] sm:$0xff]
        %v372 = vld [vmem:[%s312 + $0x58] sm:$0xff]
        %v373 = vld [vmem:[%s312 + $0x60] sm:$0xff]
        %v374 = vld [vmem:[%s312 + $0x68] sm:$0xff]
        %v375 = vld [vmem:[%s312 + $0x70] sm:$0xff]
        %v376 = vld [vmem:[%s312 + $0x78] sm:$0xff]
        %v377 = vld [vmem:[%s312 + $0x80] sm:$0xff]
        %v378 = vld [vmem:[%s312 + $0x88] sm:$0xff]
        %v379 = vld [vmem:[%s312 + $0x90] sm:$0xff]
        %v380 = vld [vmem:[%s312 + $0x98] sm:$0xff]
        %v381 = vld [vmem:[%s312 + $0xa0] sm:$0xff]
        %v382 = vld [vmem:[%s312 + $0xa8] sm:$0xff]
        %v383 = vld [vmem:[%s312 + $0xb0] sm:$0xff]
        %v384 = vld [vmem:[%s312 + $0xb8] sm:$0xff]
        %v385 = vld [vmem:[%s312 + $0xc0] sm:$0xff]
        %v386 = vld [vmem:[%s312 + $0xc8] sm:$0xff]
        %v387 = vld [vmem:[%s312 + $0xd0] sm:$0xff]
        %v388 = vld [vmem:[%s312 + $0xd8] sm:$0xff]
        %v389 = vld [vmem:[%s312 + $0xe0] sm:$0xff]
        %v390 = vld [vmem:[%s312 + $0xe8] sm:$0xff]
        %v391 = vld [vmem:[%s312 + $0xf0] sm:$0xff]
        %v392 = vld [vmem:[%s312 + $0xf8] sm:$0xff]
        %v393 = vld [vmem:[%s312 + $0x100] sm:$0xff]
        %v394 = vld [vmem:[%s312 + $0x108] sm:$0xff]
        %v395 = vld [vmem:[%s312 + $0x110] sm:$0xff]
        %v396 = vld [vmem:[%s312 + $0x118] sm:$0xff]
        %v397 = vld [vmem:[%s312 + $0x120] sm:$0xff]
        %v398 = vld [vmem:[%s312 + $0x128] sm:$0xff]
        %v399 = vld [vmem:[%s312 + $0x130] sm:$0xff]
        %v400 = vld [vmem:[%s312 + $0x138] sm:$0xff]
        %v401 = vld [vmem:[%s312 + $0x140] sm:$0xff]
        %v402 = vld [vmem:[%s312 + $0x148] sm:$0xff]
        %v403 = vld [vmem:[%s312 + $0x150] sm:$0xff]
        %v404 = vld [vmem:[%s312 + $0x158] sm:$0xff]
        %v405 = vld [vmem:[%s312 + $0x160] sm:$0xff]
        %v406 = vld [vmem:[%s312 + $0x168] sm:$0xff]
        %v407 = vld [vmem:[%s312 + $0x170] sm:$0xff]
        %v408 = vld [vmem:[%s312 + $0x178] sm:$0xff]
        %v409 = vld [vmem:[%s312 + $0x180] sm:$0xff]
        %v410 = vld [vmem:[%s312 + $0x188] sm:$0xff]
        %v411 = vld [vmem:[%s312 + $0x190] sm:$0xff]
        %v412 = vld [vmem:[%s312 + $0x198] sm:$0xff]
        %v413 = vld [vmem:[%s312 + $0x1a0] sm:$0xff]
        %v414 = vld [vmem:[%s312 + $0x1a8] sm:$0xff]
        %v415 = vld [vmem:[%s312 + $0x1b0] sm:$0xff]
        %v416 = vld [vmem:[%s312 + $0x1b8] sm:$0xff]
        %v417 = vld [vmem:[%s312 + $0x1c0] sm:$0xff]
        %v418 = vld [vmem:[%s312 + $0x1c8] sm:$0xff]
        %v419 = vld [vmem:[%s312 + $0x1d0] sm:$0xff]
        %v420 = vld [vmem:[%s312 + $0x1d8] sm:$0xff]
        %v421 = vld [vmem:[%s312 + $0x1e0] sm:$0xff]
        %v422 = vld [vmem:[%s312 + $0x1e8] sm:$0xff]
        %v423 = vld [vmem:[%s312 + $0x1f0] sm:$0xff]
        %v424 = vld [vmem:[%s312 + $0x1f8] sm:$0xff]
        %v425 = vld [vmem:[%s312 + $0x200] sm:$0xff]
        %v426 = vld [vmem:[%s312 + $0x208] sm:$0xff]
        %v427 = vld [vmem:[%s312 + $0x210] sm:$0xff]
        %v428 = vld [vmem:[%s312 + $0x218] sm:$0xff]
        %v429 = vld [vmem:[%s312 + $0x220] sm:$0xff]
        %v430 = vld [vmem:[%s312 + $0x228] sm:$0xff]
        %v431 = vld [vmem:[%s312 + $0x230] sm:$0xff]
        %v432 = vld [vmem:[%s312 + $0x238] sm:$0xff]
        %v433 = vld [vmem:[%s312 + $0x240] sm:$0xff]
        %v434 = vld [vmem:[%s312 + $0x248] sm:$0xff]
        %v435 = vld [vmem:[%s312 + $0x250] sm:$0xff]
        %v436 = vld [vmem:[%s312 + $0x258] sm:$0xff]
        %v437 = vld [vmem:[%s312 + $0x260] sm:$0xff]
        %v438 = vld [vmem:[%s312 + $0x268] sm:$0xff]
        %v439 = vld [vmem:[%s312 + $0x270] sm:$0xff]
        %v440 = vld [vmem:[%s312 + $0x278] sm:$0xff]
        %v441 = vld [vmem:[%s312 + $0x280] sm:$0xff]
        %v442 = vld [vmem:[%s312 + $0x288] sm:$0xff]
        %v443 = vld [vmem:[%s312 + $0x290] sm:$0xff]
        %v444 = vld [vmem:[%s312 + $0x298] sm:$0xff]
        %v445 = vld [vmem:[%s312 + $0x2a0] sm:$0xff]
        %v446 = vld [vmem:[%s312 + $0x2a8] sm:$0xff]
        %v447 = vld [vmem:[%s312 + $0x2b0] sm:$0xff]
        %v448 = vld [vmem:[%s312 + $0x2b8] sm:$0xff]
        %v449 = vld [vmem:[%s312 + $0x2c0] sm:$0xff]
        %v450 = vld [vmem:[%s312 + $0x2c8] sm:$0xff]
        %v451 = vld [vmem:[%s312 + $0x2d0] sm:$0xff]
        %v452 = vld [vmem:[%s312 + $0x2d8] sm:$0xff]
        %v453 = vld [vmem:[%s312 + $0x2e0] sm:$0xff]
        %v454 = vld [vmem:[%s312 + $0x2e8] sm:$0xff]
        %v455 = vld [vmem:[%s312 + $0x2f0] sm:$0xff]
        %v456 = vld [vmem:[%s312 + $0x2f8] sm:$0xff]
        %v457 = vld [vmem:[%s312 + $0x300] sm:$0xff]
        %v458 = vld [vmem:[%s312 + $0x308] sm:$0xff]
        %v459 = vld [vmem:[%s312 + $0x310] sm:$0xff]
        %v460 = vld [vmem:[%s312 + $0x318] sm:$0xff]
        %v461 = vld [vmem:[%s312 + $0x320] sm:$0xff]
        %v462 = vld [vmem:[%s312 + $0x328] sm:$0xff]
        %v463 = vld [vmem:[%s312 + $0x330] sm:$0xff]
        %v464 = vld [vmem:[%s312 + $0x338] sm:$0xff]
        %v465 = vld [vmem:[%s312 + $0x340] sm:$0xff]
        %v466 = vld [vmem:[%s312 + $0x348] sm:$0xff]
        %v467 = vld [vmem:[%s312 + $0x350] sm:$0xff]
        %v468 = vld [vmem:[%s312 + $0x358] sm:$0xff]
        %v469 = vld [vmem:[%s312 + $0x360] sm:$0xff]
        %v470 = vld [vmem:[%s312 + $0x368] sm:$0xff]
        %v471 = vld [vmem:[%s312 + $0x370] sm:$0xff]
        %v472 = vld [vmem:[%s312 + $0x378] sm:$0xff]
        %v473 = vld [vmem:[%s312 + $0x380] sm:$0xff]
        %v474 = vld [vmem:[%s312 + $0x388] sm:$0xff]
        %v475 = vld [vmem:[%s312 + $0x390] sm:$0xff]
        %v476 = vld [vmem:[%s312 + $0x398] sm:$0xff]
        %v477 = vld [vmem:[%s312 + $0x3a0] sm:$0xff]
        %v478 = vld [vmem:[%s312 + $0x3a8] sm:$0xff]
        %v479 = vld [vmem:[%s312 + $0x3b0] sm:$0xff]
        %v480 = vld [vmem:[%s312 + $0x3b8] sm:$0xff]
        %v481 = vld [vmem:[%s312 + $0x3c0] sm:$0xff]
        %v482 = vld [vmem:[%s312 + $0x3c8] sm:$0xff]
        %v483 = vld [vmem:[%s312 + $0x3d0] sm:$0xff]
        %v484 = vld [vmem:[%s312 + $0x3d8] sm:$0xff]
        %v485 = vld [vmem:[%s312 + $0x3e0] sm:$0xff]
        %v486 = vld [vmem:[%s312 + $0x3e8] sm:$0xff]
        %v487 = vld [vmem:[%s312 + $0x3f0] sm:$0xff]
        %v488 = vld [vmem:[%s312 + $0x3f8] sm:$0xff]
        %v489 = vld [vmem:[%s312 + $0x400] sm:$0xff]
        %v490 = vld [vmem:[%s312 + $0x408] sm:$0xff]
        %v491 = vld [vmem:[%s312 + $0x410] sm:$0xff]
        %v492 = vld [vmem:[%s312 + $0x418] sm:$0xff]
        %v493 = vld [vmem:[%s312 + $0x420] sm:$0xff]
        %v494 = vld [vmem:[%s312 + $0x428] sm:$0xff]
        %v495 = vld [vmem:[%s312 + $0x430] sm:$0xff]
        %v496 = vld [vmem:[%s312 + $0x438] sm:$0xff]
        %v497 = vld [vmem:[%s312 + $0x440] sm:$0xff]
        %v498 = vld [vmem:[%s312 + $0x448] sm:$0xff]
        %v499 = vld [vmem:[%s312 + $0x450] sm:$0xff]
        %v500 = vld [vmem:[%s312 + $0x458] sm:$0xff]
        %v501 = vld [vmem:[%s312 + $0x460] sm:$0xff]
        %v502 = vld [vmem:[%s312 + $0x468] sm:$0xff]
        %v503 = vld [vmem:[%s312 + $0x470] sm:$0xff]
        %v504 = vld [vmem:[%s312 + $0x478] sm:$0xff]
        %v505 = vld [vmem:[%s312 + $0x480] sm:$0xff]
        %v506 = vld [vmem:[%s312 + $0x488] sm:$0xff]
        %v507 = vld [vmem:[%s312 + $0x490] sm:$0xff]
        %v508 = vld [vmem:[%s312 + $0x498] sm:$0xff]
        %v509 = vld [vmem:[%s312 + $0x4a0] sm:$0xff]
        %v510 = vld [vmem:[%s312 + $0x4a8] sm:$0xff]
        %v511 = vld [vmem:[%s312 + $0x4b0] sm:$0xff]
        %v512 = vld [vmem:[%s312 + $0x4b8] sm:$0xff]
        %v513 = vld [vmem:[%s312 + $0x4c0] sm:$0xff]
        %v514 = vld [vmem:[%s312 + $0x4c8] sm:$0xff]
        %v515 = vld [vmem:[%s312 + $0x4d0] sm:$0xff]
        %v516 = vld [vmem:[%s312 + $0x4d8] sm:$0xff]
        %v517 = vld [vmem:[%s312 + $0x4e0] sm:$0xff]
        %v518 = vld [vmem:[%s312 + $0x4e8] sm:$0xff]
        %v519 = vld [vmem:[%s312 + $0x4f0] sm:$0xff]
        %v520 = vld [vmem:[%s312 + $0x4f8] sm:$0xff]
        %v521 = vld [vmem:[%s312 + $0x500] sm:$0xff]
        %v522 = vld [vmem:[%s312 + $0x508] sm:$0xff]
        %v523 = vld [vmem:[%s312 + $0x510] sm:$0xff]
        %v524 = vld [vmem:[%s312 + $0x518] sm:$0xff]
        %v525 = vld [vmem:[%s312 + $0x520] sm:$0xff]
        %v526 = vld [vmem:[%s312 + $0x528] sm:$0xff]
        %v527 = vld [vmem:[%s312 + $0x530] sm:$0xff]
        %v528 = vld [vmem:[%s312 + $0x538] sm:$0xff]
        %v529 = vld [vmem:[%s312 + $0x540] sm:$0xff]
        %v530 = vld [vmem:[%s312 + $0x548] sm:$0xff]
        %v531 = vld [vmem:[%s312 + $0x550] sm:$0xff]
        %v532 = vld [vmem:[%s312 + $0x558] sm:$0xff]
        %v533 = vld [vmem:[%s312 + $0x560] sm:$0xff]
        %v534 = vld [vmem:[%s312 + $0x568] sm:$0xff]
        %v535 = vld [vmem:[%s312 + $0x570] sm:$0xff]
        %v536 = vld [vmem:[%s312 + $0x578] sm:$0xff]
        %v537 = vld [vmem:[%s312 + $0x580] sm:$0xff]
        %v538 = vld [vmem:[%s312 + $0x588] sm:$0xff]
        %v539 = vld [vmem:[%s312 + $0x590] sm:$0xff]
        %v540 = vld [vmem:[%s312 + $0x598] sm:$0xff]
        %v541 = vld [vmem:[%s312 + $0x5a0] sm:$0xff]
        %v542 = vld [vmem:[%s312 + $0x5a8] sm:$0xff]
        %v543 = vld [vmem:[%s312 + $0x5b0] sm:$0xff]
        %v544 = vld [vmem:[%s312 + $0x5b8] sm:$0xff]
        %v545 = vld [vmem:[%s312 + $0x5c0] sm:$0xff]
        %v546 = vld [vmem:[%s312 + $0x5c8] sm:$0xff]
        %v547 = vld [vmem:[%s312 + $0x5d0] sm:$0xff]
        %v548 = vld [vmem:[%s312 + $0x5d8] sm:$0xff]
        %v549 = vld [vmem:[%s312 + $0x5e0] sm:$0xff]
        %v550 = vld [vmem:[%s312 + $0x5e8] sm:$0xff]
        %v551 = vld [vmem:[%s312 + $0x5f0] sm:$0xff]
        %v552 = vld [vmem:[%s312 + $0x5f8] sm:$0xff]
        %v553 = vld [vmem:[%s312 + $0x600] sm:$0xff]
        %v554 = vld [vmem:[%s312 + $0x608] sm:$0xff]
        %v555 = vld [vmem:[%s312 + $0x610] sm:$0xff]
        %v556 = vld [vmem:[%s312 + $0x618] sm:$0xff]
        %v557 = vld [vmem:[%s312 + $0x620] sm:$0xff]
        %v558 = vld [vmem:[%s312 + $0x628] sm:$0xff]
        %v559 = vld [vmem:[%s312 + $0x630] sm:$0xff]
        %v560 = vld [vmem:[%s312 + $0x638] sm:$0xff]
        %v561 = vld [vmem:[%s312 + $0x640] sm:$0xff]
        %v562 = vld [vmem:[%s312 + $0x648] sm:$0xff]
        %v563 = vld [vmem:[%s312 + $0x650] sm:$0xff]
        %v564 = vld [vmem:[%s312 + $0x658] sm:$0xff]
        %v565 = vld [vmem:[%s312 + $0x660] sm:$0xff]
        %v566 = vld [vmem:[%s312 + $0x668] sm:$0xff]
        %v567 = vld [vmem:[%s312 + $0x670] sm:$0xff]
        %v568 = vld [vmem:[%s312 + $0x678] sm:$0xff]
        %v569 = vld [vmem:[%s312 + $0x680] sm:$0xff]
        %v570 = vld [vmem:[%s312 + $0x688] sm:$0xff]
        %v571 = vld [vmem:[%s312 + $0x690] sm:$0xff]
        %v572 = vld [vmem:[%s312 + $0x698] sm:$0xff]
        %v573 = vld [vmem:[%s312 + $0x6a0] sm:$0xff]
        %v574 = vld [vmem:[%s312 + $0x6a8] sm:$0xff]
        %v575 = vld [vmem:[%s312 + $0x6b0] sm:$0xff]
        %v576 = vld [vmem:[%s312 + $0x6b8] sm:$0xff]
        %v577 = vld [vmem:[%s312 + $0x6c0] sm:$0xff]
        %v578 = vld [vmem:[%s312 + $0x6c8] sm:$0xff]
        %v579 = vld [vmem:[%s312 + $0x6d0] sm:$0xff]
        %v580 = vld [vmem:[%s312 + $0x6d8] sm:$0xff]
        %v581 = vld [vmem:[%s312 + $0x6e0] sm:$0xff]
        %v582 = vld [vmem:[%s312 + $0x6e8] sm:$0xff]
        %v583 = vld [vmem:[%s312 + $0x6f0] sm:$0xff]
        %v584 = vld [vmem:[%s312 + $0x6f8] sm:$0xff]
        %v585 = vld [vmem:[%s312 + $0x700] sm:$0xff]
        %v586 = vld [vmem:[%s312 + $0x708] sm:$0xff]
        %v587 = vld [vmem:[%s312 + $0x710] sm:$0xff]
        %v588 = vld [vmem:[%s312 + $0x718] sm:$0xff]
        %v589 = vld [vmem:[%s312 + $0x720] sm:$0xff]
        %v590 = vld [vmem:[%s312 + $0x728] sm:$0xff]
        %v591 = vld [vmem:[%s312 + $0x730] sm:$0xff]
        %v592 = vld [vmem:[%s312 + $0x738] sm:$0xff]
        %v593 = vld [vmem:[%s312 + $0x740] sm:$0xff]
        %v594 = vld [vmem:[%s312 + $0x748] sm:$0xff]
        %v595 = vld [vmem:[%s312 + $0x750] sm:$0xff]
        %v596 = vld [vmem:[%s312 + $0x758] sm:$0xff]
        %v597 = vld [vmem:[%s312 + $0x760] sm:$0xff]
        %v598 = vld [vmem:[%s312 + $0x768] sm:$0xff]
        %v599 = vld [vmem:[%s312 + $0x770] sm:$0xff]
        %v600 = vld [vmem:[%s312 + $0x778] sm:$0xff]
        %v601 = vld [vmem:[%s312 + $0x780] sm:$0xff]
        %v602 = vld [vmem:[%s312 + $0x788] sm:$0xff]
        %v603 = vld [vmem:[%s312 + $0x790] sm:$0xff]
        %v604 = vld [vmem:[%s312 + $0x798] sm:$0xff]
        %v605 = vld [vmem:[%s312 + $0x7a0] sm:$0xff]
        %v606 = vld [vmem:[%s312 + $0x7a8] sm:$0xff]
        %v607 = vld [vmem:[%s312 + $0x7b0] sm:$0xff]
        %v608 = vld [vmem:[%s312 + $0x7b8] sm:$0xff]
        %v609 = vld [vmem:[%s312 + $0x7c0] sm:$0xff]
        %v610 = vld [vmem:[%s312 + $0x7c8] sm:$0xff]
        %v611 = vld [vmem:[%s312 + $0x7d0] sm:$0xff]
        %v612 = vld [vmem:[%s312 + $0x7d8] sm:$0xff]
        %v613 = vld [vmem:[%s312 + $0x7e0] sm:$0xff]
        %v614 = vld [vmem:[%s312 + $0x7e8] sm:$0xff]
        %v615 = vld [vmem:[%s312 + $0x7f0] sm:$0xff]
        %v616 = vld [vmem:[%s312 + $0x7f8] sm:$0xff]
        %v617 = vld [vmem:[%s312 + $0x800] sm:$0xff]
        %v618 = vld [vmem:[%s312 + $0x808] sm:$0xff]
        %v619 = vld [vmem:[%s312 + $0x810] sm:$0xff]
        %v620 = vld [vmem:[%s312 + $0x818] sm:$0xff]
        %v621 = vld [vmem:[%s312 + $0x820] sm:$0xff]
        %v622 = vld [vmem:[%s312 + $0x828] sm:$0xff]
        %v623 = vld [vmem:[%s312 + $0x830] sm:$0xff]
        %v624 = vld [vmem:[%s312 + $0x838] sm:$0xff]
        %v625 = vld [vmem:[%s312 + $0x840] sm:$0xff]
        %v626 = vld [vmem:[%s312 + $0x848] sm:$0xff]
        %v627 = vld [vmem:[%s312 + $0x850] sm:$0xff]
        %v628 = vld [vmem:[%s312 + $0x858] sm:$0xff]
        %v629 = vld [vmem:[%s312 + $0x860] sm:$0xff]
        %v630 = vld [vmem:[%s312 + $0x868] sm:$0xff]
        %v631 = vld [vmem:[%s312 + $0x870] sm:$0xff]
        %v632 = vld [vmem:[%s312 + $0x878] sm:$0xff]
        %v633 = vld [vmem:[%s312 + $0x880] sm:$0xff]
        %v634 = vld [vmem:[%s312 + $0x888] sm:$0xff]
        %v635 = vld [vmem:[%s312 + $0x890] sm:$0xff]
        %v636 = vld [vmem:[%s312 + $0x898] sm:$0xff]
        %v637 = vld [vmem:[%s312 + $0x8a0] sm:$0xff]
        %v638 = vld [vmem:[%s312 + $0x8a8] sm:$0xff]
        %v639 = vld [vmem:[%s312 + $0x8b0] sm:$0xff]
        %v640 = vld [vmem:[%s312 + $0x8b8] sm:$0xff]
        %v641 = vld [vmem:[%s312 + $0x8c0] sm:$0xff]
        %v642 = vld [vmem:[%s312 + $0x8c8] sm:$0xff]
        %v643 = vld [vmem:[%s312 + $0x8d0] sm:$0xff]
        %v644 = vld [vmem:[%s312 + $0x8d8] sm:$0xff]
        %v645 = vld [vmem:[%s312 + $0x8e0] sm:$0xff]
        %v646 = vld [vmem:[%s312 + $0x8e8] sm:$0xff]
        %v647 = vld [vmem:[%s312 + $0x8f0] sm:$0xff]
        %v648 = vld [vmem:[%s312 + $0x8f8] sm:$0xff]
        %v649 = vld [vmem:[%s312 + $0x900] sm:$0xff]
        %v650 = vld [vmem:[%s312 + $0x908] sm:$0xff]
        %v651 = vld [vmem:[%s312 + $0x910] sm:$0xff]
        %v652 = vld [vmem:[%s312 + $0x918] sm:$0xff]
        %v653 = vld [vmem:[%s312 + $0x920] sm:$0xff]
        %v654 = vld [vmem:[%s312 + $0x928] sm:$0xff]
        %v655 = vld [vmem:[%s312 + $0x930] sm:$0xff]
        %v656 = vld [vmem:[%s312 + $0x938] sm:$0xff]
        %v657 = vld [vmem:[%s312 + $0x940] sm:$0xff]
        %v658 = vld [vmem:[%s312 + $0x948] sm:$0xff]
        %v659 = vld [vmem:[%s312 + $0x950] sm:$0xff]
        %v660 = vld [vmem:[%s312 + $0x958] sm:$0xff]
        %v661 = vld [vmem:[%s312 + $0x960] sm:$0xff]
        %v662 = vld [vmem:[%s312 + $0x968] sm:$0xff]
        %v663 = vld [vmem:[%s312 + $0x970] sm:$0xff]
        %v664 = vld [vmem:[%s312 + $0x978] sm:$0xff]
        %v665 = vld [vmem:[%s312 + $0x980] sm:$0xff]
        %v666 = vld [vmem:[%s312 + $0x988] sm:$0xff]
        %v667 = vld [vmem:[%s312 + $0x990] sm:$0xff]
        %v668 = vld [vmem:[%s312 + $0x998] sm:$0xff]
        %v669 = vld [vmem:[%s312 + $0x9a0] sm:$0xff]
        %v670 = vld [vmem:[%s312 + $0x9a8] sm:$0xff]
        %v671 = vld [vmem:[%s312 + $0x9b0] sm:$0xff]
        %v672 = vld [vmem:[%s312 + $0x9b8] sm:$0xff]
        %v673 = vld [vmem:[%s312 + $0x9c0] sm:$0xff]
        %v674 = vld [vmem:[%s312 + $0x9c8] sm:$0xff]
        %v675 = vld [vmem:[%s312 + $0x9d0] sm:$0xff]
        %v676 = vld [vmem:[%s312 + $0x9d8] sm:$0xff]
        %v677 = vld [vmem:[%s312 + $0x9e0] sm:$0xff]
        %v678 = vld [vmem:[%s312 + $0x9e8] sm:$0xff]
        %v679 = vld [vmem:[%s312 + $0x9f0] sm:$0xff]
        %v680 = vld [vmem:[%s312 + $0x9f8] sm:$0xff]
        %v682 = vcombine.high %v360, %v360
        %v684 = vunpack.c.l.s4 1966171168
        %v685 = vunpack.c.0.s8 %v684
        %v686 = vlaneseq
        %v687 = vshrl.u32 %v686, 7
        %v688 = vsub.s32 %v685, %v687
        %v689 = vrot.slane %v360, %v688
        %v691 = vunpack.c.l.s4 1966171168
        %v692 = vunpack.c.0.s8 %v691
        %v693 = vlaneseq
        %v694 = vshrl.u32 %v693, 7
        %v695 = vsub.s32 %v692, %v694
        %v696 = vrot.slane %v682, %v695
        %v697 = vcombine.high %v689, %v689
        %v699 = vunpack.c.l.s4 1966171168
        %v700 = vunpack.c.0.s8 %v699
        %v701 = vlaneseq
        %v702 = vshrl.u32 %v701, 7
        %v703 = vsub.s32 %v700, %v702
        %v704 = vrot.slane %v689, %v703
        %v706 = vunpack.c.l.s4 1966171168
        %v707 = vunpack.c.0.s8 %v706
        %v708 = vlaneseq
        %v709 = vshrl.u32 %v708, 7
        %v710 = vsub.s32 %v707, %v709
        %v711 = vrot.slane %v696, %v710
        %v713 = vunpack.c.l.s4 1966171168
        %v714 = vunpack.c.0.s8 %v713
        %v715 = vlaneseq
        %v716 = vshrl.u32 %v715, 7
        %v717 = vsub.s32 %v714, %v716
        %v718 = vrot.slane %v697, %v717
        %v719 = vcombine.high %v704, %v704
        %v720 = vcombine.high %v718, %v718
        %v1046 = vunpack.c.l.b16 %v361
        %v1047 = vunpack.c.h.b16 %v361
        %v1048 = vunpack.c.l.b16 %v362
        %v1049 = vunpack.c.h.b16 %v362
        %v1050 = vunpack.c.l.b16 %v363
        %v1051 = vunpack.c.h.b16 %v363
        %v1052 = vunpack.c.l.b16 %v364
        %v1053 = vunpack.c.h.b16 %v364
        %v1054 = vunpack.c.l.b16 %v365
        %v1055 = vunpack.c.h.b16 %v365
        %v1056 = vunpack.c.l.b16 %v366
        %v1057 = vunpack.c.h.b16 %v366
        %v1058 = vunpack.c.l.b16 %v367
        %v1059 = vunpack.c.h.b16 %v367
        %v1060 = vunpack.c.l.b16 %v368
        %v1061 = vunpack.c.h.b16 %v368
        %v1062 = vunpack.c.l.b16 %v369
        %v1063 = vunpack.c.h.b16 %v369
        %v1064 = vunpack.c.l.b16 %v370
        %v1065 = vunpack.c.h.b16 %v370
        %v1066 = vunpack.c.l.b16 %v371
        %v1067 = vunpack.c.h.b16 %v371
        %v1068 = vunpack.c.l.b16 %v372
        %v1069 = vunpack.c.h.b16 %v372
        %v1070 = vunpack.c.l.b16 %v373
        %v1071 = vunpack.c.h.b16 %v373
        %v1072 = vunpack.c.l.b16 %v374
        %v1073 = vunpack.c.h.b16 %v374
        %v1074 = vunpack.c.l.b16 %v375
        %v1075 = vunpack.c.h.b16 %v375
        %v1076 = vunpack.c.l.b16 %v376
        %v1077 = vunpack.c.h.b16 %v376
        %v1078 = vunpack.c.l.b16 %v377
        %v1079 = vunpack.c.h.b16 %v377
        %v1080 = vunpack.c.l.b16 %v378
        %v1081 = vunpack.c.h.b16 %v378
        %v1082 = vunpack.c.l.b16 %v379
        %v1083 = vunpack.c.h.b16 %v379
        %v1084 = vunpack.c.l.b16 %v380
        %v1085 = vunpack.c.h.b16 %v380
        %v1086 = vunpack.c.l.b16 %v381
        %v1087 = vunpack.c.h.b16 %v381
        %v1088 = vunpack.c.l.b16 %v382
        %v1089 = vunpack.c.h.b16 %v382
        %v1090 = vunpack.c.l.b16 %v383
        %v1091 = vunpack.c.h.b16 %v383
        %v1092 = vunpack.c.l.b16 %v384
        %v1093 = vunpack.c.h.b16 %v384
        %v1094 = vunpack.c.l.b16 %v385
        %v1095 = vunpack.c.h.b16 %v385
        %v1096 = vunpack.c.l.b16 %v386
        %v1097 = vunpack.c.h.b16 %v386
        %v1098 = vunpack.c.l.b16 %v387
        %v1099 = vunpack.c.h.b16 %v387
        %v1100 = vunpack.c.l.b16 %v388
        %v1101 = vunpack.c.h.b16 %v388
        %v1102 = vunpack.c.l.b16 %v389
        %v1103 = vunpack.c.h.b16 %v389
        %v1104 = vunpack.c.l.b16 %v390
        %v1105 = vunpack.c.h.b16 %v390
        %v1106 = vunpack.c.l.b16 %v391
        %v1107 = vunpack.c.h.b16 %v391
        %v1108 = vunpack.c.l.b16 %v392
        %v1109 = vunpack.c.h.b16 %v392
        %v1110 = vunpack.c.l.b16 %v393
        %v1111 = vunpack.c.h.b16 %v393
        %v1112 = vunpack.c.l.b16 %v394
        %v1113 = vunpack.c.h.b16 %v394
        %v1114 = vunpack.c.l.b16 %v395
        %v1115 = vunpack.c.h.b16 %v395
        %v1116 = vunpack.c.l.b16 %v396
        %v1117 = vunpack.c.h.b16 %v396
        %v1118 = vunpack.c.l.b16 %v397
        %v1119 = vunpack.c.h.b16 %v397
        %v1120 = vunpack.c.l.b16 %v398
        %v1121 = vunpack.c.h.b16 %v398
        %v1122 = vunpack.c.l.b16 %v399
        %v1123 = vunpack.c.h.b16 %v399
        %v1124 = vunpack.c.l.b16 %v400
        %v1125 = vunpack.c.h.b16 %v400
        %v1126 = vunpack.c.l.b16 %v401
        %v1127 = vunpack.c.h.b16 %v401
        %v1128 = vunpack.c.l.b16 %v402
        %v1129 = vunpack.c.h.b16 %v402
        %v1130 = vunpack.c.l.b16 %v403
        %v1131 = vunpack.c.h.b16 %v403
        %v1132 = vunpack.c.l.b16 %v404
        %v1133 = vunpack.c.h.b16 %v404
        %v1134 = vunpack.c.l.b16 %v405
        %v1135 = vunpack.c.h.b16 %v405
        %v1136 = vunpack.c.l.b16 %v406
        %v1137 = vunpack.c.h.b16 %v406
        %v1138 = vunpack.c.l.b16 %v407
        %v1139 = vunpack.c.h.b16 %v407
        %v1140 = vunpack.c.l.b16 %v408
        %v1141 = vunpack.c.h.b16 %v408
        %v1142 = vunpack.c.l.b16 %v409
        %v1143 = vunpack.c.h.b16 %v409
        %v1144 = vunpack.c.l.b16 %v410
        %v1145 = vunpack.c.h.b16 %v410
        %v1146 = vunpack.c.l.b16 %v411
        %v1147 = vunpack.c.h.b16 %v411
        %v1148 = vunpack.c.l.b16 %v412
        %v1149 = vunpack.c.h.b16 %v412
        %v1150 = vunpack.c.l.b16 %v413
        %v1151 = vunpack.c.h.b16 %v413
        %v1152 = vunpack.c.l.b16 %v414
        %v1153 = vunpack.c.h.b16 %v414
        %v1154 = vunpack.c.l.b16 %v415
        %v1155 = vunpack.c.h.b16 %v415
        %v1156 = vunpack.c.l.b16 %v416
        %v1157 = vunpack.c.h.b16 %v416
        %v1158 = vunpack.c.l.b16 %v417
        %v1159 = vunpack.c.h.b16 %v417
        %v1160 = vunpack.c.l.b16 %v418
        %v1161 = vunpack.c.h.b16 %v418
        %v1162 = vunpack.c.l.b16 %v419
        %v1163 = vunpack.c.h.b16 %v419
        %v1164 = vunpack.c.l.b16 %v420
        %v1165 = vunpack.c.h.b16 %v420
        %v1166 = vunpack.c.l.b16 %v421
        %v1167 = vunpack.c.h.b16 %v421
        %v1168 = vunpack.c.l.b16 %v422
        %v1169 = vunpack.c.h.b16 %v422
        %v1170 = vunpack.c.l.b16 %v423
        %v1171 = vunpack.c.h.b16 %v423
        %v1172 = vunpack.c.l.b16 %v424
        %v1173 = vunpack.c.h.b16 %v424
        %v1174 = vunpack.c.l.b16 %v425
        %v1175 = vunpack.c.h.b16 %v425
        %v1176 = vunpack.c.l.b16 %v426
        %v1177 = vunpack.c.h.b16 %v426
        %v1178 = vunpack.c.l.b16 %v427
        %v1179 = vunpack.c.h.b16 %v427
        %v1180 = vunpack.c.l.b16 %v428
        %v1181 = vunpack.c.h.b16 %v428
        %v1182 = vunpack.c.l.b16 %v429
        %v1183 = vunpack.c.h.b16 %v429
        %v1184 = vunpack.c.l.b16 %v430
        %v1185 = vunpack.c.h.b16 %v430
        %v1186 = vunpack.c.l.b16 %v431
        %v1187 = vunpack.c.h.b16 %v431
        %v1188 = vunpack.c.l.b16 %v432
        %v1189 = vunpack.c.h.b16 %v432
        %v1190 = vunpack.c.l.b16 %v433
        %v1191 = vunpack.c.h.b16 %v433
        %v1192 = vunpack.c.l.b16 %v434
        %v1193 = vunpack.c.h.b16 %v434
        %v1194 = vunpack.c.l.b16 %v435
        %v1195 = vunpack.c.h.b16 %v435
        %v1196 = vunpack.c.l.b16 %v436
        %v1197 = vunpack.c.h.b16 %v436
        %v1198 = vunpack.c.l.b16 %v437
        %v1199 = vunpack.c.h.b16 %v437
        %v1200 = vunpack.c.l.b16 %v438
        %v1201 = vunpack.c.h.b16 %v438
        %v1202 = vunpack.c.l.b16 %v439
        %v1203 = vunpack.c.h.b16 %v439
        %v1204 = vunpack.c.l.b16 %v440
        %v1205 = vunpack.c.h.b16 %v440
        %v1206 = vunpack.c.l.b16 %v441
        %v1207 = vunpack.c.h.b16 %v441
        %v1208 = vunpack.c.l.b16 %v442
        %v1209 = vunpack.c.h.b16 %v442
        %v1210 = vunpack.c.l.b16 %v443
        %v1211 = vunpack.c.h.b16 %v443
        %v1212 = vunpack.c.l.b16 %v444
        %v1213 = vunpack.c.h.b16 %v444
        %v1214 = vunpack.c.l.b16 %v445
        %v1215 = vunpack.c.h.b16 %v445
        %v1216 = vunpack.c.l.b16 %v446
        %v1217 = vunpack.c.h.b16 %v446
        %v1218 = vunpack.c.l.b16 %v447
        %v1219 = vunpack.c.h.b16 %v447
        %v1220 = vunpack.c.l.b16 %v448
        %v1221 = vunpack.c.h.b16 %v448
        %v1222 = vunpack.c.l.b16 %v449
        %v1223 = vunpack.c.h.b16 %v449
        %v1224 = vunpack.c.l.b16 %v450
        %v1225 = vunpack.c.h.b16 %v450
        %v1226 = vunpack.c.l.b16 %v451
        %v1227 = vunpack.c.h.b16 %v451
        %v1228 = vunpack.c.l.b16 %v452
        %v1229 = vunpack.c.h.b16 %v452
        %v1230 = vunpack.c.l.b16 %v453
        %v1231 = vunpack.c.h.b16 %v453
        %v1232 = vunpack.c.l.b16 %v454
        %v1233 = vunpack.c.h.b16 %v454
        %v1234 = vunpack.c.l.b16 %v455
        %v1235 = vunpack.c.h.b16 %v455
        %v1236 = vunpack.c.l.b16 %v456
        %v1237 = vunpack.c.h.b16 %v456
        %v1238 = vunpack.c.l.b16 %v457
        %v1239 = vunpack.c.h.b16 %v457
        %v1240 = vunpack.c.l.b16 %v458
        %v1241 = vunpack.c.h.b16 %v458
        %v1242 = vunpack.c.l.b16 %v459
        %v1243 = vunpack.c.h.b16 %v459
        %v1244 = vunpack.c.l.b16 %v460
        %v1245 = vunpack.c.h.b16 %v460
        %v1246 = vunpack.c.l.b16 %v461
        %v1247 = vunpack.c.h.b16 %v461
        %v1248 = vunpack.c.l.b16 %v462
        %v1249 = vunpack.c.h.b16 %v462
        %v1250 = vunpack.c.l.b16 %v463
        %v1251 = vunpack.c.h.b16 %v463
        %v1252 = vunpack.c.l.b16 %v464
        %v1253 = vunpack.c.h.b16 %v464
        %v1254 = vunpack.c.l.b16 %v465
        %v1255 = vunpack.c.h.b16 %v465
        %v1256 = vunpack.c.l.b16 %v466
        %v1257 = vunpack.c.h.b16 %v466
        %v1258 = vunpack.c.l.b16 %v467
        %v1259 = vunpack.c.h.b16 %v467
        %v1260 = vunpack.c.l.b16 %v468
        %v1261 = vunpack.c.h.b16 %v468
        %v1262 = vunpack.c.l.b16 %v469
        %v1263 = vunpack.c.h.b16 %v469
        %v1264 = vunpack.c.l.b16 %v470
        %v1265 = vunpack.c.h.b16 %v470
        %v1266 = vunpack.c.l.b16 %v471
        %v1267 = vunpack.c.h.b16 %v471
        %v1268 = vunpack.c.l.b16 %v472
        %v1269 = vunpack.c.h.b16 %v472
        %v1270 = vunpack.c.l.b16 %v473
        %v1271 = vunpack.c.h.b16 %v473
        %v1272 = vunpack.c.l.b16 %v474
        %v1273 = vunpack.c.h.b16 %v474
        %v1274 = vunpack.c.l.b16 %v475
        %v1275 = vunpack.c.h.b16 %v475
        %v1276 = vunpack.c.l.b16 %v476
        %v1277 = vunpack.c.h.b16 %v476
        %v1278 = vunpack.c.l.b16 %v477
        %v1279 = vunpack.c.h.b16 %v477
        %v1280 = vunpack.c.l.b16 %v478
        %v1281 = vunpack.c.h.b16 %v478
        %v1282 = vunpack.c.l.b16 %v479
        %v1283 = vunpack.c.h.b16 %v479
        %v1284 = vunpack.c.l.b16 %v480
        %v1285 = vunpack.c.h.b16 %v480
        %v1286 = vunpack.c.l.b16 %v481
        %v1287 = vunpack.c.h.b16 %v481
        %v1288 = vunpack.c.l.b16 %v482
        %v1289 = vunpack.c.h.b16 %v482
        %v1290 = vunpack.c.l.b16 %v483
        %v1291 = vunpack.c.h.b16 %v483
        %v1292 = vunpack.c.l.b16 %v484
        %v1293 = vunpack.c.h.b16 %v484
        %v1294 = vunpack.c.l.b16 %v485
        %v1295 = vunpack.c.h.b16 %v485
        %v1296 = vunpack.c.l.b16 %v486
        %v1297 = vunpack.c.h.b16 %v486
        %v1298 = vunpack.c.l.b16 %v487
        %v1299 = vunpack.c.h.b16 %v487
        %v1300 = vunpack.c.l.b16 %v488
        %v1301 = vunpack.c.h.b16 %v488
        %v1302 = vunpack.c.l.b16 %v489
        %v1303 = vunpack.c.h.b16 %v489
        %v1304 = vunpack.c.l.b16 %v490
        %v1305 = vunpack.c.h.b16 %v490
        %v1306 = vunpack.c.l.b16 %v491
        %v1307 = vunpack.c.h.b16 %v491
        %v1308 = vunpack.c.l.b16 %v492
        %v1309 = vunpack.c.h.b16 %v492
        %v1310 = vunpack.c.l.b16 %v493
        %v1311 = vunpack.c.h.b16 %v493
        %v1312 = vunpack.c.l.b16 %v494
        %v1313 = vunpack.c.h.b16 %v494
        %v1314 = vunpack.c.l.b16 %v495
        %v1315 = vunpack.c.h.b16 %v495
        %v1316 = vunpack.c.l.b16 %v496
        %v1317 = vunpack.c.h.b16 %v496
        %v1318 = vunpack.c.l.b16 %v497
        %v1319 = vunpack.c.h.b16 %v497
        %v1320 = vunpack.c.l.b16 %v498
        %v1321 = vunpack.c.h.b16 %v498
        %v1322 = vunpack.c.l.b16 %v499
        %v1323 = vunpack.c.h.b16 %v499
        %v1324 = vunpack.c.l.b16 %v500
        %v1325 = vunpack.c.h.b16 %v500
        %v1326 = vunpack.c.l.b16 %v501
        %v1327 = vunpack.c.h.b16 %v501
        %v1328 = vunpack.c.l.b16 %v502
        %v1329 = vunpack.c.h.b16 %v502
        %v1330 = vunpack.c.l.b16 %v503
        %v1331 = vunpack.c.h.b16 %v503
        %v1332 = vunpack.c.l.b16 %v504
        %v1333 = vunpack.c.h.b16 %v504
        %v1334 = vunpack.c.l.b16 %v505
        %v1335 = vunpack.c.h.b16 %v505
        %v1336 = vunpack.c.l.b16 %v506
        %v1337 = vunpack.c.h.b16 %v506
        %v1338 = vunpack.c.l.b16 %v507
        %v1339 = vunpack.c.h.b16 %v507
        %v1340 = vunpack.c.l.b16 %v508
        %v1341 = vunpack.c.h.b16 %v508
        %v1342 = vunpack.c.l.b16 %v509
        %v1343 = vunpack.c.h.b16 %v509
        %v1344 = vunpack.c.l.b16 %v510
        %v1345 = vunpack.c.h.b16 %v510
        %v1346 = vunpack.c.l.b16 %v511
        %v1347 = vunpack.c.h.b16 %v511
        %v1348 = vunpack.c.l.b16 %v512
        %v1349 = vunpack.c.h.b16 %v512
        %v1350 = vunpack.c.l.b16 %v513
        %v1351 = vunpack.c.h.b16 %v513
        %v1352 = vunpack.c.l.b16 %v514
        %v1353 = vunpack.c.h.b16 %v514
        %v1354 = vunpack.c.l.b16 %v515
        %v1355 = vunpack.c.h.b16 %v515
        %v1356 = vunpack.c.l.b16 %v516
        %v1357 = vunpack.c.h.b16 %v516
        %v1358 = vunpack.c.l.b16 %v517
        %v1359 = vunpack.c.h.b16 %v517
        %v1360 = vunpack.c.l.b16 %v518
        %v1361 = vunpack.c.h.b16 %v518
        %v1362 = vunpack.c.l.b16 %v519
        %v1363 = vunpack.c.h.b16 %v519
        %v1364 = vunpack.c.l.b16 %v520
        %v1365 = vunpack.c.h.b16 %v520
        %v1366 = vunpack.c.l.b16 %v521
        %v1367 = vunpack.c.h.b16 %v521
        %v1368 = vunpack.c.l.b16 %v522
        %v1369 = vunpack.c.h.b16 %v522
        %v1370 = vunpack.c.l.b16 %v523
        %v1371 = vunpack.c.h.b16 %v523
        %v1372 = vunpack.c.l.b16 %v524
        %v1373 = vunpack.c.h.b16 %v524
        %v1374 = vunpack.c.l.b16 %v525
        %v1375 = vunpack.c.h.b16 %v525
        %v1376 = vunpack.c.l.b16 %v526
        %v1377 = vunpack.c.h.b16 %v526
        %v1378 = vunpack.c.l.b16 %v527
        %v1379 = vunpack.c.h.b16 %v527
        %v1380 = vunpack.c.l.b16 %v528
        %v1381 = vunpack.c.h.b16 %v528
        %v1382 = vunpack.c.l.b16 %v529
        %v1383 = vunpack.c.h.b16 %v529
        %v1384 = vunpack.c.l.b16 %v530
        %v1385 = vunpack.c.h.b16 %v530
        %v1386 = vunpack.c.l.b16 %v531
        %v1387 = vunpack.c.h.b16 %v531
        %v1388 = vunpack.c.l.b16 %v532
        %v1389 = vunpack.c.h.b16 %v532
        %v1390 = vunpack.c.l.b16 %v533
        %v1391 = vunpack.c.h.b16 %v533
        %v1392 = vunpack.c.l.b16 %v534
        %v1393 = vunpack.c.h.b16 %v534
        %v1394 = vunpack.c.l.b16 %v535
        %v1395 = vunpack.c.h.b16 %v535
        %v1396 = vunpack.c.l.b16 %v536
        %v1397 = vunpack.c.h.b16 %v536
        %v1398 = vunpack.c.l.b16 %v537
        %v1399 = vunpack.c.h.b16 %v537
        %v1400 = vunpack.c.l.b16 %v538
        %v1401 = vunpack.c.h.b16 %v538
        %v1402 = vunpack.c.l.b16 %v539
        %v1403 = vunpack.c.h.b16 %v539
        %v1404 = vunpack.c.l.b16 %v540
        %v1405 = vunpack.c.h.b16 %v540
        %v1406 = vunpack.c.l.b16 %v541
        %v1407 = vunpack.c.h.b16 %v541
        %v1408 = vunpack.c.l.b16 %v542
        %v1409 = vunpack.c.h.b16 %v542
        %v1410 = vunpack.c.l.b16 %v543
        %v1411 = vunpack.c.h.b16 %v543
        %v1412 = vunpack.c.l.b16 %v544
        %v1413 = vunpack.c.h.b16 %v544
        %v1414 = vunpack.c.l.b16 %v545
        %v1415 = vunpack.c.h.b16 %v545
        %v1416 = vunpack.c.l.b16 %v546
        %v1417 = vunpack.c.h.b16 %v546
        %v1418 = vunpack.c.l.b16 %v547
        %v1419 = vunpack.c.h.b16 %v547
        %v1420 = vunpack.c.l.b16 %v548
        %v1421 = vunpack.c.h.b16 %v548
        %v1422 = vunpack.c.l.b16 %v549
        %v1423 = vunpack.c.h.b16 %v549
        %v1424 = vunpack.c.l.b16 %v550
        %v1425 = vunpack.c.h.b16 %v550
        %v1426 = vunpack.c.l.b16 %v551
        %v1427 = vunpack.c.h.b16 %v551
        %v1428 = vunpack.c.l.b16 %v552
        %v1429 = vunpack.c.h.b16 %v552
        %v1430 = vunpack.c.l.b16 %v553
        %v1431 = vunpack.c.h.b16 %v553
        %v1432 = vunpack.c.l.b16 %v554
        %v1433 = vunpack.c.h.b16 %v554
        %v1434 = vunpack.c.l.b16 %v555
        %v1435 = vunpack.c.h.b16 %v555
        %v1436 = vunpack.c.l.b16 %v556
        %v1437 = vunpack.c.h.b16 %v556
        %v1438 = vunpack.c.l.b16 %v557
        %v1439 = vunpack.c.h.b16 %v557
        %v1440 = vunpack.c.l.b16 %v558
        %v1441 = vunpack.c.h.b16 %v558
        %v1442 = vunpack.c.l.b16 %v559
        %v1443 = vunpack.c.h.b16 %v559
        %v1444 = vunpack.c.l.b16 %v560
        %v1445 = vunpack.c.h.b16 %v560
        %v1446 = vunpack.c.l.b16 %v561
        %v1447 = vunpack.c.h.b16 %v561
        %v1448 = vunpack.c.l.b16 %v562
        %v1449 = vunpack.c.h.b16 %v562
        %v1450 = vunpack.c.l.b16 %v563
        %v1451 = vunpack.c.h.b16 %v563
        %v1452 = vunpack.c.l.b16 %v564
        %v1453 = vunpack.c.h.b16 %v564
        %v1454 = vunpack.c.l.b16 %v565
        %v1455 = vunpack.c.h.b16 %v565
        %v1456 = vunpack.c.l.b16 %v566
        %v1457 = vunpack.c.h.b16 %v566
        %v1458 = vunpack.c.l.b16 %v567
        %v1459 = vunpack.c.h.b16 %v567
        %v1460 = vunpack.c.l.b16 %v568
        %v1461 = vunpack.c.h.b16 %v568
        %v1462 = vunpack.c.l.b16 %v569
        %v1463 = vunpack.c.h.b16 %v569
        %v1464 = vunpack.c.l.b16 %v570
        %v1465 = vunpack.c.h.b16 %v570
        %v1466 = vunpack.c.l.b16 %v571
        %v1467 = vunpack.c.h.b16 %v571
        %v1468 = vunpack.c.l.b16 %v572
        %v1469 = vunpack.c.h.b16 %v572
        %v1470 = vunpack.c.l.b16 %v573
        %v1471 = vunpack.c.h.b16 %v573
        %v1472 = vunpack.c.l.b16 %v574
        %v1473 = vunpack.c.h.b16 %v574
        %v1474 = vunpack.c.l.b16 %v575
        %v1475 = vunpack.c.h.b16 %v575
        %v1476 = vunpack.c.l.b16 %v576
        %v1477 = vunpack.c.h.b16 %v576
        %v1478 = vunpack.c.l.b16 %v577
        %v1479 = vunpack.c.h.b16 %v577
        %v1480 = vunpack.c.l.b16 %v578
        %v1481 = vunpack.c.h.b16 %v578
        %v1482 = vunpack.c.l.b16 %v579
        %v1483 = vunpack.c.h.b16 %v579
        %v1484 = vunpack.c.l.b16 %v580
        %v1485 = vunpack.c.h.b16 %v580
        %v1486 = vunpack.c.l.b16 %v581
        %v1487 = vunpack.c.h.b16 %v581
        %v1488 = vunpack.c.l.b16 %v582
        %v1489 = vunpack.c.h.b16 %v582
        %v1490 = vunpack.c.l.b16 %v583
        %v1491 = vunpack.c.h.b16 %v583
        %v1492 = vunpack.c.l.b16 %v584
        %v1493 = vunpack.c.h.b16 %v584
        %v1494 = vunpack.c.l.b16 %v585
        %v1495 = vunpack.c.h.b16 %v585
        %v1496 = vunpack.c.l.b16 %v586
        %v1497 = vunpack.c.h.b16 %v586
        %v1498 = vunpack.c.l.b16 %v587
        %v1499 = vunpack.c.h.b16 %v587
        %v1500 = vunpack.c.l.b16 %v588
        %v1501 = vunpack.c.h.b16 %v588
        %v1502 = vunpack.c.l.b16 %v589
        %v1503 = vunpack.c.h.b16 %v589
        %v1504 = vunpack.c.l.b16 %v590
        %v1505 = vunpack.c.h.b16 %v590
        %v1506 = vunpack.c.l.b16 %v591
        %v1507 = vunpack.c.h.b16 %v591
        %v1508 = vunpack.c.l.b16 %v592
        %v1509 = vunpack.c.h.b16 %v592
        %v1510 = vunpack.c.l.b16 %v593
        %v1511 = vunpack.c.h.b16 %v593
        %v1512 = vunpack.c.l.b16 %v594
        %v1513 = vunpack.c.h.b16 %v594
        %v1514 = vunpack.c.l.b16 %v595
        %v1515 = vunpack.c.h.b16 %v595
        %v1516 = vunpack.c.l.b16 %v596
        %v1517 = vunpack.c.h.b16 %v596
        %v1518 = vunpack.c.l.b16 %v597
        %v1519 = vunpack.c.h.b16 %v597
        %v1520 = vunpack.c.l.b16 %v598
        %v1521 = vunpack.c.h.b16 %v598
        %v1522 = vunpack.c.l.b16 %v599
        %v1523 = vunpack.c.h.b16 %v599
        %v1524 = vunpack.c.l.b16 %v600
        %v1525 = vunpack.c.h.b16 %v600
        %v1526 = vunpack.c.l.b16 %v601
        %v1527 = vunpack.c.h.b16 %v601
        %v1528 = vunpack.c.l.b16 %v602
        %v1529 = vunpack.c.h.b16 %v602
        %v1530 = vunpack.c.l.b16 %v603
        %v1531 = vunpack.c.h.b16 %v603
        %v1532 = vunpack.c.l.b16 %v604
        %v1533 = vunpack.c.h.b16 %v604
        %v1534 = vunpack.c.l.b16 %v605
        %v1535 = vunpack.c.h.b16 %v605
        %v1536 = vunpack.c.l.b16 %v606
        %v1537 = vunpack.c.h.b16 %v606
        %v1538 = vunpack.c.l.b16 %v607
        %v1539 = vunpack.c.h.b16 %v607
        %v1540 = vunpack.c.l.b16 %v608
        %v1541 = vunpack.c.h.b16 %v608
        %v1542 = vunpack.c.l.b16 %v609
        %v1543 = vunpack.c.h.b16 %v609
        %v1544 = vunpack.c.l.b16 %v610
        %v1545 = vunpack.c.h.b16 %v610
        %v1546 = vunpack.c.l.b16 %v611
        %v1547 = vunpack.c.h.b16 %v611
        %v1548 = vunpack.c.l.b16 %v612
        %v1549 = vunpack.c.h.b16 %v612
        %v1550 = vunpack.c.l.b16 %v613
        %v1551 = vunpack.c.h.b16 %v613
        %v1552 = vunpack.c.l.b16 %v614
        %v1553 = vunpack.c.h.b16 %v614
        %v1554 = vunpack.c.l.b16 %v615
        %v1555 = vunpack.c.h.b16 %v615
        %v1556 = vunpack.c.l.b16 %v616
        %v1557 = vunpack.c.h.b16 %v616
        %v1558 = vunpack.c.l.b16 %v617
        %v1559 = vunpack.c.h.b16 %v617
        %v1560 = vunpack.c.l.b16 %v618
        %v1561 = vunpack.c.h.b16 %v618
        %v1562 = vunpack.c.l.b16 %v619
        %v1563 = vunpack.c.h.b16 %v619
        %v1564 = vunpack.c.l.b16 %v620
        %v1565 = vunpack.c.h.b16 %v620
        %v1566 = vunpack.c.l.b16 %v621
        %v1567 = vunpack.c.h.b16 %v621
        %v1568 = vunpack.c.l.b16 %v622
        %v1569 = vunpack.c.h.b16 %v622
        %v1570 = vunpack.c.l.b16 %v623
        %v1571 = vunpack.c.h.b16 %v623
        %v1572 = vunpack.c.l.b16 %v624
        %v1573 = vunpack.c.h.b16 %v624
        %v1574 = vunpack.c.l.b16 %v625
        %v1575 = vunpack.c.h.b16 %v625
        %v1576 = vunpack.c.l.b16 %v626
        %v1577 = vunpack.c.h.b16 %v626
        %v1578 = vunpack.c.l.b16 %v627
        %v1579 = vunpack.c.h.b16 %v627
        %v1580 = vunpack.c.l.b16 %v628
        %v1581 = vunpack.c.h.b16 %v628
        %v1582 = vunpack.c.l.b16 %v629
        %v1583 = vunpack.c.h.b16 %v629
        %v1584 = vunpack.c.l.b16 %v630
        %v1585 = vunpack.c.h.b16 %v630
        %v1586 = vunpack.c.l.b16 %v631
        %v1587 = vunpack.c.h.b16 %v631
        %v1588 = vunpack.c.l.b16 %v632
        %v1589 = vunpack.c.h.b16 %v632
        %v1590 = vunpack.c.l.b16 %v633
        %v1591 = vunpack.c.h.b16 %v633
        %v1592 = vunpack.c.l.b16 %v634
        %v1593 = vunpack.c.h.b16 %v634
        %v1594 = vunpack.c.l.b16 %v635
        %v1595 = vunpack.c.h.b16 %v635
        %v1596 = vunpack.c.l.b16 %v636
        %v1597 = vunpack.c.h.b16 %v636
        %v1598 = vunpack.c.l.b16 %v637
        %v1599 = vunpack.c.h.b16 %v637
        %v1600 = vunpack.c.l.b16 %v638
        %v1601 = vunpack.c.h.b16 %v638
        %v1602 = vunpack.c.l.b16 %v639
        %v1603 = vunpack.c.h.b16 %v639
        %v1604 = vunpack.c.l.b16 %v640
        %v1605 = vunpack.c.h.b16 %v640
        %v1606 = vunpack.c.l.b16 %v641
        %v1607 = vunpack.c.h.b16 %v641
        %v1608 = vunpack.c.l.b16 %v642
        %v1609 = vunpack.c.h.b16 %v642
        %v1610 = vunpack.c.l.b16 %v643
        %v1611 = vunpack.c.h.b16 %v643
        %v1612 = vunpack.c.l.b16 %v644
        %v1613 = vunpack.c.h.b16 %v644
        %v1614 = vunpack.c.l.b16 %v645
        %v1615 = vunpack.c.h.b16 %v645
        %v1616 = vunpack.c.l.b16 %v646
        %v1617 = vunpack.c.h.b16 %v646
        %v1618 = vunpack.c.l.b16 %v647
        %v1619 = vunpack.c.h.b16 %v647
        %v1620 = vunpack.c.l.b16 %v648
        %v1621 = vunpack.c.h.b16 %v648
        %v1622 = vunpack.c.l.b16 %v649
        %v1623 = vunpack.c.h.b16 %v649
        %v1624 = vunpack.c.l.b16 %v650
        %v1625 = vunpack.c.h.b16 %v650
        %v1626 = vunpack.c.l.b16 %v651
        %v1627 = vunpack.c.h.b16 %v651
        %v1628 = vunpack.c.l.b16 %v652
        %v1629 = vunpack.c.h.b16 %v652
        %v1630 = vunpack.c.l.b16 %v653
        %v1631 = vunpack.c.h.b16 %v653
        %v1632 = vunpack.c.l.b16 %v654
        %v1633 = vunpack.c.h.b16 %v654
        %v1634 = vunpack.c.l.b16 %v655
        %v1635 = vunpack.c.h.b16 %v655
        %v1636 = vunpack.c.l.b16 %v656
        %v1637 = vunpack.c.h.b16 %v656
        %v1638 = vunpack.c.l.b16 %v657
        %v1639 = vunpack.c.h.b16 %v657
        %v1640 = vunpack.c.l.b16 %v658
        %v1641 = vunpack.c.h.b16 %v658
        %v1642 = vunpack.c.l.b16 %v659
        %v1643 = vunpack.c.h.b16 %v659
        %v1644 = vunpack.c.l.b16 %v660
        %v1645 = vunpack.c.h.b16 %v660
        %v1646 = vunpack.c.l.b16 %v661
        %v1647 = vunpack.c.h.b16 %v661
        %v1648 = vunpack.c.l.b16 %v662
        %v1649 = vunpack.c.h.b16 %v662
        %v1650 = vunpack.c.l.b16 %v663
        %v1651 = vunpack.c.h.b16 %v663
        %v1652 = vunpack.c.l.b16 %v664
        %v1653 = vunpack.c.h.b16 %v664
        %v1654 = vunpack.c.l.b16 %v665
        %v1655 = vunpack.c.h.b16 %v665
        %v1656 = vunpack.c.l.b16 %v666
        %v1657 = vunpack.c.h.b16 %v666
        %v1658 = vunpack.c.l.b16 %v667
        %v1659 = vunpack.c.h.b16 %v667
        %v1660 = vunpack.c.l.b16 %v668
        %v1661 = vunpack.c.h.b16 %v668
        %v1662 = vunpack.c.l.b16 %v669
        %v1663 = vunpack.c.h.b16 %v669
        %v1664 = vunpack.c.l.b16 %v670
        %v1665 = vunpack.c.h.b16 %v670
        %v1666 = vunpack.c.l.b16 %v671
        %v1667 = vunpack.c.h.b16 %v671
        %v1668 = vunpack.c.l.b16 %v672
        %v1669 = vunpack.c.h.b16 %v672
        %v1670 = vunpack.c.l.b16 %v673
        %v1671 = vunpack.c.h.b16 %v673
        %v1672 = vunpack.c.l.b16 %v674
        %v1673 = vunpack.c.h.b16 %v674
        %v1674 = vunpack.c.l.b16 %v675
        %v1675 = vunpack.c.h.b16 %v675
        %v1676 = vunpack.c.l.b16 %v676
        %v1677 = vunpack.c.h.b16 %v676
        %v1678 = vunpack.c.l.b16 %v677
        %v1679 = vunpack.c.h.b16 %v677
        %v1680 = vunpack.c.l.b16 %v678
        %v1681 = vunpack.c.h.b16 %v678
        %v1682 = vunpack.c.l.b16 %v679
        %v1683 = vunpack.c.h.b16 %v679
        %v1684 = vunpack.c.l.b16 %v680
        %v1685 = vunpack.c.h.b16 %v680
        %v1686 = vpack.c.b16 %v1054, %v1046
        %v1687 = vpack.c.b16 %v1055, %v1047
        %v1688 = vpack.c.b16 %v1056, %v1048
        %v1689 = vpack.c.b16 %v1057, %v1049
        %v1690 = vpack.c.b16 %v1058, %v1050
        %v1691 = vpack.c.b16 %v1059, %v1051
        %v1692 = vpack.c.b16 %v1060, %v1052
        %v1693 = vpack.c.b16 %v1061, %v1053
        %v1694 = vpack.c.b16 %v1070, %v1062
        %v1695 = vpack.c.b16 %v1071, %v1063
        %v1696 = vpack.c.b16 %v1072, %v1064
        %v1697 = vpack.c.b16 %v1073, %v1065
        %v1698 = vpack.c.b16 %v1074, %v1066
        %v1699 = vpack.c.b16 %v1075, %v1067
        %v1700 = vpack.c.b16 %v1076, %v1068
        %v1701 = vpack.c.b16 %v1077, %v1069
        %v1702 = vpack.c.b16 %v1086, %v1078
        %v1703 = vpack.c.b16 %v1087, %v1079
        %v1704 = vpack.c.b16 %v1088, %v1080
        %v1705 = vpack.c.b16 %v1089, %v1081
        %v1706 = vpack.c.b16 %v1090, %v1082
        %v1707 = vpack.c.b16 %v1091, %v1083
        %v1708 = vpack.c.b16 %v1092, %v1084
        %v1709 = vpack.c.b16 %v1093, %v1085
        %v1710 = vpack.c.b16 %v1102, %v1094
        %v1711 = vpack.c.b16 %v1103, %v1095
        %v1712 = vpack.c.b16 %v1104, %v1096
        %v1713 = vpack.c.b16 %v1105, %v1097
        %v1714 = vpack.c.b16 %v1106, %v1098
        %v1715 = vpack.c.b16 %v1107, %v1099
        %v1716 = vpack.c.b16 %v1108, %v1100
        %v1717 = vpack.c.b16 %v1109, %v1101
        %v1718 = vpack.c.b16 %v1118, %v1110
        %v1719 = vpack.c.b16 %v1119, %v1111
        %v1720 = vpack.c.b16 %v1120, %v1112
        %v1721 = vpack.c.b16 %v1121, %v1113
        %v1722 = vpack.c.b16 %v1122, %v1114
        %v1723 = vpack.c.b16 %v1123, %v1115
        %v1724 = vpack.c.b16 %v1124, %v1116
        %v1725 = vpack.c.b16 %v1125, %v1117
        %v1726 = vpack.c.b16 %v1134, %v1126
        %v1727 = vpack.c.b16 %v1135, %v1127
        %v1728 = vpack.c.b16 %v1136, %v1128
        %v1729 = vpack.c.b16 %v1137, %v1129
        %v1730 = vpack.c.b16 %v1138, %v1130
        %v1731 = vpack.c.b16 %v1139, %v1131
        %v1732 = vpack.c.b16 %v1140, %v1132
        %v1733 = vpack.c.b16 %v1141, %v1133
        %v1734 = vpack.c.b16 %v1150, %v1142
        %v1735 = vpack.c.b16 %v1151, %v1143
        %v1736 = vpack.c.b16 %v1152, %v1144
        %v1737 = vpack.c.b16 %v1153, %v1145
        %v1738 = vpack.c.b16 %v1154, %v1146
        %v1739 = vpack.c.b16 %v1155, %v1147
        %v1740 = vpack.c.b16 %v1156, %v1148
        %v1741 = vpack.c.b16 %v1157, %v1149
        %v1742 = vpack.c.b16 %v1166, %v1158
        %v1743 = vpack.c.b16 %v1167, %v1159
        %v1744 = vpack.c.b16 %v1168, %v1160
        %v1745 = vpack.c.b16 %v1169, %v1161
        %v1746 = vpack.c.b16 %v1170, %v1162
        %v1747 = vpack.c.b16 %v1171, %v1163
        %v1748 = vpack.c.b16 %v1172, %v1164
        %v1749 = vpack.c.b16 %v1173, %v1165
        %v1750 = vpack.c.b16 %v1182, %v1174
        %v1751 = vpack.c.b16 %v1183, %v1175
        %v1752 = vpack.c.b16 %v1184, %v1176
        %v1753 = vpack.c.b16 %v1185, %v1177
        %v1754 = vpack.c.b16 %v1186, %v1178
        %v1755 = vpack.c.b16 %v1187, %v1179
        %v1756 = vpack.c.b16 %v1188, %v1180
        %v1757 = vpack.c.b16 %v1189, %v1181
        %v1758 = vpack.c.b16 %v1198, %v1190
        %v1759 = vpack.c.b16 %v1199, %v1191
        %v1760 = vpack.c.b16 %v1200, %v1192
        %v1761 = vpack.c.b16 %v1201, %v1193
        %v1762 = vpack.c.b16 %v1202, %v1194
        %v1763 = vpack.c.b16 %v1203, %v1195
        %v1764 = vpack.c.b16 %v1204, %v1196
        %v1765 = vpack.c.b16 %v1205, %v1197
        %v1766 = vpack.c.b16 %v1214, %v1206
        %v1767 = vpack.c.b16 %v1215, %v1207
        %v1768 = vpack.c.b16 %v1216, %v1208
        %v1769 = vpack.c.b16 %v1217, %v1209
        %v1770 = vpack.c.b16 %v1218, %v1210
        %v1771 = vpack.c.b16 %v1219, %v1211
        %v1772 = vpack.c.b16 %v1220, %v1212
        %v1773 = vpack.c.b16 %v1221, %v1213
        %v1774 = vpack.c.b16 %v1230, %v1222
        %v1775 = vpack.c.b16 %v1231, %v1223
        %v1776 = vpack.c.b16 %v1232, %v1224
        %v1777 = vpack.c.b16 %v1233, %v1225
        %v1778 = vpack.c.b16 %v1234, %v1226
        %v1779 = vpack.c.b16 %v1235, %v1227
        %v1780 = vpack.c.b16 %v1236, %v1228
        %v1781 = vpack.c.b16 %v1237, %v1229
        %v1782 = vpack.c.b16 %v1246, %v1238
        %v1783 = vpack.c.b16 %v1247, %v1239
        %v1784 = vpack.c.b16 %v1248, %v1240
        %v1785 = vpack.c.b16 %v1249, %v1241
        %v1786 = vpack.c.b16 %v1250, %v1242
        %v1787 = vpack.c.b16 %v1251, %v1243
        %v1788 = vpack.c.b16 %v1252, %v1244
        %v1789 = vpack.c.b16 %v1253, %v1245
        %v1790 = vpack.c.b16 %v1262, %v1254
        %v1791 = vpack.c.b16 %v1263, %v1255
        %v1792 = vpack.c.b16 %v1264, %v1256
        %v1793 = vpack.c.b16 %v1265, %v1257
        %v1794 = vpack.c.b16 %v1266, %v1258
        %v1795 = vpack.c.b16 %v1267, %v1259
        %v1796 = vpack.c.b16 %v1268, %v1260
        %v1797 = vpack.c.b16 %v1269, %v1261
        %v1798 = vpack.c.b16 %v1278, %v1270
        %v1799 = vpack.c.b16 %v1279, %v1271
        %v1800 = vpack.c.b16 %v1280, %v1272
        %v1801 = vpack.c.b16 %v1281, %v1273
        %v1802 = vpack.c.b16 %v1282, %v1274
        %v1803 = vpack.c.b16 %v1283, %v1275
        %v1804 = vpack.c.b16 %v1284, %v1276
        %v1805 = vpack.c.b16 %v1285, %v1277
        %v1806 = vpack.c.b16 %v1294, %v1286
        %v1807 = vpack.c.b16 %v1295, %v1287
        %v1808 = vpack.c.b16 %v1296, %v1288
        %v1809 = vpack.c.b16 %v1297, %v1289
        %v1810 = vpack.c.b16 %v1298, %v1290
        %v1811 = vpack.c.b16 %v1299, %v1291
        %v1812 = vpack.c.b16 %v1300, %v1292
        %v1813 = vpack.c.b16 %v1301, %v1293
        %v1814 = vpack.c.b16 %v1310, %v1302
        %v1815 = vpack.c.b16 %v1311, %v1303
        %v1816 = vpack.c.b16 %v1312, %v1304
        %v1817 = vpack.c.b16 %v1313, %v1305
        %v1818 = vpack.c.b16 %v1314, %v1306
        %v1819 = vpack.c.b16 %v1315, %v1307
        %v1820 = vpack.c.b16 %v1316, %v1308
        %v1821 = vpack.c.b16 %v1317, %v1309
        %v1822 = vpack.c.b16 %v1326, %v1318
        %v1823 = vpack.c.b16 %v1327, %v1319
        %v1824 = vpack.c.b16 %v1328, %v1320
        %v1825 = vpack.c.b16 %v1329, %v1321
        %v1826 = vpack.c.b16 %v1330, %v1322
        %v1827 = vpack.c.b16 %v1331, %v1323
        %v1828 = vpack.c.b16 %v1332, %v1324
        %v1829 = vpack.c.b16 %v1333, %v1325
        %v1830 = vpack.c.b16 %v1342, %v1334
        %v1831 = vpack.c.b16 %v1343, %v1335
        %v1832 = vpack.c.b16 %v1344, %v1336
        %v1833 = vpack.c.b16 %v1345, %v1337
        %v1834 = vpack.c.b16 %v1346, %v1338
        %v1835 = vpack.c.b16 %v1347, %v1339
        %v1836 = vpack.c.b16 %v1348, %v1340
        %v1837 = vpack.c.b16 %v1349, %v1341
        %v1838 = vpack.c.b16 %v1358, %v1350
        %v1839 = vpack.c.b16 %v1359, %v1351
        %v1840 = vpack.c.b16 %v1360, %v1352
        %v1841 = vpack.c.b16 %v1361, %v1353
        %v1842 = vpack.c.b16 %v1362, %v1354
        %v1843 = vpack.c.b16 %v1363, %v1355
        %v1844 = vpack.c.b16 %v1364, %v1356
        %v1845 = vpack.c.b16 %v1365, %v1357
        %v1846 = vpack.c.b16 %v1374, %v1366
        %v1847 = vpack.c.b16 %v1375, %v1367
        %v1848 = vpack.c.b16 %v1376, %v1368
        %v1849 = vpack.c.b16 %v1377, %v1369
        %v1850 = vpack.c.b16 %v1378, %v1370
        %v1851 = vpack.c.b16 %v1379, %v1371
        %v1852 = vpack.c.b16 %v1380, %v1372
        %v1853 = vpack.c.b16 %v1381, %v1373
        %v1854 = vpack.c.b16 %v1390, %v1382
        %v1855 = vpack.c.b16 %v1391, %v1383
        %v1856 = vpack.c.b16 %v1392, %v1384
        %v1857 = vpack.c.b16 %v1393, %v1385
        %v1858 = vpack.c.b16 %v1394, %v1386
        %v1859 = vpack.c.b16 %v1395, %v1387
        %v1860 = vpack.c.b16 %v1396, %v1388
        %v1861 = vpack.c.b16 %v1397, %v1389
        %v1862 = vpack.c.b16 %v1406, %v1398
        %v1863 = vpack.c.b16 %v1407, %v1399
        %v1864 = vpack.c.b16 %v1408, %v1400
        %v1865 = vpack.c.b16 %v1409, %v1401
        %v1866 = vpack.c.b16 %v1410, %v1402
        %v1867 = vpack.c.b16 %v1411, %v1403
        %v1868 = vpack.c.b16 %v1412, %v1404
        %v1869 = vpack.c.b16 %v1413, %v1405
        %v1870 = vpack.c.b16 %v1422, %v1414
        %v1871 = vpack.c.b16 %v1423, %v1415
        %v1872 = vpack.c.b16 %v1424, %v1416
        %v1873 = vpack.c.b16 %v1425, %v1417
        %v1874 = vpack.c.b16 %v1426, %v1418
        %v1875 = vpack.c.b16 %v1427, %v1419
        %v1876 = vpack.c.b16 %v1428, %v1420
        %v1877 = vpack.c.b16 %v1429, %v1421
        %v1878 = vpack.c.b16 %v1438, %v1430
        %v1879 = vpack.c.b16 %v1439, %v1431
        %v1880 = vpack.c.b16 %v1440, %v1432
        %v1881 = vpack.c.b16 %v1441, %v1433
        %v1882 = vpack.c.b16 %v1442, %v1434
        %v1883 = vpack.c.b16 %v1443, %v1435
        %v1884 = vpack.c.b16 %v1444, %v1436
        %v1885 = vpack.c.b16 %v1445, %v1437
        %v1886 = vpack.c.b16 %v1454, %v1446
        %v1887 = vpack.c.b16 %v1455, %v1447
        %v1888 = vpack.c.b16 %v1456, %v1448
        %v1889 = vpack.c.b16 %v1457, %v1449
        %v1890 = vpack.c.b16 %v1458, %v1450
        %v1891 = vpack.c.b16 %v1459, %v1451
        %v1892 = vpack.c.b16 %v1460, %v1452
        %v1893 = vpack.c.b16 %v1461, %v1453
        %v1894 = vpack.c.b16 %v1470, %v1462
        %v1895 = vpack.c.b16 %v1471, %v1463
        %v1896 = vpack.c.b16 %v1472, %v1464
        %v1897 = vpack.c.b16 %v1473, %v1465
        %v1898 = vpack.c.b16 %v1474, %v1466
        %v1899 = vpack.c.b16 %v1475, %v1467
        %v1900 = vpack.c.b16 %v1476, %v1468
        %v1901 = vpack.c.b16 %v1477, %v1469
        %v1902 = vpack.c.b16 %v1486, %v1478
        %v1903 = vpack.c.b16 %v1487, %v1479
        %v1904 = vpack.c.b16 %v1488, %v1480
        %v1905 = vpack.c.b16 %v1489, %v1481
        %v1906 = vpack.c.b16 %v1490, %v1482
        %v1907 = vpack.c.b16 %v1491, %v1483
        %v1908 = vpack.c.b16 %v1492, %v1484
        %v1909 = vpack.c.b16 %v1493, %v1485
        %v1910 = vpack.c.b16 %v1502, %v1494
        %v1911 = vpack.c.b16 %v1503, %v1495
        %v1912 = vpack.c.b16 %v1504, %v1496
        %v1913 = vpack.c.b16 %v1505, %v1497
        %v1914 = vpack.c.b16 %v1506, %v1498
        %v1915 = vpack.c.b16 %v1507, %v1499
        %v1916 = vpack.c.b16 %v1508, %v1500
        %v1917 = vpack.c.b16 %v1509, %v1501
        %v1918 = vpack.c.b16 %v1518, %v1510
        %v1919 = vpack.c.b16 %v1519, %v1511
        %v1920 = vpack.c.b16 %v1520, %v1512
        %v1921 = vpack.c.b16 %v1521, %v1513
        %v1922 = vpack.c.b16 %v1522, %v1514
        %v1923 = vpack.c.b16 %v1523, %v1515
        %v1924 = vpack.c.b16 %v1524, %v1516
        %v1925 = vpack.c.b16 %v1525, %v1517
        %v1926 = vpack.c.b16 %v1534, %v1526
        %v1927 = vpack.c.b16 %v1535, %v1527
        %v1928 = vpack.c.b16 %v1536, %v1528
        %v1929 = vpack.c.b16 %v1537, %v1529
        %v1930 = vpack.c.b16 %v1538, %v1530
        %v1931 = vpack.c.b16 %v1539, %v1531
        %v1932 = vpack.c.b16 %v1540, %v1532
        %v1933 = vpack.c.b16 %v1541, %v1533
        %v1934 = vpack.c.b16 %v1550, %v1542
        %v1935 = vpack.c.b16 %v1551, %v1543
        %v1936 = vpack.c.b16 %v1552, %v1544
        %v1937 = vpack.c.b16 %v1553, %v1545
        %v1938 = vpack.c.b16 %v1554, %v1546
        %v1939 = vpack.c.b16 %v1555, %v1547
        %v1940 = vpack.c.b16 %v1556, %v1548
        %v1941 = vpack.c.b16 %v1557, %v1549
        %v1942 = vpack.c.b16 %v1566, %v1558
        %v1943 = vpack.c.b16 %v1567, %v1559
        %v1944 = vpack.c.b16 %v1568, %v1560
        %v1945 = vpack.c.b16 %v1569, %v1561
        %v1946 = vpack.c.b16 %v1570, %v1562
        %v1947 = vpack.c.b16 %v1571, %v1563
        %v1948 = vpack.c.b16 %v1572, %v1564
        %v1949 = vpack.c.b16 %v1573, %v1565
        %v1950 = vpack.c.b16 %v1582, %v1574
        %v1951 = vpack.c.b16 %v1583, %v1575
        %v1952 = vpack.c.b16 %v1584, %v1576
        %v1953 = vpack.c.b16 %v1585, %v1577
        %v1954 = vpack.c.b16 %v1586, %v1578
        %v1955 = vpack.c.b16 %v1587, %v1579
        %v1956 = vpack.c.b16 %v1588, %v1580
        %v1957 = vpack.c.b16 %v1589, %v1581
        %v1958 = vpack.c.b16 %v1598, %v1590
        %v1959 = vpack.c.b16 %v1599, %v1591
        %v1960 = vpack.c.b16 %v1600, %v1592
        %v1961 = vpack.c.b16 %v1601, %v1593
        %v1962 = vpack.c.b16 %v1602, %v1594
        %v1963 = vpack.c.b16 %v1603, %v1595
        %v1964 = vpack.c.b16 %v1604, %v1596
        %v1965 = vpack.c.b16 %v1605, %v1597
        %v1966 = vpack.c.b16 %v1614, %v1606
        %v1967 = vpack.c.b16 %v1615, %v1607
        %v1968 = vpack.c.b16 %v1616, %v1608
        %v1969 = vpack.c.b16 %v1617, %v1609
        %v1970 = vpack.c.b16 %v1618, %v1610
        %v1971 = vpack.c.b16 %v1619, %v1611
        %v1972 = vpack.c.b16 %v1620, %v1612
        %v1973 = vpack.c.b16 %v1621, %v1613
        %v1974 = vpack.c.b16 %v1630, %v1622
        %v1975 = vpack.c.b16 %v1631, %v1623
        %v1976 = vpack.c.b16 %v1632, %v1624
        %v1977 = vpack.c.b16 %v1633, %v1625
        %v1978 = vpack.c.b16 %v1634, %v1626
        %v1979 = vpack.c.b16 %v1635, %v1627
        %v1980 = vpack.c.b16 %v1636, %v1628
        %v1981 = vpack.c.b16 %v1637, %v1629
        %v1982 = vpack.c.b16 %v1646, %v1638
        %v1983 = vpack.c.b16 %v1647, %v1639
        %v1984 = vpack.c.b16 %v1648, %v1640
        %v1985 = vpack.c.b16 %v1649, %v1641
        %v1986 = vpack.c.b16 %v1650, %v1642
        %v1987 = vpack.c.b16 %v1651, %v1643
        %v1988 = vpack.c.b16 %v1652, %v1644
        %v1989 = vpack.c.b16 %v1653, %v1645
        %v1990 = vpack.c.b16 %v1662, %v1654
        %v1991 = vpack.c.b16 %v1663, %v1655
        %v1992 = vpack.c.b16 %v1664, %v1656
        %v1993 = vpack.c.b16 %v1665, %v1657
        %v1994 = vpack.c.b16 %v1666, %v1658
        %v1995 = vpack.c.b16 %v1667, %v1659
        %v1996 = vpack.c.b16 %v1668, %v1660
        %v1997 = vpack.c.b16 %v1669, %v1661
        %v1998 = vpack.c.b16 %v1678, %v1670
        %v1999 = vpack.c.b16 %v1679, %v1671
        %v2000 = vpack.c.b16 %v1680, %v1672
        %v2001 = vpack.c.b16 %v1681, %v1673
        %v2002 = vpack.c.b16 %v1682, %v1674
        %v2003 = vpack.c.b16 %v1683, %v1675
        %v2004 = vpack.c.b16 %v1684, %v1676
        %v2005 = vpack.c.b16 %v1685, %v1677
        %2326 = vmatprep.subr.bf16.mxu0 %v1687
        %2327 = vmatpush1.bf16.msra.mxu0 %v1686
        %2328 = vmatprep.subr.bf16.mxu0 %v1695
        %2329 = vmatpush1.bf16.msra.mxu0 %v1694
        %2330 = vmatprep.subr.bf16.mxu0 %v1703
        %2331 = vmatpush1.bf16.msra.mxu0 %v1702
        %2332 = vmatprep.subr.bf16.mxu0 %v1711
        %2333 = vmatpush1.bf16.msra.mxu0 %v1710
        %2334 = vmatprep.subr.bf16.mxu0 %v1719
        %2335 = vmatpush1.bf16.msra.mxu0 %v1718
        %2336 = vmatprep.subr.bf16.mxu0 %v1727
        %2337 = vmatpush1.bf16.msra.mxu0 %v1726
        %2338 = vmatprep.subr.bf16.mxu0 %v1735
        %2339 = vmatpush1.bf16.msra.mxu0 %v1734
        %2340 = vmatprep.subr.bf16.mxu0 %v1743
        %2341 = vmatpush1.bf16.msra.mxu0 %v1742
        %2342 = vmatprep.subr.bf16.mxu0 %v1751
        %2343 = vmatpush1.bf16.msra.mxu0 %v1750
        %2344 = vmatprep.subr.bf16.mxu0 %v1759
        %2345 = vmatpush1.bf16.msra.mxu0 %v1758
        %2346 = vmatprep.subr.bf16.mxu0 %v1767
        %2347 = vmatpush1.bf16.msra.mxu0 %v1766
        %2348 = vmatprep.subr.bf16.mxu0 %v1775
        %2349 = vmatpush1.bf16.msra.mxu0 %v1774
        %2350 = vmatprep.subr.bf16.mxu0 %v1783
        %2351 = vmatpush1.bf16.msra.mxu0 %v1782
        %2352 = vmatprep.subr.bf16.mxu0 %v1791
        %2353 = vmatpush1.bf16.msra.mxu0 %v1790
        %2354 = vmatprep.subr.bf16.mxu0 %v1799
        %2355 = vmatpush1.bf16.msra.mxu0 %v1798
        %2356 = vmatprep.subr.bf16.mxu0 %v1807
        %2357 = vmatpush1.bf16.msra.mxu0 %v1806
        %2358 = vmatprep.mubr.bf16.mxu0 %v718
        %2359 = vmatmul.mubr.bf16.gmra.mrb[0].mxu0 %v704
        %v2360 = vpop.f32.mrb[0].mxu0
        %v2361 = vadd.f32 0.0, %v2360
        %v2362 = vpop.f32.mrb[0].mxu0
        %v2363 = vadd.f32 0.0, %v2362
        %v2364 = vpop.f32.mrb[0].mxu0
        %v2365 = vpop.f32.mrb[0].mxu0
        %2366 = vdwg.mxu0
        %2367 = vmatprep.subr.bf16.mxu0 %v1815
        %2368 = vmatpush1.bf16.msra.mxu0 %v1814
        %2369 = vmatprep.subr.bf16.mxu0 %v1823
        %2370 = vmatpush1.bf16.msra.mxu0 %v1822
        %2371 = vmatprep.subr.bf16.mxu0 %v1831
        %2372 = vmatpush1.bf16.msra.mxu0 %v1830
        %2373 = vmatprep.subr.bf16.mxu0 %v1839
        %2374 = vmatpush1.bf16.msra.mxu0 %v1838
        %2375 = vmatprep.subr.bf16.mxu0 %v1847
        %2376 = vmatpush1.bf16.msra.mxu0 %v1846
        %2377 = vmatprep.subr.bf16.mxu0 %v1855
        %2378 = vmatpush1.bf16.msra.mxu0 %v1854
        %2379 = vmatprep.subr.bf16.mxu0 %v1863
        %2380 = vmatpush1.bf16.msra.mxu0 %v1862
        %2381 = vmatprep.subr.bf16.mxu0 %v1871
        %2382 = vmatpush1.bf16.msra.mxu0 %v1870
        %2383 = vmatprep.subr.bf16.mxu0 %v1879
        %2384 = vmatpush1.bf16.msra.mxu0 %v1878
        %2385 = vmatprep.subr.bf16.mxu0 %v1887
        %2386 = vmatpush1.bf16.msra.mxu0 %v1886
        %2387 = vmatprep.subr.bf16.mxu0 %v1895
        %2388 = vmatpush1.bf16.msra.mxu0 %v1894
        %2389 = vmatprep.subr.bf16.mxu0 %v1903
        %2390 = vmatpush1.bf16.msra.mxu0 %v1902
        %2391 = vmatprep.subr.bf16.mxu0 %v1911
        %2392 = vmatpush1.bf16.msra.mxu0 %v1910
        %2393 = vmatprep.subr.bf16.mxu0 %v1919
        %2394 = vmatpush1.bf16.msra.mxu0 %v1918
        %2395 = vmatprep.subr.bf16.mxu0 %v1927
        %2396 = vmatpush1.bf16.msra.mxu0 %v1926
        %2397 = vmatprep.subr.bf16.mxu0 %v1935
        %2398 = vmatpush1.bf16.msra.mxu0 %v1934
        %2399 = vmatprep.mubr.bf16.mxu0 %v720
        %2400 = vmatmul.mubr.bf16.gmra.mrb[0].mxu0 %v719
        %v2401 = vpop.f32.mrb[0].mxu0
        %v2402 = vadd.f32 %v2361, %v2401
        %v2403 = vpop.f32.mrb[0].mxu0
        %v2404 = vadd.f32 %v2363, %v2403
        %v2405 = vpop.f32.mrb[0].mxu0
        %v2406 = vpop.f32.mrb[0].mxu0
        %2407 = vdwg.mxu0
        %2408 = vmatprep.subr.bf16.mxu0 %v1943
        %2409 = vmatpush1.bf16.msra.mxu0 %v1942
        %2410 = vmatprep.subr.bf16.mxu0 %v1951
        %2411 = vmatpush1.bf16.msra.mxu0 %v1950
        %2412 = vmatprep.subr.bf16.mxu0 %v1959
        %2413 = vmatpush1.bf16.msra.mxu0 %v1958
        %2414 = vmatprep.subr.bf16.mxu0 %v1967
        %2415 = vmatpush1.bf16.msra.mxu0 %v1966
        %2416 = vmatprep.subr.bf16.mxu0 %v1975
        %2417 = vmatpush1.bf16.msra.mxu0 %v1974
        %2418 = vmatprep.subr.bf16.mxu0 %v1983
        %2419 = vmatpush1.bf16.msra.mxu0 %v1982
        %2420 = vmatprep.subr.bf16.mxu0 %v1991
        %2421 = vmatpush1.bf16.msra.mxu0 %v1990
        %2422 = vmatprep.subr.bf16.mxu0 %v1999
        %2423 = vmatpush1.bf16.msra.mxu0 %v1998
        %2424 = vmatprep.subr.bf16.mxu0 0
        %2425 = vmatpush1.bf16.msra.mxu0 0
        %2426 = vmatprep.subr.bf16.mxu0 0
        %2427 = vmatpush1.bf16.msra.mxu0 0
        %2428 = vmatprep.subr.bf16.mxu0 0
        %2429 = vmatpush1.bf16.msra.mxu0 0
        %2430 = vmatprep.subr.bf16.mxu0 0
        %2431 = vmatpush1.bf16.msra.mxu0 0
        %2432 = vmatprep.subr.bf16.mxu0 0
        %2433 = vmatpush1.bf16.msra.mxu0 0
        %2434 = vmatprep.subr.bf16.mxu0 0
        %2435 = vmatpush1.bf16.msra.mxu0 0
        %2436 = vmatprep.subr.bf16.mxu0 0
        %2437 = vmatpush1.bf16.msra.mxu0 0
        %2438 = vmatprep.subr.bf16.mxu0 0
        %2439 = vmatpush1.bf16.msra.mxu0 0
        %2440 = vmatprep.mubr.bf16.mxu0 0
        %2441 = vmatmul.mubr.bf16.gmra.mrb[0].mxu0 %v711
        %v2442 = vpop.f32.mrb[0].mxu0
        %v2443 = vadd.f32 %v2402, %v2442
        %v2444 = vpop.f32.mrb[0].mxu0
        %v2445 = vadd.f32 %v2404, %v2444
        %v2446 = vpop.f32.mrb[0].mxu0
        %v2447 = vpop.f32.mrb[0].mxu0
        %2448 = vdwg.mxu0
        %2449 = vmatprep.subr.bf16.mxu0 %v1689
        %2450 = vmatpush1.bf16.msra.mxu0 %v1688
        %2451 = vmatprep.subr.bf16.mxu0 %v1697
        %2452 = vmatpush1.bf16.msra.mxu0 %v1696
        %2453 = vmatprep.subr.bf16.mxu0 %v1705
        %2454 = vmatpush1.bf16.msra.mxu0 %v1704
        %2455 = vmatprep.subr.bf16.mxu0 %v1713
        %2456 = vmatpush1.bf16.msra.mxu0 %v1712
        %2457 = vmatprep.subr.bf16.mxu0 %v1721
        %2458 = vmatpush1.bf16.msra.mxu0 %v1720
        %2459 = vmatprep.subr.bf16.mxu0 %v1729
        %2460 = vmatpush1.bf16.msra.mxu0 %v1728
        %2461 = vmatprep.subr.bf16.mxu0 %v1737
        %2462 = vmatpush1.bf16.msra.mxu0 %v1736
        %2463 = vmatprep.subr.bf16.mxu0 %v1745
        %2464 = vmatpush1.bf16.msra.mxu0 %v1744
        %2465 = vmatprep.subr.bf16.mxu0 %v1753
        %2466 = vmatpush1.bf16.msra.mxu0 %v1752
        %2467 = vmatprep.subr.bf16.mxu0 %v1761
        %2468 = vmatpush1.bf16.msra.mxu0 %v1760
        %2469 = vmatprep.subr.bf16.mxu0 %v1769
        %2470 = vmatpush1.bf16.msra.mxu0 %v1768
        %2471 = vmatprep.subr.bf16.mxu0 %v1777
        %2472 = vmatpush1.bf16.msra.mxu0 %v1776
        %2473 = vmatprep.subr.bf16.mxu0 %v1785
        %2474 = vmatpush1.bf16.msra.mxu0 %v1784
        %2475 = vmatprep.subr.bf16.mxu0 %v1793
        %2476 = vmatpush1.bf16.msra.mxu0 %v1792
        %2477 = vmatprep.subr.bf16.mxu0 %v1801
        %2478 = vmatpush1.bf16.msra.mxu0 %v1800
        %2479 = vmatprep.subr.bf16.mxu0 %v1809
        %2480 = vmatpush1.bf16.msra.mxu0 %v1808
        %2481 = vmatprep.mubr.bf16.mxu0 %v718
        %2482 = vmatmul.mubr.bf16.gmra.mrb[0].mxu0 %v704
        %v2483 = vpop.f32.mrb[0].mxu0
        %v2484 = vadd.f32 0.0, %v2483
        %v2485 = vpop.f32.mrb[0].mxu0
        %v2486 = vadd.f32 0.0, %v2485
        %v2487 = vpop.f32.mrb[0].mxu0
        %v2488 = vpop.f32.mrb[0].mxu0
        %2489 = vdwg.mxu0
        %2490 = vmatprep.subr.bf16.mxu0 %v1817
        %2491 = vmatpush1.bf16.msra.mxu0 %v1816
        %2492 = vmatprep.subr.bf16.mxu0 %v1825
        %2493 = vmatpush1.bf16.msra.mxu0 %v1824
        %2494 = vmatprep.subr.bf16.mxu0 %v1833
        %2495 = vmatpush1.bf16.msra.mxu0 %v1832
        %2496 = vmatprep.subr.bf16.mxu0 %v1841
        %2497 = vmatpush1.bf16.msra.mxu0 %v1840
        %2498 = vmatprep.subr.bf16.mxu0 %v1849
        %2499 = vmatpush1.bf16.msra.mxu0 %v1848
        %2500 = vmatprep.subr.bf16.mxu0 %v1857
        %2501 = vmatpush1.bf16.msra.mxu0 %v1856
        %2502 = vmatprep.subr.bf16.mxu0 %v1865
        %2503 = vmatpush1.bf16.msra.mxu0 %v1864
        %2504 = vmatprep.subr.bf16.mxu0 %v1873
        %2505 = vmatpush1.bf16.msra.mxu0 %v1872
        %2506 = vmatprep.subr.bf16.mxu0 %v1881
        %2507 = vmatpush1.bf16.msra.mxu0 %v1880
        %2508 = vmatprep.subr.bf16.mxu0 %v1889
        %2509 = vmatpush1.bf16.msra.mxu0 %v1888
        %2510 = vmatprep.subr.bf16.mxu0 %v1897
        %2511 = vmatpush1.bf16.msra.mxu0 %v1896
        %2512 = vmatprep.subr.bf16.mxu0 %v1905
        %2513 = vmatpush1.bf16.msra.mxu0 %v1904
        %2514 = vmatprep.subr.bf16.mxu0 %v1913
        %2515 = vmatpush1.bf16.msra.mxu0 %v1912
        %2516 = vmatprep.subr.bf16.mxu0 %v1921
        %2517 = vmatpush1.bf16.msra.mxu0 %v1920
        %2518 = vmatprep.subr.bf16.mxu0 %v1929
        %2519 = vmatpush1.bf16.msra.mxu0 %v1928
        %2520 = vmatprep.subr.bf16.mxu0 %v1937
        %2521 = vmatpush1.bf16.msra.mxu0 %v1936
        %2522 = vmatprep.mubr.bf16.mxu0 %v720
        %2523 = vmatmul.mubr.bf16.gmra.mrb[0].mxu0 %v719
        %v2524 = vpop.f32.mrb[0].mxu0
        %v2525 = vadd.f32 %v2484, %v2524
        %v2526 = vpop.f32.mrb[0].mxu0
        %v2527 = vadd.f32 %v2486, %v2526
        %v2528 = vpop.f32.mrb[0].mxu0
        %v2529 = vpop.f32.mrb[0].mxu0
        %2530 = vdwg.mxu0
        %2531 = vmatprep.subr.bf16.mxu0 %v1945
        %2532 = vmatpush1.bf16.msra.mxu0 %v1944
        %2533 = vmatprep.subr.bf16.mxu0 %v1953
        %2534 = vmatpush1.bf16.msra.mxu0 %v1952
        %2535 = vmatprep.subr.bf16.mxu0 %v1961
        %2536 = vmatpush1.bf16.msra.mxu0 %v1960
        %2537 = vmatprep.subr.bf16.mxu0 %v1969
        %2538 = vmatpush1.bf16.msra.mxu0 %v1968
        %2539 = vmatprep.subr.bf16.mxu0 %v1977
        %2540 = vmatpush1.bf16.msra.mxu0 %v1976
        %2541 = vmatprep.subr.bf16.mxu0 %v1985
        %2542 = vmatpush1.bf16.msra.mxu0 %v1984
        %2543 = vmatprep.subr.bf16.mxu0 %v1993
        %2544 = vmatpush1.bf16.msra.mxu0 %v1992
        %2545 = vmatprep.subr.bf16.mxu0 %v2001
        %2546 = vmatpush1.bf16.msra.mxu0 %v2000
        %2547 = vmatprep.subr.bf16.mxu0 0
        %2548 = vmatpush1.bf16.msra.mxu0 0
        %2549 = vmatprep.subr.bf16.mxu0 0
        %2550 = vmatpush1.bf16.msra.mxu0 0
        %2551 = vmatprep.subr.bf16.mxu0 0
        %2552 = vmatpush1.bf16.msra.mxu0 0
        %2553 = vmatprep.subr.bf16.mxu0 0
        %2554 = vmatpush1.bf16.msra.mxu0 0
        %2555 = vmatprep.subr.bf16.mxu0 0
        %2556 = vmatpush1.bf16.msra.mxu0 0
        %2557 = vmatprep.subr.bf16.mxu0 0
        %2558 = vmatpush1.bf16.msra.mxu0 0
        %2559 = vmatprep.subr.bf16.mxu0 0
        %2560 = vmatpush1.bf16.msra.mxu0 0
        %2561 = vmatprep.subr.bf16.mxu0 0
        %2562 = vmatpush1.bf16.msra.mxu0 0
        %2563 = vmatprep.mubr.bf16.mxu0 0
        %2564 = vmatmul.mubr.bf16.gmra.mrb[0].mxu0 %v711
        %v2565 = vpop.f32.mrb[0].mxu0
        %v2566 = vadd.f32 %v2525, %v2565
        %v2567 = vpop.f32.mrb[0].mxu0
        %v2568 = vadd.f32 %v2527, %v2567
        %v2569 = vpop.f32.mrb[0].mxu0
        %v2570 = vpop.f32.mrb[0].mxu0
        %2571 = vdwg.mxu0
        %2572 = vmatprep.subr.bf16.mxu0 %v1691
        %2573 = vmatpush1.bf16.msra.mxu0 %v1690
        %2574 = vmatprep.subr.bf16.mxu0 %v1699
        %2575 = vmatpush1.bf16.msra.mxu0 %v1698
        %2576 = vmatprep.subr.bf16.mxu0 %v1707
        %2577 = vmatpush1.bf16.msra.mxu0 %v1706
        %2578 = vmatprep.subr.bf16.mxu0 %v1715
        %2579 = vmatpush1.bf16.msra.mxu0 %v1714
        %2580 = vmatprep.subr.bf16.mxu0 %v1723
        %2581 = vmatpush1.bf16.msra.mxu0 %v1722
        %2582 = vmatprep.subr.bf16.mxu0 %v1731
        %2583 = vmatpush1.bf16.msra.mxu0 %v1730
        %2584 = vmatprep.subr.bf16.mxu0 %v1739
        %2585 = vmatpush1.bf16.msra.mxu0 %v1738
        %2586 = vmatprep.subr.bf16.mxu0 %v1747
        %2587 = vmatpush1.bf16.msra.mxu0 %v1746
        %2588 = vmatprep.subr.bf16.mxu0 %v1755
        %2589 = vmatpush1.bf16.msra.mxu0 %v1754
        %2590 = vmatprep.subr.bf16.mxu0 %v1763
        %2591 = vmatpush1.bf16.msra.mxu0 %v1762
        %2592 = vmatprep.subr.bf16.mxu0 %v1771
        %2593 = vmatpush1.bf16.msra.mxu0 %v1770
        %2594 = vmatprep.subr.bf16.mxu0 %v1779
        %2595 = vmatpush1.bf16.msra.mxu0 %v1778
        %2596 = vmatprep.subr.bf16.mxu0 %v1787
        %2597 = vmatpush1.bf16.msra.mxu0 %v1786
        %2598 = vmatprep.subr.bf16.mxu0 %v1795
        %2599 = vmatpush1.bf16.msra.mxu0 %v1794
        %2600 = vmatprep.subr.bf16.mxu0 %v1803
        %2601 = vmatpush1.bf16.msra.mxu0 %v1802
        %2602 = vmatprep.subr.bf16.mxu0 %v1811
        %2603 = vmatpush1.bf16.msra.mxu0 %v1810
        %2604 = vmatprep.mubr.bf16.mxu0 %v718
        %2605 = vmatmul.mubr.bf16.gmra.mrb[0].mxu0 %v704
        %v2606 = vpop.f32.mrb[0].mxu0
        %v2607 = vadd.f32 0.0, %v2606
        %v2608 = vpop.f32.mrb[0].mxu0
        %v2609 = vadd.f32 0.0, %v2608
        %v2610 = vpop.f32.mrb[0].mxu0
        %v2611 = vpop.f32.mrb[0].mxu0
        %2612 = vdwg.mxu0
        %2613 = vmatprep.subr.bf16.mxu0 %v1819
        %2614 = vmatpush1.bf16.msra.mxu0 %v1818
        %2615 = vmatprep.subr.bf16.mxu0 %v1827
        %2616 = vmatpush1.bf16.msra.mxu0 %v1826
        %2617 = vmatprep.subr.bf16.mxu0 %v1835
        %2618 = vmatpush1.bf16.msra.mxu0 %v1834
        %2619 = vmatprep.subr.bf16.mxu0 %v1843
        %2620 = vmatpush1.bf16.msra.mxu0 %v1842
        %2621 = vmatprep.subr.bf16.mxu0 %v1851
        %2622 = vmatpush1.bf16.msra.mxu0 %v1850
        %2623 = vmatprep.subr.bf16.mxu0 %v1859
        %2624 = vmatpush1.bf16.msra.mxu0 %v1858
        %2625 = vmatprep.subr.bf16.mxu0 %v1867
        %2626 = vmatpush1.bf16.msra.mxu0 %v1866
        %2627 = vmatprep.subr.bf16.mxu0 %v1875
        %2628 = vmatpush1.bf16.msra.mxu0 %v1874
        %2629 = vmatprep.subr.bf16.mxu0 %v1883
        %2630 = vmatpush1.bf16.msra.mxu0 %v1882
        %2631 = vmatprep.subr.bf16.mxu0 %v1891
        %2632 = vmatpush1.bf16.msra.mxu0 %v1890
        %2633 = vmatprep.subr.bf16.mxu0 %v1899
        %2634 = vmatpush1.bf16.msra.mxu0 %v1898
        %2635 = vmatprep.subr.bf16.mxu0 %v1907
        %2636 = vmatpush1.bf16.msra.mxu0 %v1906
        %2637 = vmatprep.subr.bf16.mxu0 %v1915
        %2638 = vmatpush1.bf16.msra.mxu0 %v1914
        %2639 = vmatprep.subr.bf16.mxu0 %v1923
        %2640 = vmatpush1.bf16.msra.mxu0 %v1922
        %2641 = vmatprep.subr.bf16.mxu0 %v1931
        %2642 = vmatpush1.bf16.msra.mxu0 %v1930
        %2643 = vmatprep.subr.bf16.mxu0 %v1939
        %2644 = vmatpush1.bf16.msra.mxu0 %v1938
        %2645 = vmatprep.mubr.bf16.mxu0 %v720
        %2646 = vmatmul.mubr.bf16.gmra.mrb[0].mxu0 %v719
        %v2647 = vpop.f32.mrb[0].mxu0
        %v2648 = vadd.f32 %v2607, %v2647
        %v2649 = vpop.f32.mrb[0].mxu0
        %v2650 = vadd.f32 %v2609, %v2649
        %v2651 = vpop.f32.mrb[0].mxu0
        %v2652 = vpop.f32.mrb[0].mxu0
        %2653 = vdwg.mxu0
        %2654 = vmatprep.subr.bf16.mxu0 %v1947
        %2655 = vmatpush1.bf16.msra.mxu0 %v1946
        %2656 = vmatprep.subr.bf16.mxu0 %v1955
        %2657 = vmatpush1.bf16.msra.mxu0 %v1954
        %2658 = vmatprep.subr.bf16.mxu0 %v1963
        %2659 = vmatpush1.bf16.msra.mxu0 %v1962
        %2660 = vmatprep.subr.bf16.mxu0 %v1971
        %2661 = vmatpush1.bf16.msra.mxu0 %v1970
        %2662 = vmatprep.subr.bf16.mxu0 %v1979
        %2663 = vmatpush1.bf16.msra.mxu0 %v1978
        %2664 = vmatprep.subr.bf16.mxu0 %v1987
        %2665 = vmatpush1.bf16.msra.mxu0 %v1986
        %2666 = vmatprep.subr.bf16.mxu0 %v1995
        %2667 = vmatpush1.bf16.msra.mxu0 %v1994
        %2668 = vmatprep.subr.bf16.mxu0 %v2003
        %2669 = vmatpush1.bf16.msra.mxu0 %v2002
        %2670 = vmatprep.subr.bf16.mxu0 0
        %2671 = vmatpush1.bf16.msra.mxu0 0
        %2672 = vmatprep.subr.bf16.mxu0 0
        %2673 = vmatpush1.bf16.msra.mxu0 0
        %2674 = vmatprep.subr.bf16.mxu0 0
        %2675 = vmatpush1.bf16.msra.mxu0 0
        %2676 = vmatprep.subr.bf16.mxu0 0
        %2677 = vmatpush1.bf16.msra.mxu0 0
        %2678 = vmatprep.subr.bf16.mxu0 0
        %2679 = vmatpush1.bf16.msra.mxu0 0
        %2680 = vmatprep.subr.bf16.mxu0 0
        %2681 = vmatpush1.bf16.msra.mxu0 0
        %2682 = vmatprep.subr.bf16.mxu0 0
        %2683 = vmatpush1.bf16.msra.mxu0 0
        %2684 = vmatprep.subr.bf16.mxu0 0
        %2685 = vmatpush1.bf16.msra.mxu0 0
        %2686 = vmatprep.mubr.bf16.mxu0 0
        %2687 = vmatmul.mubr.bf16.gmra.mrb[0].mxu0 %v711
        %v2688 = vpop.f32.mrb[0].mxu0
        %v2689 = vadd.f32 %v2648, %v2688
        %v2690 = vpop.f32.mrb[0].mxu0
        %v2691 = vadd.f32 %v2650, %v2690
        %v2692 = vpop.f32.mrb[0].mxu0
        %v2693 = vpop.f32.mrb[0].mxu0
        %2694 = vdwg.mxu0
        %2695 = vmatprep.subr.bf16.mxu0 %v1693
        %2696 = vmatpush1.bf16.msra.mxu0 %v1692
        %2697 = vmatprep.subr.bf16.mxu0 %v1701
        %2698 = vmatpush1.bf16.msra.mxu0 %v1700
        %2699 = vmatprep.subr.bf16.mxu0 %v1709
        %2700 = vmatpush1.bf16.msra.mxu0 %v1708
        %2701 = vmatprep.subr.bf16.mxu0 %v1717
        %2702 = vmatpush1.bf16.msra.mxu0 %v1716
        %2703 = vmatprep.subr.bf16.mxu0 %v1725
        %2704 = vmatpush1.bf16.msra.mxu0 %v1724
        %2705 = vmatprep.subr.bf16.mxu0 %v1733
        %2706 = vmatpush1.bf16.msra.mxu0 %v1732
        %2707 = vmatprep.subr.bf16.mxu0 %v1741
        %2708 = vmatpush1.bf16.msra.mxu0 %v1740
        %2709 = vmatprep.subr.bf16.mxu0 %v1749
        %2710 = vmatpush1.bf16.msra.mxu0 %v1748
        %2711 = vmatprep.subr.bf16.mxu0 %v1757
        %2712 = vmatpush1.bf16.msra.mxu0 %v1756
        %2713 = vmatprep.subr.bf16.mxu0 %v1765
        %2714 = vmatpush1.bf16.msra.mxu0 %v1764
        %2715 = vmatprep.subr.bf16.mxu0 %v1773
        %2716 = vmatpush1.bf16.msra.mxu0 %v1772
        %2717 = vmatprep.subr.bf16.mxu0 %v1781
        %2718 = vmatpush1.bf16.msra.mxu0 %v1780
        %2719 = vmatprep.subr.bf16.mxu0 %v1789
        %2720 = vmatpush1.bf16.msra.mxu0 %v1788
        %2721 = vmatprep.subr.bf16.mxu0 %v1797
        %2722 = vmatpush1.bf16.msra.mxu0 %v1796
        %2723 = vmatprep.subr.bf16.mxu0 %v1805
        %2724 = vmatpush1.bf16.msra.mxu0 %v1804
        %2725 = vmatprep.subr.bf16.mxu0 %v1813
        %2726 = vmatpush1.bf16.msra.mxu0 %v1812
        %2727 = vmatprep.mubr.bf16.mxu0 %v718
        %2728 = vmatmul.mubr.bf16.gmra.mrb[0].mxu0 %v704
        %v2729 = vpop.f32.mrb[0].mxu0
        %v2730 = vadd.f32 0.0, %v2729
        %v2731 = vpop.f32.mrb[0].mxu0
        %v2732 = vadd.f32 0.0, %v2731
        %v2733 = vpop.f32.mrb[0].mxu0
        %v2734 = vpop.f32.mrb[0].mxu0
        %2735 = vdwg.mxu0
        %2736 = vmatprep.subr.bf16.mxu0 %v1821
        %2737 = vmatpush1.bf16.msra.mxu0 %v1820
        %2738 = vmatprep.subr.bf16.mxu0 %v1829
        %2739 = vmatpush1.bf16.msra.mxu0 %v1828
        %2740 = vmatprep.subr.bf16.mxu0 %v1837
        %2741 = vmatpush1.bf16.msra.mxu0 %v1836
        %2742 = vmatprep.subr.bf16.mxu0 %v1845
        %2743 = vmatpush1.bf16.msra.mxu0 %v1844
        %2744 = vmatprep.subr.bf16.mxu0 %v1853
        %2745 = vmatpush1.bf16.msra.mxu0 %v1852
        %2746 = vmatprep.subr.bf16.mxu0 %v1861
        %2747 = vmatpush1.bf16.msra.mxu0 %v1860
        %2748 = vmatprep.subr.bf16.mxu0 %v1869
        %2749 = vmatpush1.bf16.msra.mxu0 %v1868
        %2750 = vmatprep.subr.bf16.mxu0 %v1877
        %2751 = vmatpush1.bf16.msra.mxu0 %v1876
        %2752 = vmatprep.subr.bf16.mxu0 %v1885
        %2753 = vmatpush1.bf16.msra.mxu0 %v1884
        %2754 = vmatprep.subr.bf16.mxu0 %v1893
        %2755 = vmatpush1.bf16.msra.mxu0 %v1892
        %2756 = vmatprep.subr.bf16.mxu0 %v1901
        %2757 = vmatpush1.bf16.msra.mxu0 %v1900
        %2758 = vmatprep.subr.bf16.mxu0 %v1909
        %2759 = vmatpush1.bf16.msra.mxu0 %v1908
        %2760 = vmatprep.subr.bf16.mxu0 %v1917
        %2761 = vmatpush1.bf16.msra.mxu0 %v1916
        %2762 = vmatprep.subr.bf16.mxu0 %v1925
        %2763 = vmatpush1.bf16.msra.mxu0 %v1924
        %2764 = vmatprep.subr.bf16.mxu0 %v1933
        %2765 = vmatpush1.bf16.msra.mxu0 %v1932
        %2766 = vmatprep.subr.bf16.mxu0 %v1941
        %2767 = vmatpush1.bf16.msra.mxu0 %v1940
        %2768 = vmatprep.mubr.bf16.mxu0 %v720
        %2769 = vmatmul.mubr.bf16.gmra.mrb[0].mxu0 %v719
        %v2770 = vpop.f32.mrb[0].mxu0
        %v2771 = vadd.f32 %v2730, %v2770
        %v2772 = vpop.f32.mrb[0].mxu0
        %v2773 = vadd.f32 %v2732, %v2772
        %v2774 = vpop.f32.mrb[0].mxu0
        %v2775 = vpop.f32.mrb[0].mxu0
        %2776 = vdwg.mxu0
        %2777 = vmatprep.subr.bf16.mxu0 %v1949
        %2778 = vmatpush1.bf16.msra.mxu0 %v1948
        %2779 = vmatprep.subr.bf16.mxu0 %v1957
        %2780 = vmatpush1.bf16.msra.mxu0 %v1956
        %2781 = vmatprep.subr.bf16.mxu0 %v1965
        %2782 = vmatpush1.bf16.msra.mxu0 %v1964
        %2783 = vmatprep.subr.bf16.mxu0 %v1973
        %2784 = vmatpush1.bf16.msra.mxu0 %v1972
        %2785 = vmatprep.subr.bf16.mxu0 %v1981
        %2786 = vmatpush1.bf16.msra.mxu0 %v1980
        %2787 = vmatprep.subr.bf16.mxu0 %v1989
        %2788 = vmatpush1.bf16.msra.mxu0 %v1988
        %2789 = vmatprep.subr.bf16.mxu0 %v1997
        %2790 = vmatpush1.bf16.msra.mxu0 %v1996
        %2791 = vmatprep.subr.bf16.mxu0 %v2005
        %2792 = vmatpush1.bf16.msra.mxu0 %v2004
        %2793 = vmatprep.subr.bf16.mxu0 0
        %2794 = vmatpush1.bf16.msra.mxu0 0
        %2795 = vmatprep.subr.bf16.mxu0 0
        %2796 = vmatpush1.bf16.msra.mxu0 0
        %2797 = vmatprep.subr.bf16.mxu0 0
        %2798 = vmatpush1.bf16.msra.mxu0 0
        %2799 = vmatprep.subr.bf16.mxu0 0
        %2800 = vmatpush1.bf16.msra.mxu0 0
        %2801 = vmatprep.subr.bf16.mxu0 0
        %2802 = vmatpush1.bf16.msra.mxu0 0
        %2803 = vmatprep.subr.bf16.mxu0 0
        %2804 = vmatpush1.bf16.msra.mxu0 0
        %2805 = vmatprep.subr.bf16.mxu0 0
        %2806 = vmatpush1.bf16.msra.mxu0 0
        %2807 = vmatprep.subr.bf16.mxu0 0
        %2808 = vmatpush1.bf16.msra.mxu0 0
        %2809 = vmatprep.mubr.bf16.mxu0 0
        %2810 = vmatmul.mubr.bf16.gmra.mrb[0].mxu0 %v711
        %v2811 = vpop.f32.mrb[0].mxu0
        %v2812 = vadd.f32 %v2771, %v2811
        %v2813 = vpop.f32.mrb[0].mxu0
        %v2814 = vadd.f32 %v2773, %v2813
        %v2815 = vpop.f32.mrb[0].mxu0
        %v2816 = vpop.f32.mrb[0].mxu0
        %2817 = vdwg.mxu0
        %v2826 = vcombine.low %v2443, %v2445
        %v2827 = vcombine.low %v2566, %v2568
        %v2828 = vcombine.low %v2689, %v2691
        %v2829 = vcombine.low %v2812, %v2814
        %v2831 = vunpack.c.l.s4 1966171168
        %v2832 = vunpack.c.0.s8 %v2831
        %v2833 = vlaneseq
        %v2834 = vshrl.u32 %v2833, 7
        %v2835 = vsub.s32 %v2832, %v2834
        %v2836 = vrot.slane %v2826, %v2835
        %v2838 = vunpack.c.l.s4 1966171168
        %v2839 = vunpack.c.0.s8 %v2838
        %v2840 = vlaneseq
        %v2841 = vshrl.u32 %v2840, 7
        %v2842 = vsub.s32 %v2839, %v2841
        %v2843 = vrot.slane %v2827, %v2842
        %v2845 = vunpack.c.l.s4 1966171168
        %v2846 = vunpack.c.0.s8 %v2845
        %v2847 = vlaneseq
        %v2848 = vshrl.u32 %v2847, 7
        %v2849 = vsub.s32 %v2846, %v2848
        %v2850 = vrot.slane %v2828, %v2849
        %v2852 = vunpack.c.l.s4 1966171168
        %v2853 = vunpack.c.0.s8 %v2852
        %v2854 = vlaneseq
        %v2855 = vshrl.u32 %v2854, 7
        %v2856 = vsub.s32 %v2853, %v2855
        %v2857 = vrot.slane %v2829, %v2856
        %v2858 = vcombine.low %v2836, %v2843
        %v2859 = vcombine.low %v2850, %v2857
        %v2861 = vunpack.c.l.s4 1966171168
        %v2862 = vunpack.c.0.s8 %v2861
        %v2863 = vlaneseq
        %v2864 = vshrl.u32 %v2863, 7
        %v2865 = vsub.s32 %v2862, %v2864
        %v2866 = vrot.slane %v2858, %v2865
        %v2868 = vunpack.c.l.s4 1966171168
        %v2869 = vunpack.c.0.s8 %v2868
        %v2870 = vlaneseq
        %v2871 = vshrl.u32 %v2870, 7
        %v2872 = vsub.s32 %v2869, %v2871
        %v2873 = vrot.slane %v2859, %v2872
        %v2874 = vcombine.low %v2866, %v2873
        %v2876 = vadd.f32 %v359, %v2874
        %2877 = vst [vmem:[#allocation2] sm:$0xff] %v2876
        %p2878 = scmp.eq.s32.totalorder %s28, 3
        // Predicated region
        $region69: #{tpu_custom_call.1} parent=47 // pred_check
          %p2879 = pneg %p2878
        $region70: #{tpu_custom_call.1} parent=47 // pred_check_branch
          %2881 = sbr.rel (%p2879) target = $region72
        $region71: #{tpu_custom_call.1} parent=47 // pred_region
          %v2882 = vld [vmem:[#allocation2] sm:$0xff]
          %v2883 = vld [vmem:[#allocation9] sm:$0xff]
          %v2884 = vadd.f32 %v2882, %v2883
          %v2885 = vmax.f32 %v2884, 0.0
          %v2887 = vlaneseq
          %v2888 = vshrl.u32 %v2887, 7
          %v2889 = vsub.s32 0, %v2888
          %v2890 = vrot.slane %v2885, %v2889
          %v2891 = vlaneseq
          %v2892 = vshrl.u32 %v2891, 7
          %v2893 = vsub.s32 1, %v2892
          %v2894 = vrot.slane %v2885, %v2893
          %v2895 = vlaneseq
          %v2896 = vshrl.u32 %v2895, 7
          %v2897 = vsub.s32 2, %v2896
          %v2898 = vrot.slane %v2885, %v2897
          %v2899 = vlaneseq
          %v2900 = vshrl.u32 %v2899, 7
          %v2901 = vsub.s32 3, %v2900
          %v2902 = vrot.slane %v2885, %v2901
          %v2903 = vlaneseq
          %v2904 = vshrl.u32 %v2903, 7
          %v2905 = vsub.s32 4, %v2904
          %v2906 = vrot.slane %v2885, %v2905
          %v2907 = vlaneseq
          %v2908 = vshrl.u32 %v2907, 7
          %v2909 = vsub.s32 5, %v2908
          %v2910 = vrot.slane %v2885, %v2909
          %v2911 = vlaneseq
          %v2912 = vshrl.u32 %v2911, 7
          %v2913 = vsub.s32 6, %v2912
          %v2914 = vrot.slane %v2885, %v2913
          %v2915 = vlaneseq
          %v2916 = vshrl.u32 %v2915, 7
          %v2917 = vsub.s32 7, %v2916
          %v2918 = vrot.slane %v2885, %v2917
          %v2927 = vpack.c.bf16 %v2890, %v2890
          %v2928 = vpack.c.bf16 %v2894, %v2894
          %v2929 = vpack.c.bf16 %v2898, %v2898
          %v2930 = vpack.c.bf16 %v2902, %v2902
          %v2931 = vpack.c.bf16 %v2906, %v2906
          %v2932 = vpack.c.bf16 %v2910, %v2910
          %v2933 = vpack.c.bf16 %v2914, %v2914
          %v2934 = vpack.c.bf16 %v2918, %v2918
          %v2935 = vld [vmem:[%s3] sm:$0xf]
          %v2936 = vld [vmem:[%s3 + $0x4] sm:$0xf]
          %v2937 = vld [vmem:[%s3 + $0x8] sm:$0xf]
          %v2938 = vld [vmem:[%s3 + $0xc] sm:$0xf]
          %v2939 = vld [vmem:[%s3 + $0x10] sm:$0xf]
          %v2940 = vld [vmem:[%s3 + $0x14] sm:$0xf]
          %v2941 = vld [vmem:[%s3 + $0x18] sm:$0xf]
          %v2942 = vld [vmem:[%s3 + $0x1c] sm:$0xf]
          %v2943 = vld [vmem:[%s3 + $0x20] sm:$0xf]
          %v2944 = vld [vmem:[%s3 + $0x24] sm:$0xf]
          %v2945 = vld [vmem:[%s3 + $0x28] sm:$0xf]
          %v2946 = vld [vmem:[%s3 + $0x2c] sm:$0xf]
          %v2947 = vld [vmem:[%s3 + $0x30] sm:$0xf]
          %v2948 = vld [vmem:[%s3 + $0x34] sm:$0xf]
          %v2949 = vld [vmem:[%s3 + $0x38] sm:$0xf]
          %v2950 = vld [vmem:[%s3 + $0x3c] sm:$0xf]
          %v2951 = vld [vmem:[%s3 + $0x40] sm:$0xf]
          %v2952 = vld [vmem:[%s3 + $0x44] sm:$0xf]
          %v2953 = vld [vmem:[%s3 + $0x48] sm:$0xf]
          %v2954 = vld [vmem:[%s3 + $0x4c] sm:$0xf]
          %v2955 = vld [vmem:[%s3 + $0x50] sm:$0xf]
          %v2956 = vld [vmem:[%s3 + $0x54] sm:$0xf]
          %v2957 = vld [vmem:[%s3 + $0x58] sm:$0xf]
          %v2958 = vld [vmem:[%s3 + $0x5c] sm:$0xf]
          %v2959 = vld [vmem:[%s3 + $0x60] sm:$0xf]
          %v2960 = vld [vmem:[%s3 + $0x64] sm:$0xf]
          %v2961 = vld [vmem:[%s3 + $0x68] sm:$0xf]
          %v2962 = vld [vmem:[%s3 + $0x6c] sm:$0xf]
          %v2963 = vld [vmem:[%s3 + $0x70] sm:$0xf]
          %v2964 = vld [vmem:[%s3 + $0x74] sm:$0xf]
          %v2965 = vld [vmem:[%s3 + $0x78] sm:$0xf]
          %v2966 = vld [vmem:[%s3 + $0x7c] sm:$0xf]
          %v2967 = vld [vmem:[%s3 + $0x80] sm:$0xf]
          %v2968 = vld [vmem:[%s3 + $0x84] sm:$0xf]
          %v2969 = vld [vmem:[%s3 + $0x88] sm:$0xf]
          %v2970 = vld [vmem:[%s3 + $0x8c] sm:$0xf]
          %v2971 = vld [vmem:[%s3 + $0x90] sm:$0xf]
          %v2972 = vld [vmem:[%s3 + $0x94] sm:$0xf]
          %v2973 = vld [vmem:[%s3 + $0x98] sm:$0xf]
          %v2974 = vld [vmem:[%s3 + $0x9c] sm:$0xf]
          %v2975 = vld [vmem:[%s3 + $0xa0] sm:$0xf]
          %v2976 = vld [vmem:[%s3 + $0xa4] sm:$0xf]
          %v2977 = vld [vmem:[%s3 + $0xa8] sm:$0xf]
          %v2978 = vld [vmem:[%s3 + $0xac] sm:$0xf]
          %v2979 = vld [vmem:[%s3 + $0xb0] sm:$0xf]
          %v2980 = vld [vmem:[%s3 + $0xb4] sm:$0xf]
          %v2981 = vld [vmem:[%s3 + $0xb8] sm:$0xf]
          %v2982 = vld [vmem:[%s3 + $0xbc] sm:$0xf]
          %v2983 = vld [vmem:[%s3 + $0xc0] sm:$0xf]
          %v2984 = vld [vmem:[%s3 + $0xc4] sm:$0xf]
          %v2985 = vld [vmem:[%s3 + $0xc8] sm:$0xf]
          %v2986 = vld [vmem:[%s3 + $0xcc] sm:$0xf]
          %v2987 = vld [vmem:[%s3 + $0xd0] sm:$0xf]
          %v2988 = vld [vmem:[%s3 + $0xd4] sm:$0xf]
          %v2989 = vld [vmem:[%s3 + $0xd8] sm:$0xf]
          %v2990 = vld [vmem:[%s3 + $0xdc] sm:$0xf]
          %v2991 = vld [vmem:[%s3 + $0xe0] sm:$0xf]
          %v2992 = vld [vmem:[%s3 + $0xe4] sm:$0xf]
          %v2993 = vld [vmem:[%s3 + $0xe8] sm:$0xf]
          %v2994 = vld [vmem:[%s3 + $0xec] sm:$0xf]
          %v2995 = vld [vmem:[%s3 + $0xf0] sm:$0xf]
          %v2996 = vld [vmem:[%s3 + $0xf4] sm:$0xf]
          %v2997 = vld [vmem:[%s3 + $0xf8] sm:$0xf]
          %v2998 = vld [vmem:[%s3 + $0xfc] sm:$0xf]
          %v2999 = vld [vmem:[%s3 + $0x100] sm:$0xf]
          %v3000 = vld [vmem:[%s3 + $0x104] sm:$0xf]
          %v3001 = vld [vmem:[%s3 + $0x108] sm:$0xf]
          %v3002 = vld [vmem:[%s3 + $0x10c] sm:$0xf]
          %v3003 = vld [vmem:[%s3 + $0x110] sm:$0xf]
          %v3004 = vld [vmem:[%s3 + $0x114] sm:$0xf]
          %v3005 = vld [vmem:[%s3 + $0x118] sm:$0xf]
          %v3006 = vld [vmem:[%s3 + $0x11c] sm:$0xf]
          %v3007 = vld [vmem:[%s3 + $0x120] sm:$0xf]
          %v3008 = vld [vmem:[%s3 + $0x124] sm:$0xf]
          %v3009 = vld [vmem:[%s3 + $0x128] sm:$0xf]
          %v3010 = vld [vmem:[%s3 + $0x12c] sm:$0xf]
          %v3011 = vld [vmem:[%s3 + $0x130] sm:$0xf]
          %v3012 = vld [vmem:[%s3 + $0x134] sm:$0xf]
          %v3013 = vld [vmem:[%s3 + $0x138] sm:$0xf]
          %v3014 = vld [vmem:[%s3 + $0x13c] sm:$0xf]
          %v3015 = vld [vmem:[%s3 + $0x140] sm:$0xf]
          %v3016 = vld [vmem:[%s3 + $0x144] sm:$0xf]
          %v3017 = vld [vmem:[%s3 + $0x148] sm:$0xf]
          %v3018 = vld [vmem:[%s3 + $0x14c] sm:$0xf]
          %v3019 = vld [vmem:[%s3 + $0x150] sm:$0xf]
          %v3020 = vld [vmem:[%s3 + $0x154] sm:$0xf]
          %v3021 = vld [vmem:[%s3 + $0x158] sm:$0xf]
          %v3022 = vld [vmem:[%s3 + $0x15c] sm:$0xf]
          %v3023 = vld [vmem:[%s3 + $0x160] sm:$0xf]
          %v3024 = vld [vmem:[%s3 + $0x164] sm:$0xf]
          %v3025 = vld [vmem:[%s3 + $0x168] sm:$0xf]
          %v3026 = vld [vmem:[%s3 + $0x16c] sm:$0xf]
          %v3027 = vld [vmem:[%s3 + $0x170] sm:$0xf]
          %v3028 = vld [vmem:[%s3 + $0x174] sm:$0xf]
          %v3029 = vld [vmem:[%s3 + $0x178] sm:$0xf]
          %v3030 = vld [vmem:[%s3 + $0x17c] sm:$0xf]
          %v3031 = vld [vmem:[%s3 + $0x180] sm:$0xf]
          %v3032 = vld [vmem:[%s3 + $0x184] sm:$0xf]
          %v3033 = vld [vmem:[%s3 + $0x188] sm:$0xf]
          %v3034 = vld [vmem:[%s3 + $0x18c] sm:$0xf]
          %v3035 = vld [vmem:[%s3 + $0x190] sm:$0xf]
          %v3036 = vld [vmem:[%s3 + $0x194] sm:$0xf]
          %v3037 = vld [vmem:[%s3 + $0x198] sm:$0xf]
          %v3038 = vld [vmem:[%s3 + $0x19c] sm:$0xf]
          %v3039 = vld [vmem:[%s3 + $0x1a0] sm:$0xf]
          %v3040 = vld [vmem:[%s3 + $0x1a4] sm:$0xf]
          %v3041 = vld [vmem:[%s3 + $0x1a8] sm:$0xf]
          %v3042 = vld [vmem:[%s3 + $0x1ac] sm:$0xf]
          %v3043 = vld [vmem:[%s3 + $0x1b0] sm:$0xf]
          %v3044 = vld [vmem:[%s3 + $0x1b4] sm:$0xf]
          %v3045 = vld [vmem:[%s3 + $0x1b8] sm:$0xf]
          %v3046 = vld [vmem:[%s3 + $0x1bc] sm:$0xf]
          %v3047 = vld [vmem:[%s3 + $0x1c0] sm:$0xf]
          %v3048 = vld [vmem:[%s3 + $0x1c4] sm:$0xf]
          %v3049 = vld [vmem:[%s3 + $0x1c8] sm:$0xf]
          %v3050 = vld [vmem:[%s3 + $0x1cc] sm:$0xf]
          %v3051 = vld [vmem:[%s3 + $0x1d0] sm:$0xf]
          %v3052 = vld [vmem:[%s3 + $0x1d4] sm:$0xf]
          %v3053 = vld [vmem:[%s3 + $0x1d8] sm:$0xf]
          %v3054 = vld [vmem:[%s3 + $0x1dc] sm:$0xf]
          %v3055 = vld [vmem:[%s3 + $0x1e0] sm:$0xf]
          %v3056 = vld [vmem:[%s3 + $0x1e4] sm:$0xf]
          %v3057 = vld [vmem:[%s3 + $0x1e8] sm:$0xf]
          %v3058 = vld [vmem:[%s3 + $0x1ec] sm:$0xf]
          %v3059 = vld [vmem:[%s3 + $0x1f0] sm:$0xf]
          %v3060 = vld [vmem:[%s3 + $0x1f4] sm:$0xf]
          %v3061 = vld [vmem:[%s3 + $0x1f8] sm:$0xf]
          %v3062 = vld [vmem:[%s3 + $0x1fc] sm:$0xf]
          %v3063 = vld [vmem:[#allocation10] sm:$0x1]
          %v3192 = vunpack.c.l.b16 %v2935
          %v3193 = vunpack.c.l.b16 %v2936
          %v3194 = vunpack.c.l.b16 %v2937
          %v3195 = vunpack.c.l.b16 %v2938
          %v3196 = vunpack.c.l.b16 %v2939
          %v3197 = vunpack.c.l.b16 %v2940
          %v3198 = vunpack.c.l.b16 %v2941
          %v3199 = vunpack.c.l.b16 %v2942
          %v3200 = vunpack.c.l.b16 %v2943
          %v3201 = vunpack.c.l.b16 %v2944
          %v3202 = vunpack.c.l.b16 %v2945
          %v3203 = vunpack.c.l.b16 %v2946
          %v3204 = vunpack.c.l.b16 %v2947
          %v3205 = vunpack.c.l.b16 %v2948
          %v3206 = vunpack.c.l.b16 %v2949
          %v3207 = vunpack.c.l.b16 %v2950
          %v3208 = vunpack.c.l.b16 %v2951
          %v3209 = vunpack.c.l.b16 %v2952
          %v3210 = vunpack.c.l.b16 %v2953
          %v3211 = vunpack.c.l.b16 %v2954
          %v3212 = vunpack.c.l.b16 %v2955
          %v3213 = vunpack.c.l.b16 %v2956
          %v3214 = vunpack.c.l.b16 %v2957
          %v3215 = vunpack.c.l.b16 %v2958
          %v3216 = vunpack.c.l.b16 %v2959
          %v3217 = vunpack.c.l.b16 %v2960
          %v3218 = vunpack.c.l.b16 %v2961
          %v3219 = vunpack.c.l.b16 %v2962
          %v3220 = vunpack.c.l.b16 %v2963
          %v3221 = vunpack.c.l.b16 %v2964
          %v3222 = vunpack.c.l.b16 %v2965
          %v3223 = vunpack.c.l.b16 %v2966
          %v3224 = vunpack.c.l.b16 %v2967
          %v3225 = vunpack.c.l.b16 %v2968
          %v3226 = vunpack.c.l.b16 %v2969
          %v3227 = vunpack.c.l.b16 %v2970
          %v3228 = vunpack.c.l.b16 %v2971
          %v3229 = vunpack.c.l.b16 %v2972
          %v3230 = vunpack.c.l.b16 %v2973
          %v3231 = vunpack.c.l.b16 %v2974
          %v3232 = vunpack.c.l.b16 %v2975
          %v3233 = vunpack.c.l.b16 %v2976
          %v3234 = vunpack.c.l.b16 %v2977
          %v3235 = vunpack.c.l.b16 %v2978
          %v3236 = vunpack.c.l.b16 %v2979
          %v3237 = vunpack.c.l.b16 %v2980
          %v3238 = vunpack.c.l.b16 %v2981
          %v3239 = vunpack.c.l.b16 %v2982
          %v3240 = vunpack.c.l.b16 %v2983
          %v3241 = vunpack.c.l.b16 %v2984
          %v3242 = vunpack.c.l.b16 %v2985
          %v3243 = vunpack.c.l.b16 %v2986
          %v3244 = vunpack.c.l.b16 %v2987
          %v3245 = vunpack.c.l.b16 %v2988
          %v3246 = vunpack.c.l.b16 %v2989
          %v3247 = vunpack.c.l.b16 %v2990
          %v3248 = vunpack.c.l.b16 %v2991
          %v3249 = vunpack.c.l.b16 %v2992
          %v3250 = vunpack.c.l.b16 %v2993
          %v3251 = vunpack.c.l.b16 %v2994
          %v3252 = vunpack.c.l.b16 %v2995
          %v3253 = vunpack.c.l.b16 %v2996
          %v3254 = vunpack.c.l.b16 %v2997
          %v3255 = vunpack.c.l.b16 %v2998
          %v3256 = vunpack.c.l.b16 %v2999
          %v3257 = vunpack.c.l.b16 %v3000
          %v3258 = vunpack.c.l.b16 %v3001
          %v3259 = vunpack.c.l.b16 %v3002
          %v3260 = vunpack.c.l.b16 %v3003
          %v3261 = vunpack.c.l.b16 %v3004
          %v3262 = vunpack.c.l.b16 %v3005
          %v3263 = vunpack.c.l.b16 %v3006
          %v3264 = vunpack.c.l.b16 %v3007
          %v3265 = vunpack.c.l.b16 %v3008
          %v3266 = vunpack.c.l.b16 %v3009
          %v3267 = vunpack.c.l.b16 %v3010
          %v3268 = vunpack.c.l.b16 %v3011
          %v3269 = vunpack.c.l.b16 %v3012
          %v3270 = vunpack.c.l.b16 %v3013
          %v3271 = vunpack.c.l.b16 %v3014
          %v3272 = vunpack.c.l.b16 %v3015
          %v3273 = vunpack.c.l.b16 %v3016
          %v3274 = vunpack.c.l.b16 %v3017
          %v3275 = vunpack.c.l.b16 %v3018
          %v3276 = vunpack.c.l.b16 %v3019
          %v3277 = vunpack.c.l.b16 %v3020
          %v3278 = vunpack.c.l.b16 %v3021
          %v3279 = vunpack.c.l.b16 %v3022
          %v3280 = vunpack.c.l.b16 %v3023
          %v3281 = vunpack.c.l.b16 %v3024
          %v3282 = vunpack.c.l.b16 %v3025
          %v3283 = vunpack.c.l.b16 %v3026
          %v3284 = vunpack.c.l.b16 %v3027
          %v3285 = vunpack.c.l.b16 %v3028
          %v3286 = vunpack.c.l.b16 %v3029
          %v3287 = vunpack.c.l.b16 %v3030
          %v3288 = vunpack.c.l.b16 %v3031
          %v3289 = vunpack.c.l.b16 %v3032
          %v3290 = vunpack.c.l.b16 %v3033
          %v3291 = vunpack.c.l.b16 %v3034
          %v3292 = vunpack.c.l.b16 %v3035
          %v3293 = vunpack.c.l.b16 %v3036
          %v3294 = vunpack.c.l.b16 %v3037
          %v3295 = vunpack.c.l.b16 %v3038
          %v3296 = vunpack.c.l.b16 %v3039
          %v3297 = vunpack.c.l.b16 %v3040
          %v3298 = vunpack.c.l.b16 %v3041
          %v3299 = vunpack.c.l.b16 %v3042
          %v3300 = vunpack.c.l.b16 %v3043
          %v3301 = vunpack.c.l.b16 %v3044
          %v3302 = vunpack.c.l.b16 %v3045
          %v3303 = vunpack.c.l.b16 %v3046
          %v3304 = vunpack.c.l.b16 %v3047
          %v3305 = vunpack.c.l.b16 %v3048
          %v3306 = vunpack.c.l.b16 %v3049
          %v3307 = vunpack.c.l.b16 %v3050
          %v3308 = vunpack.c.l.b16 %v3051
          %v3309 = vunpack.c.l.b16 %v3052
          %v3310 = vunpack.c.l.b16 %v3053
          %v3311 = vunpack.c.l.b16 %v3054
          %v3312 = vunpack.c.l.b16 %v3055
          %v3313 = vunpack.c.l.b16 %v3056
          %v3314 = vunpack.c.l.b16 %v3057
          %v3315 = vunpack.c.l.b16 %v3058
          %v3316 = vunpack.c.l.b16 %v3059
          %v3317 = vunpack.c.l.b16 %v3060
          %v3318 = vunpack.c.l.b16 %v3061
          %v3319 = vunpack.c.l.b16 %v3062
          %v3320 = vpack.c.b16 %v3193, %v3192
          %v3321 = vpack.c.b16 %v3195, %v3194
          %v3322 = vpack.c.b16 %v3197, %v3196
          %v3323 = vpack.c.b16 %v3199, %v3198
          %v3324 = vpack.c.b16 %v3201, %v3200
          %v3325 = vpack.c.b16 %v3203, %v3202
          %v3326 = vpack.c.b16 %v3205, %v3204
          %v3327 = vpack.c.b16 %v3207, %v3206
          %v3328 = vpack.c.b16 %v3209, %v3208
          %v3329 = vpack.c.b16 %v3211, %v3210
          %v3330 = vpack.c.b16 %v3213, %v3212
          %v3331 = vpack.c.b16 %v3215, %v3214
          %v3332 = vpack.c.b16 %v3217, %v3216
          %v3333 = vpack.c.b16 %v3219, %v3218
          %v3334 = vpack.c.b16 %v3221, %v3220
          %v3335 = vpack.c.b16 %v3223, %v3222
          %v3336 = vpack.c.b16 %v3225, %v3224
          %v3337 = vpack.c.b16 %v3227, %v3226
          %v3338 = vpack.c.b16 %v3229, %v3228
          %v3339 = vpack.c.b16 %v3231, %v3230
          %v3340 = vpack.c.b16 %v3233, %v3232
          %v3341 = vpack.c.b16 %v3235, %v3234
          %v3342 = vpack.c.b16 %v3237, %v3236
          %v3343 = vpack.c.b16 %v3239, %v3238
          %v3344 = vpack.c.b16 %v3241, %v3240
          %v3345 = vpack.c.b16 %v3243, %v3242
          %v3346 = vpack.c.b16 %v3245, %v3244
          %v3347 = vpack.c.b16 %v3247, %v3246
          %v3348 = vpack.c.b16 %v3249, %v3248
          %v3349 = vpack.c.b16 %v3251, %v3250
          %v3350 = vpack.c.b16 %v3253, %v3252
          %v3351 = vpack.c.b16 %v3255, %v3254
          %v3352 = vpack.c.b16 %v3257, %v3256
          %v3353 = vpack.c.b16 %v3259, %v3258
          %v3354 = vpack.c.b16 %v3261, %v3260
          %v3355 = vpack.c.b16 %v3263, %v3262
          %v3356 = vpack.c.b16 %v3265, %v3264
          %v3357 = vpack.c.b16 %v3267, %v3266
          %v3358 = vpack.c.b16 %v3269, %v3268
          %v3359 = vpack.c.b16 %v3271, %v3270
          %v3360 = vpack.c.b16 %v3273, %v3272
          %v3361 = vpack.c.b16 %v3275, %v3274
          %v3362 = vpack.c.b16 %v3277, %v3276
          %v3363 = vpack.c.b16 %v3279, %v3278
          %v3364 = vpack.c.b16 %v3281, %v3280
          %v3365 = vpack.c.b16 %v3283, %v3282
          %v3366 = vpack.c.b16 %v3285, %v3284
          %v3367 = vpack.c.b16 %v3287, %v3286
          %v3368 = vpack.c.b16 %v3289, %v3288
          %v3369 = vpack.c.b16 %v3291, %v3290
          %v3370 = vpack.c.b16 %v3293, %v3292
          %v3371 = vpack.c.b16 %v3295, %v3294
          %v3372 = vpack.c.b16 %v3297, %v3296
          %v3373 = vpack.c.b16 %v3299, %v3298
          %v3374 = vpack.c.b16 %v3301, %v3300
          %v3375 = vpack.c.b16 %v3303, %v3302
          %v3376 = vpack.c.b16 %v3305, %v3304
          %v3377 = vpack.c.b16 %v3307, %v3306
          %v3378 = vpack.c.b16 %v3309, %v3308
          %v3379 = vpack.c.b16 %v3311, %v3310
          %v3380 = vpack.c.b16 %v3313, %v3312
          %v3381 = vpack.c.b16 %v3315, %v3314
          %v3382 = vpack.c.b16 %v3317, %v3316
          %v3383 = vpack.c.b16 %v3319, %v3318
          %3448 = vmatprep.subr.bf16.mxu0 0
          %3449 = vmatpush1.bf16.msra.mxu0 %v3320
          %3450 = vmatprep.subr.bf16.mxu0 0
          %3451 = vmatpush1.bf16.msra.mxu0 %v3321
          %3452 = vmatprep.subr.bf16.mxu0 0
          %3453 = vmatpush1.bf16.msra.mxu0 %v3322
          %3454 = vmatprep.subr.bf16.mxu0 0
          %3455 = vmatpush1.bf16.msra.mxu0 %v3323
          %3456 = vmatprep.subr.bf16.mxu0 0
          %3457 = vmatpush1.bf16.msra.mxu0 %v3324
          %3458 = vmatprep.subr.bf16.mxu0 0
          %3459 = vmatpush1.bf16.msra.mxu0 %v3325
          %3460 = vmatprep.subr.bf16.mxu0 0
          %3461 = vmatpush1.bf16.msra.mxu0 %v3326
          %3462 = vmatprep.subr.bf16.mxu0 0
          %3463 = vmatpush1.bf16.msra.mxu0 %v3327
          %3464 = vmatprep.subr.bf16.mxu0 0
          %3465 = vmatpush1.bf16.msra.mxu0 %v3328
          %3466 = vmatprep.subr.bf16.mxu0 0
          %3467 = vmatpush1.bf16.msra.mxu0 %v3329
          %3468 = vmatprep.subr.bf16.mxu0 0
          %3469 = vmatpush1.bf16.msra.mxu0 %v3330
          %3470 = vmatprep.subr.bf16.mxu0 0
          %3471 = vmatpush1.bf16.msra.mxu0 %v3331
          %3472 = vmatprep.subr.bf16.mxu0 0
          %3473 = vmatpush1.bf16.msra.mxu0 %v3332
          %3474 = vmatprep.subr.bf16.mxu0 0
          %3475 = vmatpush1.bf16.msra.mxu0 %v3333
          %3476 = vmatprep.subr.bf16.mxu0 0
          %3477 = vmatpush1.bf16.msra.mxu0 %v3334
          %3478 = vmatprep.subr.bf16.mxu0 0
          %3479 = vmatpush1.bf16.msra.mxu0 %v3335
          %3480 = vmatprep.mubr.bf16.mxu0 %v2928
          %3481 = vmatmul.mubr.bf16.gmra.mrb[0].mxu0 %v2927
          %v3482 = vpop.f32.mrb[0].mxu0
          %v3483 = vadd.f32 %v3063, %v3482
          %v3484 = vpop.f32.mrb[0].mxu0
          %v3485 = vpop.f32.mrb[0].mxu0
          %v3486 = vpop.f32.mrb[0].mxu0
          %3487 = vdwg.mxu0
          %3488 = vmatprep.subr.bf16.mxu0 0
          %3489 = vmatpush1.bf16.msra.mxu0 %v3336
          %3490 = vmatprep.subr.bf16.mxu0 0
          %3491 = vmatpush1.bf16.msra.mxu0 %v3337
          %3492 = vmatprep.subr.bf16.mxu0 0
          %3493 = vmatpush1.bf16.msra.mxu0 %v3338
          %3494 = vmatprep.subr.bf16.mxu0 0
          %3495 = vmatpush1.bf16.msra.mxu0 %v3339
          %3496 = vmatprep.subr.bf16.mxu0 0
          %3497 = vmatpush1.bf16.msra.mxu0 %v3340
          %3498 = vmatprep.subr.bf16.mxu0 0
          %3499 = vmatpush1.bf16.msra.mxu0 %v3341
          %3500 = vmatprep.subr.bf16.mxu0 0
          %3501 = vmatpush1.bf16.msra.mxu0 %v3342
          %3502 = vmatprep.subr.bf16.mxu0 0
          %3503 = vmatpush1.bf16.msra.mxu0 %v3343
          %3504 = vmatprep.subr.bf16.mxu0 0
          %3505 = vmatpush1.bf16.msra.mxu0 %v3344
          %3506 = vmatprep.subr.bf16.mxu0 0
          %3507 = vmatpush1.bf16.msra.mxu0 %v3345
          %3508 = vmatprep.subr.bf16.mxu0 0
          %3509 = vmatpush1.bf16.msra.mxu0 %v3346
          %3510 = vmatprep.subr.bf16.mxu0 0
          %3511 = vmatpush1.bf16.msra.mxu0 %v3347
          %3512 = vmatprep.subr.bf16.mxu0 0
          %3513 = vmatpush1.bf16.msra.mxu0 %v3348
          %3514 = vmatprep.subr.bf16.mxu0 0
          %3515 = vmatpush1.bf16.msra.mxu0 %v3349
          %3516 = vmatprep.subr.bf16.mxu0 0
          %3517 = vmatpush1.bf16.msra.mxu0 %v3350
          %3518 = vmatprep.subr.bf16.mxu0 0
          %3519 = vmatpush1.bf16.msra.mxu0 %v3351
          %3520 = vmatprep.mubr.bf16.mxu0 %v2930
          %3521 = vmatmul.mubr.bf16.gmra.mrb[0].mxu0 %v2929
          %v3522 = vpop.f32.mrb[0].mxu0
          %v3523 = vadd.f32 %v3483, %v3522
          %v3524 = vpop.f32.mrb[0].mxu0
          %v3525 = vpop.f32.mrb[0].mxu0
          %v3526 = vpop.f32.mrb[0].mxu0
          %3527 = vdwg.mxu0
          %3528 = vmatprep.subr.bf16.mxu0 0
          %3529 = vmatpush1.bf16.msra.mxu0 %v3352
          %3530 = vmatprep.subr.bf16.mxu0 0
          %3531 = vmatpush1.bf16.msra.mxu0 %v3353
          %3532 = vmatprep.subr.bf16.mxu0 0
          %3533 = vmatpush1.bf16.msra.mxu0 %v3354
          %3534 = vmatprep.subr.bf16.mxu0 0
          %3535 = vmatpush1.bf16.msra.mxu0 %v3355
          %3536 = vmatprep.subr.bf16.mxu0 0
          %3537 = vmatpush1.bf16.msra.mxu0 %v3356
          %3538 = vmatprep.subr.bf16.mxu0 0
          %3539 = vmatpush1.bf16.msra.mxu0 %v3357
          %3540 = vmatprep.subr.bf16.mxu0 0
          %3541 = vmatpush1.bf16.msra.mxu0 %v3358
          %3542 = vmatprep.subr.bf16.mxu0 0
          %3543 = vmatpush1.bf16.msra.mxu0 %v3359
          %3544 = vmatprep.subr.bf16.mxu0 0
          %3545 = vmatpush1.bf16.msra.mxu0 %v3360
          %3546 = vmatprep.subr.bf16.mxu0 0
          %3547 = vmatpush1.bf16.msra.mxu0 %v3361
          %3548 = vmatprep.subr.bf16.mxu0 0
          %3549 = vmatpush1.bf16.msra.mxu0 %v3362
          %3550 = vmatprep.subr.bf16.mxu0 0
          %3551 = vmatpush1.bf16.msra.mxu0 %v3363
          %3552 = vmatprep.subr.bf16.mxu0 0
          %3553 = vmatpush1.bf16.msra.mxu0 %v3364
          %3554 = vmatprep.subr.bf16.mxu0 0
          %3555 = vmatpush1.bf16.msra.mxu0 %v3365
          %3556 = vmatprep.subr.bf16.mxu0 0
          %3557 = vmatpush1.bf16.msra.mxu0 %v3366
          %3558 = vmatprep.subr.bf16.mxu0 0
          %3559 = vmatpush1.bf16.msra.mxu0 %v3367
          %3560 = vmatprep.mubr.bf16.mxu0 %v2932
          %3561 = vmatmul.mubr.bf16.gmra.mrb[0].mxu0 %v2931
          %v3562 = vpop.f32.mrb[0].mxu0
          %v3563 = vadd.f32 %v3523, %v3562
          %v3564 = vpop.f32.mrb[0].mxu0
          %v3565 = vpop.f32.mrb[0].mxu0
          %v3566 = vpop.f32.mrb[0].mxu0
          %3567 = vdwg.mxu0
          %3568 = vmatprep.subr.bf16.mxu0 0
          %3569 = vmatpush1.bf16.msra.mxu0 %v3368
          %3570 = vmatprep.subr.bf16.mxu0 0
          %3571 = vmatpush1.bf16.msra.mxu0 %v3369
          %3572 = vmatprep.subr.bf16.mxu0 0
          %3573 = vmatpush1.bf16.msra.mxu0 %v3370
          %3574 = vmatprep.subr.bf16.mxu0 0
          %3575 = vmatpush1.bf16.msra.mxu0 %v3371
          %3576 = vmatprep.subr.bf16.mxu0 0
          %3577 = vmatpush1.bf16.msra.mxu0 %v3372
          %3578 = vmatprep.subr.bf16.mxu0 0
          %3579 = vmatpush1.bf16.msra.mxu0 %v3373
          %3580 = vmatprep.subr.bf16.mxu0 0
          %3581 = vmatpush1.bf16.msra.mxu0 %v3374
          %3582 = vmatprep.subr.bf16.mxu0 0
          %3583 = vmatpush1.bf16.msra.mxu0 %v3375
          %3584 = vmatprep.subr.bf16.mxu0 0
          %3585 = vmatpush1.bf16.msra.mxu0 %v3376
          %3586 = vmatprep.subr.bf16.mxu0 0
          %3587 = vmatpush1.bf16.msra.mxu0 %v3377
          %3588 = vmatprep.subr.bf16.mxu0 0
          %3589 = vmatpush1.bf16.msra.mxu0 %v3378
          %3590 = vmatprep.subr.bf16.mxu0 0
          %3591 = vmatpush1.bf16.msra.mxu0 %v3379
          %3592 = vmatprep.subr.bf16.mxu0 0
          %3593 = vmatpush1.bf16.msra.mxu0 %v3380
          %3594 = vmatprep.subr.bf16.mxu0 0
          %3595 = vmatpush1.bf16.msra.mxu0 %v3381
          %3596 = vmatprep.subr.bf16.mxu0 0
          %3597 = vmatpush1.bf16.msra.mxu0 %v3382
          %3598 = vmatprep.subr.bf16.mxu0 0
          %3599 = vmatpush1.bf16.msra.mxu0 %v3383
          %3600 = vmatprep.mubr.bf16.mxu0 %v2934
          %3601 = vmatmul.mubr.bf16.gmra.mrb[0].mxu0 %v2933
          %v3602 = vpop.f32.mrb[0].mxu0
          %v3603 = vadd.f32 %v3563, %v3602
          %v3604 = vpop.f32.mrb[0].mxu0
          %v3605 = vpop.f32.mrb[0].mxu0
          %v3606 = vpop.f32.mrb[0].mxu0
          %3607 = vdwg.mxu0
          %v3608 = vmax.f32 %v3603, 0.0
          %v3609 = vld [vmem:[%s5] sm:$0xff]
          %v3610 = vld [vmem:[%s5 + $0x8] sm:$0x3]
          %v3611 = vld [vmem:[#allocation3] sm:$0x1]
          %vm3612 = vcmask 80896
          %v3614 = vsel %vm3612, %v3608, 0
          %vm3616 = vcmask 1041408
          %v3618 = vsel %vm3616, %v3610, 0
          %3620 = vmatprep.subr.mxu0 0.0
          %3621 = vmatpush1.msra.mxu0 %v3609
          %3622 = vmatprep.subr.mxu0 0.0
          %3623 = vmatpush1.msra.mxu0 %v3618
          %3624 = vmatprep.subr.mxu0 0.0
          %3625 = vmatpush1.msra.mxu0 0.0
          %3626 = vmatprep.subr.mxu0 0.0
          %3627 = vmatpush1.msra.mxu0 0.0
          %3628 = vmatprep.subr.mxu0 0.0
          %3629 = vmatpush1.msra.mxu0 0.0
          %3630 = vmatprep.subr.mxu0 0.0
          %3631 = vmatpush1.msra.mxu0 0.0
          %3632 = vmatprep.subr.mxu0 0.0
          %3633 = vmatpush1.msra.mxu0 0.0
          %3634 = vmatprep.subr.mxu0 0.0
          %3635 = vmatpush1.msra.mxu0 0.0
          %3636 = vmatprep.subr.mxu0 0.0
          %3637 = vmatpush1.msra.mxu0 0.0
          %3638 = vmatprep.subr.mxu0 0.0
          %3639 = vmatpush1.msra.mxu0 0.0
          %3640 = vmatprep.subr.mxu0 0.0
          %3641 = vmatpush1.msra.mxu0 0.0
          %3642 = vmatprep.subr.mxu0 0.0
          %3643 = vmatpush1.msra.mxu0 0.0
          %3644 = vmatprep.subr.mxu0 0.0
          %3645 = vmatpush1.msra.mxu0 0.0
          %3646 = vmatprep.subr.mxu0 0.0
          %3647 = vmatpush1.msra.mxu0 0.0
          %3648 = vmatprep.subr.mxu0 0.0
          %3649 = vmatpush1.msra.mxu0 0.0
          %3650 = vmatprep.subr.mxu0 0.0
          %3651 = vmatpush1.msra.mxu0 0.0
          %3652 = vmatprep.subr.mxu0 0.0
          %3653 = vmatpush1.msra.mxu0 0.0
          %3654 = vmatprep.subr.mxu0 0.0
          %3655 = vmatpush1.msra.mxu0 0.0
          %3656 = vmatprep.subr.mxu0 0.0
          %3657 = vmatpush1.msra.mxu0 0.0
          %3658 = vmatprep.subr.mxu0 0.0
          %3659 = vmatpush1.msra.mxu0 0.0
          %3660 = vmatprep.subr.mxu0 0.0
          %3661 = vmatpush1.msra.mxu0 0.0
          %3662 = vmatprep.subr.mxu0 0.0
          %3663 = vmatpush1.msra.mxu0 0.0
          %3664 = vmatprep.subr.mxu0 0.0
          %3665 = vmatpush1.msra.mxu0 0.0
          %3666 = vmatprep.subr.mxu0 0.0
          %3667 = vmatpush1.msra.mxu0 0.0
          %3668 = vmatprep.subr.mxu0 0.0
          %3669 = vmatpush1.msra.mxu0 0.0
          %3670 = vmatprep.subr.mxu0 0.0
          %3671 = vmatpush1.msra.mxu0 0.0
          %3672 = vmatprep.subr.mxu0 0.0
          %3673 = vmatpush1.msra.mxu0 0.0
          %3674 = vmatprep.subr.mxu0 0.0
          %3675 = vmatpush1.msra.mxu0 0.0
          %3676 = vmatprep.subr.mxu0 0.0
          %3677 = vmatpush1.msra.mxu0 0.0
          %3678 = vmatprep.subr.mxu0 0.0
          %3679 = vmatpush1.msra.mxu0 0.0
          %3680 = vmatprep.subr.mxu0 0.0
          %3681 = vmatpush1.msra.mxu0 0.0
          %3682 = vmatprep.subr.mxu0 0.0
          %3683 = vmatpush1.msra.mxu0 0.0
          %3684 = vmatprep.mubr.f32.mxu0 0.0
          %3685 = vmatmul.mubr.f32.gmra.mrb[0].mxu0 %v3614
          %v3686 = vpop.f32.mrb[0].mxu0
          %v3687 = vadd.f32 %v3611, %v3686
          %v3688 = vpop.f32.mrb[0].mxu0
          %3689 = vdwg.mxu0
          %v3690 = vxor.u32 %v3687, 2147483648
          %v3691 = vmul.f32 %v3690, 1.442695
          %v3692 = vpow.pop %v3691
          %v3693 = vadd.f32 %v3692, 1.0
          %v3694 = vrcp.pop %v3693
          %v3695 = vmul.f32 1.0, %v3694
          %vm3696 = vcmask 0
          %3697 = vst.msk [vmem:[#allocation12] sm:$0x1] %vm3696, %v3695
        $region72: #{tpu_custom_call.1} parent=47 // pred_fallthru
          _
        // Predicated region
        $region73: #{tpu_custom_call.1} parent=47 // pred_check
          %p3698 = pneg %p198
        $region74: #{tpu_custom_call.1} parent=47 // pred_check_branch
          %3700 = sbr.rel (%p3698) target = $region76
        $region75: #{tpu_custom_call.1} parent=47 // pred_region
          %s3702 = ssub.s32 16, 16
          %3703 = vsyncadd [#allocation6], %s3702
          %s3705 = sshll.u32 [#allocation12], 4
          %s3706 = int_to_ptr.vmem [resolvable:$true] %s3705
          %3708 = dma.vmem_to_hbm [thread:$0]  %s3706, 16, %s7, [#allocation6]
        $region76: #{tpu_custom_call.1} parent=47 // pred_fallthru
          _
        // Predicated region
        $region77: #{tpu_custom_call.1} parent=47 // pred_check
          %p3709 = pneg %p198
        $region78: #{tpu_custom_call.1} parent=47 // pred_check_branch
          %3711 = sbr.rel (%p3709) target = $region80
        $region79: #{tpu_custom_call.1} parent=47 // pred_region
          %3712 = dma.done [#allocation6], 16
        $region80: #{tpu_custom_call.1} parent=47 // pred_fallthru
          _
      $region48: #{tpu_custom_call.1} parent=5 // pred_fallthru
        _
      %p3713 = scmp.le.s32.totalorder 2, %s23
      // Predicated region
      $region81: #{tpu_custom_call.1} parent=5 // pred_check
        %p3714 = pneg %p3713
      $region82: #{tpu_custom_call.1} parent=5 // pred_check_branch
        %3716 = sbr.rel (%p3714) target = $region84
      $region83: #{tpu_custom_call.1} parent=5 // pred_region
        %s3717 = ssub.s32 %s23, 2
      $region84: #{tpu_custom_call.1} parent=5 // pred_fallthru
        _
    $region6: #{tpu_custom_call.1} parent=1 // loop_footer
      %s27 = sadd.s32 1, %s23
    $region7: #{tpu_custom_call.1} parent=1 // loop_footer_branch
      %22 = sbr.rel target = $region3
    $region8: #{tpu_custom_call.1} parent=1 // loop_exit
      _
    %3718 = vsyncpa [#allocation5], 1
    %s3719 = scalar_lea.sflag [#allocation5], 1
    %3720 = vsyncpa %s3719, 1
    %3721 = vsyncpa [#allocation8], 1
    %s3722 = scalar_lea.sflag [#allocation8], 1
    %3723 = vsyncpa %s3722, 1
    %3724 = vsyncpa [#allocation11], 1
    %3725 = vsyncpa [#allocation6], 1
    %s3726 = scalar_lea.sflag [#allocation6], 1
    %3727 = vsyncpa %s3726, 1

</llo_original>
